<compile_context>
chip_gen: v7x
topology: tpu7x:2x2x1
jax: 0.10.0
libtpu: 0.0.40
codegen_flags: <defaults>
</compile_context>

<pallas_src>
import functools

import jax
import jax.numpy as jnp
from jax.experimental import pallas as pl
from jax.experimental.pallas import tpu as pltpu


def _resblock_kernel(stride, has_downsample, eps, *refs):
    s = stride
    if has_downsample:
        (x_ref, w1_ref, w2_ref, g1_ref, b1_ref, g2_ref, b2_ref,
         wd_ref, gd_ref, bd_ref, o_ref, h1p_ref) = refs
    else:
        (x_ref, w1_ref, w2_ref, g1_ref, b1_ref, g2_ref, b2_ref,
         o_ref, h1p_ref) = refs
        wd_ref = gd_ref = bd_ref = None

    B, Ho, Wo, Cout = o_ref.shape
    SCin = x_ref.shape[-1]          # == s * Cin (phase-folded channel axis)
    Cin = SCin // s
    R = B * Ho * Wo
    f32 = jnp.float32

    def bn(h, g_ref, b_ref):
        # BatchNorm2d (training mode): per-channel batch stats, biased variance, f32.
        mean = jnp.mean(h, axis=0, keepdims=True)
        c = h - mean
        var = jnp.mean(c * c, axis=0, keepdims=True)
        return c * jax.lax.rsqrt(var + eps) * g_ref[...] + b_ref[...]

    # ---- conv1: 3x3, stride s, pad 1 — single im2col MXU matmul -------------------
    # x_ref[b, hq, ph, wq, pw*Cin + c] == x_pad[b, s*hq + ph, s*wq + pw, c], so each
    # tap of the strided conv is a static slice of the ref (no strided loads).
    taps = []
    center = None
    for kh in range(3):
        for kw in range(3):
            win = x_ref[:, kh // s:kh // s + Ho, kh % s, kw // s:kw // s + Wo, :]
            tap = win[..., (kw % s) * Cin:(kw % s + 1) * Cin]   # (B,Ho,Wo,Cin) bf16
            if kh == 1 and kw == 1:
                center = tap                                    # shortcut input x[s*i, s*j]
            taps.append(tap)
    patch1 = jnp.concatenate(taps, axis=-1).reshape(R, 9 * Cin)  # (R, 9*Cin) bf16
    h1 = jnp.dot(patch1, w1_ref[...], preferred_element_type=f32)
    h1 = jnp.maximum(bn(h1, g1_ref, b1_ref), 0.0)                # BN1 + ReLU (f32)

    # ---- conv2: 3x3, stride 1, pad 1 — single im2col MXU matmul -------------------
    # h1 lives once in a small VMEM scratch with a 1-wide zero halo: only the halo
    # ring is zero-filled; the interior is stored exactly once.
    zr = jnp.zeros((B, 1, Wo + 2, Cout), f32)
    zc = jnp.zeros((B, Ho, 1, Cout), f32)
    h1p_ref[:, 0:1, :, :] = zr
    h1p_ref[:, Ho + 1:Ho + 2, :, :] = zr
    h1p_ref[:, 1:Ho + 1, 0:1, :] = zc
    h1p_ref[:, 1:Ho + 1, Wo + 1:Wo + 2, :] = zc
    h1p_ref[:, 1:Ho + 1, 1:Wo + 1, :] = h1.reshape(B, Ho, Wo, Cout)

    taps2 = [h1p_ref[:, kh:kh + Ho, kw:kw + Wo, :]
             for kh in range(3) for kw in range(3)]
    patch2 = jnp.concatenate(taps2, axis=-1).reshape(R, 9 * Cout)
    h2 = jnp.dot(patch2.astype(jnp.bfloat16), w2_ref[...],
                 preferred_element_type=f32)
    h2 = bn(h2, g2_ref, b2_ref)                                  # BN2

    # ---- shortcut / downsample branch ---------------------------------------------
    xc = center.reshape(R, Cin)
    if has_downsample:
        d = jnp.dot(xc, wd_ref[...], preferred_element_type=f32)  # 1x1 conv, stride s
        d = bn(d, gd_ref, bd_ref)
    else:
        d = xc.astype(f32)                                        # identity shortcut

    out = jnp.maximum(h2 + d, 0.0)                                # residual add + ReLU
    o_ref[...] = out.reshape(B, Ho, Wo, Cout).astype(o_ref.dtype)


def _full_spec(shape):
    nd = len(shape)
    return pl.BlockSpec(shape, lambda i, _nd=nd: (0,) * _nd)


@functools.partial(jax.jit, static_argnums=(2,))
def resblock_pallas(x_nchw, params, stride):
    w1, w2, wd, g1, b1, g2, b2, gd, bd = params
    B, Cin, H, W = x_nchw.shape
    Cout = w1.shape[-1]
    s = int(stride)
    Ho = (H - 1) // s + 1
    Wo = (W - 1) // s + 1
    has_downsample = (s != 1) or (Cin != Cout)

    # Layout glue (cheap / XLA-fusible): NCHW -> NHWC, bf16 cast (halves HBM bytes
    # into the kernel), ONE zero-pad, then a *free* contiguous reshape into the
    # stride-phase view (B, Hq, s, Wq, s*Cin).  No per-phase stack copy.
    Hq = Ho + 2 // s
    Wq = Wo + 2 // s
    x = jnp.transpose(x_nchw, (0, 2, 3, 1)).astype(jnp.bfloat16)
    xpad = jnp.pad(x, ((0, 0), (1, s * Hq - H - 1), (1, s * Wq - W - 1), (0, 0)))
    xph = xpad.reshape(B, Hq, s, Wq, s * Cin)

    # Conv weights reshaped for the fused im2col matmuls; bf16 for the MXU
    # (accumulation is f32 inside the kernel).  BN affine params stay f32.
    w1r = w1.reshape(9 * Cin, Cout).astype(jnp.bfloat16)
    w2r = w2.reshape(9 * Cout, Cout).astype(jnp.bfloat16)

    args = [xph, w1r, w2r, g1, b1, g2, b2]
    if has_downsample:  # only DMA downsample operands when they are actually used
        args += [wd.astype(jnp.bfloat16), gd, bd]

    kernel = functools.partial(_resblock_kernel, s, has_downsample, 1e-5)
    out_nhwc = pl.pallas_call(
        kernel,
        out_shape=jax.ShapeDtypeStruct((B, Ho, Wo, Cout), jnp.float32),
        grid=(1,),
        in_specs=[_full_spec(a.shape) for a in args],
        out_specs=_full_spec((B, Ho, Wo, Cout)),
        scratch_shapes=[pltpu.VMEM((B, Ho + 2, Wo + 2, Cout), jnp.float32)],
        compiler_params=pltpu.CompilerParams(
            dimension_semantics=("arbitrary",),
            vmem_limit_bytes=64 * 1024 * 1024),
    )(*args)
    return jnp.transpose(out_nhwc, (0, 3, 1, 2))  # back to NCHW


def init_params(key, cin, cout, stride):
    ks = jax.random.split(key, 9)
    w1 = jax.random.normal(ks[0], (3, 3, cin, cout), jnp.float32) / (9 * cin) ** 0.5
    w2 = jax.random.normal(ks[1], (3, 3, cout, cout), jnp.float32) / (9 * cout) ** 0.5
    has_ds = (stride != 1) or (cin != cout)
    if has_ds:
        wd = jax.random.normal(ks[2], (cin, cout), jnp.float32) / cin ** 0.5
        gd = 1.0 + 0.1 * jax.random.normal(ks[3], (1, cout), jnp.float32)
        bd = 0.1 * jax.random.normal(ks[4], (1, cout), jnp.float32)
    else:
        wd = jnp.zeros((cin, cout), jnp.float32)
        gd = jnp.ones((1, cout), jnp.float32)
        bd = jnp.zeros((1, cout), jnp.float32)
    g1 = 1.0 + 0.1 * jax.random.normal(ks[5], (1, cout), jnp.float32)
    b1 = 0.1 * jax.random.normal(ks[6], (1, cout), jnp.float32)
    g2 = 1.0 + 0.1 * jax.random.normal(ks[7], (1, cout), jnp.float32)
    b2 = 0.1 * jax.random.normal(ks[8], (1, cout), jnp.float32)
    return (w1, w2, wd, g1, b1, g2, b2, gd, bd)


def resblock_ref(x_nchw, params, stride):
    # Pure-JAX f32 reference (module semantics) used only for the correctness check.
    w1, w2, wd, g1, b1, g2, b2, gd, bd = params
    cin, cout = x_nchw.shape[1], w1.shape[-1]
    has_ds = (stride != 1) or (cin != cout)
    eps = 1e-5
    hi = jax.lax.Precision.HIGHEST

    def conv(x, w, s, pad):
        return jax.lax.conv_general_dilated(
            x, w, (s, s), pad, dimension_numbers=('NHWC', 'HWIO', 'NHWC'), precision=hi)

    def bn(h, g, b):
        mean = h.mean(axis=(0, 1, 2), keepdims=True)
        var = ((h - mean) ** 2).mean(axis=(0, 1, 2), keepdims=True)
        return (h - mean) * jax.lax.rsqrt(var + eps) * g.reshape(1, 1, 1, -1) \
            + b.reshape(1, 1, 1, -1)

    x = jnp.transpose(x_nchw, (0, 2, 3, 1)).astype(jnp.float32)
    h = jnp.maximum(bn(conv(x, w1, stride, ((1, 1), (1, 1))), g1, b1), 0.0)
    h = bn(conv(h, w2, 1, ((1, 1), (1, 1))), g2, b2)
    if has_ds:
        d = bn(conv(x, wd[None, None], stride, 'VALID'), gd, bd)
    else:
        d = x
    return jnp.transpose(jnp.maximum(h + d, 0.0), (0, 3, 1, 2))


if __name__ == "__main__":
    key = jax.random.PRNGKey(0)
    kx, kp, kx2, kp2 = jax.random.split(key, 4)

    # The kernel runs the MXU in bf16 (f32 accumulation); tolerances vs the f32
    # reference are relaxed accordingly.
    TOL = dict(atol=5e-2, rtol=5e-2)

    # Config A: stride-2 block with 1x1-conv + BN downsample (4 -> 8 channels).
    x = jax.random.normal(kx, (2, 4, 16, 16), jnp.float32)
    params = init_params(kp, 4, 8, 2)
    out = resblock_pallas(x, params, 2)
    jax.block_until_ready(out)
    ref = resblock_ref(x, params, 2)
    assert out.shape == (2, 8, 8, 8), out.shape
    assert bool(jnp.all(jnp.isfinite(out)))
    assert bool(jnp.allclose(out, ref, **TOL)), float(jnp.max(jnp.abs(out - ref)))

    # Config B: stride-1 block with identity shortcut (8 -> 8 channels).
    x2 = jax.random.normal(kx2, (2, 8, 16, 16), jnp.float32)
    params2 = init_params(kp2, 8, 8, 1)
    out2 = resblock_pallas(x2, params2, 1)
    jax.block_until_ready(out2)
    ref2 = resblock_ref(x2, params2, 1)
    assert out2.shape == (2, 8, 16, 16), out2.shape
    assert bool(jnp.all(jnp.isfinite(out2)))
    assert bool(jnp.allclose(out2, ref2, **TOL)), float(jnp.max(jnp.abs(out2 - ref2)))

    print("KERNEL_OK")
</pallas_src>

<mosaic_0001>
module attributes {stable_mosaic.version = 11 : i64} {
  func.func @_resblock_kernel(%arg0: i32, %arg1: memref<2x9x2x9x8xbf16, #tpu.memory_space<vmem>>, %arg2: memref<36x8xbf16, #tpu.memory_space<vmem>>, %arg3: memref<72x8xbf16, #tpu.memory_space<vmem>>, %arg4: memref<1x8xf32, #tpu.memory_space<vmem>>, %arg5: memref<1x8xf32, #tpu.memory_space<vmem>>, %arg6: memref<1x8xf32, #tpu.memory_space<vmem>>, %arg7: memref<1x8xf32, #tpu.memory_space<vmem>>, %arg8: memref<4x8xbf16, #tpu.memory_space<vmem>>, %arg9: memref<1x8xf32, #tpu.memory_space<vmem>>, %arg10: memref<1x8xf32, #tpu.memory_space<vmem>>, %arg11: memref<2x8x8x8xf32, #tpu.memory_space<vmem>>, %arg12: memref<2x10x10x8xf32, #tpu.memory_space<vmem>>) attributes {dimension_semantics = [#tpu.dimension_semantics<arbitrary>], iteration_bounds = array<i64: 1>, scalar_prefetch = 0 : i64, scratch_operands = 1 : i64, tpu.core_type = #tpu.core_type<tc>, window_params = [{pipeline_mode = #tpu.pipeline_mode<synchronous>, transform_indices = @transform_0, window_bounds = array<i64: 2, 9, 2, 9, 8>}, {pipeline_mode = #tpu.pipeline_mode<synchronous>, transform_indices = @transform_1, window_bounds = array<i64: 36, 8>}, {pipeline_mode = #tpu.pipeline_mode<synchronous>, transform_indices = @transform_2, window_bounds = array<i64: 72, 8>}, {pipeline_mode = #tpu.pipeline_mode<synchronous>, transform_indices = @transform_3, window_bounds = array<i64: 1, 8>}, {pipeline_mode = #tpu.pipeline_mode<synchronous>, transform_indices = @transform_4, window_bounds = array<i64: 1, 8>}, {pipeline_mode = #tpu.pipeline_mode<synchronous>, transform_indices = @transform_5, window_bounds = array<i64: 1, 8>}, {pipeline_mode = #tpu.pipeline_mode<synchronous>, transform_indices = @transform_6, window_bounds = array<i64: 1, 8>}, {pipeline_mode = #tpu.pipeline_mode<synchronous>, transform_indices = @transform_7, window_bounds = array<i64: 4, 8>}, {pipeline_mode = #tpu.pipeline_mode<synchronous>, transform_indices = @transform_8, window_bounds = array<i64: 1, 8>}, {pipeline_mode = #tpu.pipeline_mode<synchronous>, transform_indices = @transform_9, window_bounds = array<i64: 1, 8>}, {pipeline_mode = #tpu.pipeline_mode<synchronous>, transform_indices = @transform_10, window_bounds = array<i64: 2, 8, 8, 8>}]} {
    %c0 = arith.constant 0 : index
    %c0_0 = arith.constant 0 : index
    %c0_1 = arith.constant 0 : index
    %c0_2 = arith.constant 0 : index
    %c0_3 = arith.constant 0 : index
    %0 = vector.load %arg1[%c0, %c0_0, %c0_1, %c0_2, %c0_3] : memref<2x9x2x9x8xbf16, #tpu.memory_space<vmem>>, vector<2x8x1x8x8xbf16>
    %1 = vector.shape_cast %0 : vector<2x8x1x8x8xbf16> to vector<2x8x8x8xbf16>
    %2 = vector.extract_strided_slice %1 {offsets = [0, 0, 0, 0], sizes = [2, 8, 8, 4], strides = [1, 1, 1, 1]} : vector<2x8x8x8xbf16> to vector<2x8x8x4xbf16>
    %c0_4 = arith.constant 0 : index
    %c0_5 = arith.constant 0 : index
    %c0_6 = arith.constant 0 : index
    %c0_7 = arith.constant 0 : index
    %c0_8 = arith.constant 0 : index
    %3 = vector.load %arg1[%c0_4, %c0_5, %c0_6, %c0_7, %c0_8] : memref<2x9x2x9x8xbf16, #tpu.memory_space<vmem>>, vector<2x8x1x8x8xbf16>
    %4 = vector.shape_cast %3 : vector<2x8x1x8x8xbf16> to vector<2x8x8x8xbf16>
    %5 = vector.extract_strided_slice %4 {offsets = [0, 0, 0, 4], sizes = [2, 8, 8, 4], strides = [1, 1, 1, 1]} : vector<2x8x8x8xbf16> to vector<2x8x8x4xbf16>
    %c0_9 = arith.constant 0 : index
    %c0_10 = arith.constant 0 : index
    %c0_11 = arith.constant 0 : index
    %c1 = arith.constant 1 : index
    %c0_12 = arith.constant 0 : index
    %6 = vector.load %arg1[%c0_9, %c0_10, %c0_11, %c1, %c0_12] : memref<2x9x2x9x8xbf16, #tpu.memory_space<vmem>>, vector<2x8x1x8x8xbf16>
    %7 = vector.shape_cast %6 : vector<2x8x1x8x8xbf16> to vector<2x8x8x8xbf16>
    %8 = vector.extract_strided_slice %7 {offsets = [0, 0, 0, 0], sizes = [2, 8, 8, 4], strides = [1, 1, 1, 1]} : vector<2x8x8x8xbf16> to vector<2x8x8x4xbf16>
    %c0_13 = arith.constant 0 : index
    %c0_14 = arith.constant 0 : index
    %c1_15 = arith.constant 1 : index
    %c0_16 = arith.constant 0 : index
    %c0_17 = arith.constant 0 : index
    %9 = vector.load %arg1[%c0_13, %c0_14, %c1_15, %c0_16, %c0_17] : memref<2x9x2x9x8xbf16, #tpu.memory_space<vmem>>, vector<2x8x1x8x8xbf16>
    %10 = vector.shape_cast %9 : vector<2x8x1x8x8xbf16> to vector<2x8x8x8xbf16>
    %11 = vector.extract_strided_slice %10 {offsets = [0, 0, 0, 0], sizes = [2, 8, 8, 4], strides = [1, 1, 1, 1]} : vector<2x8x8x8xbf16> to vector<2x8x8x4xbf16>
    %c0_18 = arith.constant 0 : index
    %c0_19 = arith.constant 0 : index
    %c1_20 = arith.constant 1 : index
    %c0_21 = arith.constant 0 : index
    %c0_22 = arith.constant 0 : index
    %12 = vector.load %arg1[%c0_18, %c0_19, %c1_20, %c0_21, %c0_22] : memref<2x9x2x9x8xbf16, #tpu.memory_space<vmem>>, vector<2x8x1x8x8xbf16>
    %13 = vector.shape_cast %12 : vector<2x8x1x8x8xbf16> to vector<2x8x8x8xbf16>
    %14 = vector.extract_strided_slice %13 {offsets = [0, 0, 0, 4], sizes = [2, 8, 8, 4], strides = [1, 1, 1, 1]} : vector<2x8x8x8xbf16> to vector<2x8x8x4xbf16>
    %c0_23 = arith.constant 0 : index
    %c0_24 = arith.constant 0 : index
    %c1_25 = arith.constant 1 : index
    %c1_26 = arith.constant 1 : index
    %c0_27 = arith.constant 0 : index
    %15 = vector.load %arg1[%c0_23, %c0_24, %c1_25, %c1_26, %c0_27] : memref<2x9x2x9x8xbf16, #tpu.memory_space<vmem>>, vector<2x8x1x8x8xbf16>
    %16 = vector.shape_cast %15 : vector<2x8x1x8x8xbf16> to vector<2x8x8x8xbf16>
    %17 = vector.extract_strided_slice %16 {offsets = [0, 0, 0, 0], sizes = [2, 8, 8, 4], strides = [1, 1, 1, 1]} : vector<2x8x8x8xbf16> to vector<2x8x8x4xbf16>
    %c0_28 = arith.constant 0 : index
    %c1_29 = arith.constant 1 : index
    %c0_30 = arith.constant 0 : index
    %c0_31 = arith.constant 0 : index
    %c0_32 = arith.constant 0 : index
    %18 = vector.load %arg1[%c0_28, %c1_29, %c0_30, %c0_31, %c0_32] : memref<2x9x2x9x8xbf16, #tpu.memory_space<vmem>>, vector<2x8x1x8x8xbf16>
    %19 = vector.shape_cast %18 : vector<2x8x1x8x8xbf16> to vector<2x8x8x8xbf16>
    %20 = vector.extract_strided_slice %19 {offsets = [0, 0, 0, 0], sizes = [2, 8, 8, 4], strides = [1, 1, 1, 1]} : vector<2x8x8x8xbf16> to vector<2x8x8x4xbf16>
    %c0_33 = arith.constant 0 : index
    %c1_34 = arith.constant 1 : index
    %c0_35 = arith.constant 0 : index
    %c0_36 = arith.constant 0 : index
    %c0_37 = arith.constant 0 : index
    %21 = vector.load %arg1[%c0_33, %c1_34, %c0_35, %c0_36, %c0_37] : memref<2x9x2x9x8xbf16, #tpu.memory_space<vmem>>, vector<2x8x1x8x8xbf16>
    %22 = vector.shape_cast %21 : vector<2x8x1x8x8xbf16> to vector<2x8x8x8xbf16>
    %23 = vector.extract_strided_slice %22 {offsets = [0, 0, 0, 4], sizes = [2, 8, 8, 4], strides = [1, 1, 1, 1]} : vector<2x8x8x8xbf16> to vector<2x8x8x4xbf16>
    %c0_38 = arith.constant 0 : index
    %c1_39 = arith.constant 1 : index
    %c0_40 = arith.constant 0 : index
    %c1_41 = arith.constant 1 : index
    %c0_42 = arith.constant 0 : index
    %24 = vector.load %arg1[%c0_38, %c1_39, %c0_40, %c1_41, %c0_42] : memref<2x9x2x9x8xbf16, #tpu.memory_space<vmem>>, vector<2x8x1x8x8xbf16>
    %25 = vector.shape_cast %24 : vector<2x8x1x8x8xbf16> to vector<2x8x8x8xbf16>
    %26 = vector.extract_strided_slice %25 {offsets = [0, 0, 0, 0], sizes = [2, 8, 8, 4], strides = [1, 1, 1, 1]} : vector<2x8x8x8xbf16> to vector<2x8x8x4xbf16>
    %27 = tpu.concatenate %2, %5, %8, %11, %14, %17, %20, %23, %26 in 3 : vector<2x8x8x4xbf16>, vector<2x8x8x4xbf16>, vector<2x8x8x4xbf16>, vector<2x8x8x4xbf16>, vector<2x8x8x4xbf16>, vector<2x8x8x4xbf16>, vector<2x8x8x4xbf16>, vector<2x8x8x4xbf16>, vector<2x8x8x4xbf16> -> vector<2x8x8x36xbf16>
    %28 = vector.shape_cast %27 : vector<2x8x8x36xbf16> to vector<128x36xbf16>
    %c0_43 = arith.constant 0 : index
    %c0_44 = arith.constant 0 : index
    %29 = vector.load %arg2[%c0_43, %c0_44] : memref<36x8xbf16, #tpu.memory_space<vmem>>, vector<36x8xbf16>
    %cst = arith.constant dense<0.000000e+00> : vector<128x8xf32>
    %30 = tpu.matmul %28, %29, %cst {dimension_numbers = #tpu.dot_dimension_numbers<[1], [0], [0], [1], [0, 0, 1, 1], [], []>} : vector<128x36xbf16>, vector<36x8xbf16>, vector<128x8xf32> -> vector<128x8xf32>
    %cst_45 = arith.constant dense<0.000000e+00> : vector<8xf32>
    %31 = vector.multi_reduction <add>, %30, %cst_45 [0] : vector<128x8xf32> to vector<8xf32>
    %32 = vector.shape_cast %31 : vector<8xf32> to vector<1x8xf32>
    %cst_46 = arith.constant 1.280000e+02 : f32
    %33 = vector.broadcast %cst_46 : f32 to vector<1x8xf32>
    %34 = arith.divf %32, %33 : vector<1x8xf32>
    %35 = vector.broadcast %34 : vector<1x8xf32> to vector<128x8xf32>
    %36 = arith.subf %30, %35 : vector<128x8xf32>
    %37 = arith.mulf %36, %36 : vector<128x8xf32>
    %cst_47 = arith.constant dense<0.000000e+00> : vector<8xf32>
    %38 = vector.multi_reduction <add>, %37, %cst_47 [0] : vector<128x8xf32> to vector<8xf32>
    %39 = vector.shape_cast %38 : vector<8xf32> to vector<1x8xf32>
    %cst_48 = arith.constant 1.280000e+02 : f32
    %40 = vector.broadcast %cst_48 : f32 to vector<1x8xf32>
    %41 = arith.divf %39, %40 : vector<1x8xf32>
    %cst_49 = arith.constant 9.99999974E-6 : f32
    %42 = vector.broadcast %cst_49 : f32 to vector<1x8xf32>
    %43 = arith.addf %41, %42 : vector<1x8xf32>
    %44 = math.rsqrt %43 : vector<1x8xf32>
    %45 = vector.broadcast %44 : vector<1x8xf32> to vector<128x8xf32>
    %46 = arith.mulf %36, %45 : vector<128x8xf32>
    %c0_50 = arith.constant 0 : index
    %c0_51 = arith.constant 0 : index
    %47 = vector.load %arg4[%c0_50, %c0_51] : memref<1x8xf32, #tpu.memory_space<vmem>>, vector<1x8xf32>
    %48 = vector.broadcast %47 : vector<1x8xf32> to vector<128x8xf32>
    %49 = arith.mulf %46, %48 : vector<128x8xf32>
    %c0_52 = arith.constant 0 : index
    %c0_53 = arith.constant 0 : index
    %50 = vector.load %arg5[%c0_52, %c0_53] : memref<1x8xf32, #tpu.memory_space<vmem>>, vector<1x8xf32>
    %51 = vector.broadcast %50 : vector<1x8xf32> to vector<128x8xf32>
    %52 = arith.addf %49, %51 : vector<128x8xf32>
    %cst_54 = arith.constant 0.000000e+00 : f32
    %53 = vector.broadcast %cst_54 : f32 to vector<128x8xf32>
    %54 = arith.maximumf %52, %53 : vector<128x8xf32>
    %cst_55 = arith.constant 0.000000e+00 : f32
    %55 = vector.broadcast %cst_55 : f32 to vector<2x1x10x8xf32>
    %cst_56 = arith.constant 0.000000e+00 : f32
    %56 = vector.broadcast %cst_56 : f32 to vector<2x8x1x8xf32>
    %c0_57 = arith.constant 0 : index
    %c0_58 = arith.constant 0 : index
    %c0_59 = arith.constant 0 : index
    %c0_60 = arith.constant 0 : index
    %57 = vector.load %arg12[%c0_57, %c0_58, %c0_59, %c0_60] : memref<2x10x10x8xf32, #tpu.memory_space<vmem>>, vector<2x1x10x8xf32>
    tpu.vector_store %arg12[%c0_57, %c0_58, %c0_59, %c0_60], %55 {strides = array<i32>} : memref<2x10x10x8xf32, #tpu.memory_space<vmem>>, vector<2x1x10x8xf32>,
    %c0_61 = arith.constant 0 : index
    %c9 = arith.constant 9 : index
    %c0_62 = arith.constant 0 : index
    %c0_63 = arith.constant 0 : index
    %58 = vector.load %arg12[%c0_61, %c9, %c0_62, %c0_63] : memref<2x10x10x8xf32, #tpu.memory_space<vmem>>, vector<2x1x10x8xf32>
    tpu.vector_store %arg12[%c0_61, %c9, %c0_62, %c0_63], %55 {strides = array<i32>} : memref<2x10x10x8xf32, #tpu.memory_space<vmem>>, vector<2x1x10x8xf32>,
    %c0_64 = arith.constant 0 : index
    %c1_65 = arith.constant 1 : index
    %c0_66 = arith.constant 0 : index
    %c0_67 = arith.constant 0 : index
    %59 = vector.load %arg12[%c0_64, %c1_65, %c0_66, %c0_67] : memref<2x10x10x8xf32, #tpu.memory_space<vmem>>, vector<2x8x1x8xf32>
    tpu.vector_store %arg12[%c0_64, %c1_65, %c0_66, %c0_67], %56 {strides = array<i32>} : memref<2x10x10x8xf32, #tpu.memory_space<vmem>>, vector<2x8x1x8xf32>,
    %c0_68 = arith.constant 0 : index
    %c1_69 = arith.constant 1 : index
    %c9_70 = arith.constant 9 : index
    %c0_71 = arith.constant 0 : index
    %60 = vector.load %arg12[%c0_68, %c1_69, %c9_70, %c0_71] : memref<2x10x10x8xf32, #tpu.memory_space<vmem>>, vector<2x8x1x8xf32>
    tpu.vector_store %arg12[%c0_68, %c1_69, %c9_70, %c0_71], %56 {strides = array<i32>} : memref<2x10x10x8xf32, #tpu.memory_space<vmem>>, vector<2x8x1x8xf32>,
    %61 = vector.shape_cast %54 : vector<128x8xf32> to vector<2x8x8x8xf32>
    %c0_72 = arith.constant 0 : index
    %c1_73 = arith.constant 1 : index
    %c1_74 = arith.constant 1 : index
    %c0_75 = arith.constant 0 : index
    %62 = vector.load %arg12[%c0_72, %c1_73, %c1_74, %c0_75] : memref<2x10x10x8xf32, #tpu.memory_space<vmem>>, vector<2x8x8x8xf32>
    tpu.vector_store %arg12[%c0_72, %c1_73, %c1_74, %c0_75], %61 {strides = array<i32>} : memref<2x10x10x8xf32, #tpu.memory_space<vmem>>, vector<2x8x8x8xf32>,
    %c0_76 = arith.constant 0 : index
    %c0_77 = arith.constant 0 : index
    %c0_78 = arith.constant 0 : index
    %c0_79 = arith.constant 0 : index
    %63 = vector.load %arg12[%c0_76, %c0_77, %c0_78, %c0_79] : memref<2x10x10x8xf32, #tpu.memory_space<vmem>>, vector<2x8x8x8xf32>
    %c0_80 = arith.constant 0 : index
    %c0_81 = arith.constant 0 : index
    %c1_82 = arith.constant 1 : index
    %c0_83 = arith.constant 0 : index
    %64 = vector.load %arg12[%c0_80, %c0_81, %c1_82, %c0_83] : memref<2x10x10x8xf32, #tpu.memory_space<vmem>>, vector<2x8x8x8xf32>
    %c0_84 = arith.constant 0 : index
    %c0_85 = arith.constant 0 : index
    %c2 = arith.constant 2 : index
    %c0_86 = arith.constant 0 : index
    %65 = vector.load %arg12[%c0_84, %c0_85, %c2, %c0_86] : memref<2x10x10x8xf32, #tpu.memory_space<vmem>>, vector<2x8x8x8xf32>
    %c0_87 = arith.constant 0 : index
    %c1_88 = arith.constant 1 : index
    %c0_89 = arith.constant 0 : index
    %c0_90 = arith.constant 0 : index
    %66 = vector.load %arg12[%c0_87, %c1_88, %c0_89, %c0_90] : memref<2x10x10x8xf32, #tpu.memory_space<vmem>>, vector<2x8x8x8xf32>
    %c0_91 = arith.constant 0 : index
    %c1_92 = arith.constant 1 : index
    %c1_93 = arith.constant 1 : index
    %c0_94 = arith.constant 0 : index
    %67 = vector.load %arg12[%c0_91, %c1_92, %c1_93, %c0_94] : memref<2x10x10x8xf32, #tpu.memory_space<vmem>>, vector<2x8x8x8xf32>
    %c0_95 = arith.constant 0 : index
    %c1_96 = arith.constant 1 : index
    %c2_97 = arith.constant 2 : index
    %c0_98 = arith.constant 0 : index
    %68 = vector.load %arg12[%c0_95, %c1_96, %c2_97, %c0_98] : memref<2x10x10x8xf32, #tpu.memory_space<vmem>>, vector<2x8x8x8xf32>
    %c0_99 = arith.constant 0 : index
    %c2_100 = arith.constant 2 : index
    %c0_101 = arith.constant 0 : index
    %c0_102 = arith.constant 0 : index
    %69 = vector.load %arg12[%c0_99, %c2_100, %c0_101, %c0_102] : memref<2x10x10x8xf32, #tpu.memory_space<vmem>>, vector<2x8x8x8xf32>
    %c0_103 = arith.constant 0 : index
    %c2_104 = arith.constant 2 : index
    %c1_105 = arith.constant 1 : index
    %c0_106 = arith.constant 0 : index
    %70 = vector.load %arg12[%c0_103, %c2_104, %c1_105, %c0_106] : memref<2x10x10x8xf32, #tpu.memory_space<vmem>>, vector<2x8x8x8xf32>
    %c0_107 = arith.constant 0 : index
    %c2_108 = arith.constant 2 : index
    %c2_109 = arith.constant 2 : index
    %c0_110 = arith.constant 0 : index
    %71 = vector.load %arg12[%c0_107, %c2_108, %c2_109, %c0_110] : memref<2x10x10x8xf32, #tpu.memory_space<vmem>>, vector<2x8x8x8xf32>
    %72 = tpu.concatenate %63, %64, %65, %66, %67, %68, %69, %70, %71 in 3 : vector<2x8x8x8xf32>, vector<2x8x8x8xf32>, vector<2x8x8x8xf32>, vector<2x8x8x8xf32>, vector<2x8x8x8xf32>, vector<2x8x8x8xf32>, vector<2x8x8x8xf32>, vector<2x8x8x8xf32>, vector<2x8x8x8xf32> -> vector<2x8x8x72xf32>
    %73 = vector.shape_cast %72 : vector<2x8x8x72xf32> to vector<128x72xf32>
    %74 = arith.truncf %73 : vector<128x72xf32> to vector<128x72xbf16>
    %c0_111 = arith.constant 0 : index
    %c0_112 = arith.constant 0 : index
    %75 = vector.load %arg3[%c0_111, %c0_112] : memref<72x8xbf16, #tpu.memory_space<vmem>>, vector<72x8xbf16>
    %cst_113 = arith.constant dense<0.000000e+00> : vector<128x8xf32>
    %76 = tpu.matmul %74, %75, %cst_113 {dimension_numbers = #tpu.dot_dimension_numbers<[1], [0], [0], [1], [0, 0, 1, 1], [], []>} : vector<128x72xbf16>, vector<72x8xbf16>, vector<128x8xf32> -> vector<128x8xf32>
    %cst_114 = arith.constant dense<0.000000e+00> : vector<8xf32>
    %77 = vector.multi_reduction <add>, %76, %cst_114 [0] : vector<128x8xf32> to vector<8xf32>
    %78 = vector.shape_cast %77 : vector<8xf32> to vector<1x8xf32>
    %cst_115 = arith.constant 1.280000e+02 : f32
    %79 = vector.broadcast %cst_115 : f32 to vector<1x8xf32>
    %80 = arith.divf %78, %79 : vector<1x8xf32>
    %81 = vector.broadcast %80 : vector<1x8xf32> to vector<128x8xf32>
    %82 = arith.subf %76, %81 : vector<128x8xf32>
    %83 = arith.mulf %82, %82 : vector<128x8xf32>
    %cst_116 = arith.constant dense<0.000000e+00> : vector<8xf32>
    %84 = vector.multi_reduction <add>, %83, %cst_116 [0] : vector<128x8xf32> to vector<8xf32>
    %85 = vector.shape_cast %84 : vector<8xf32> to vector<1x8xf32>
    %cst_117 = arith.constant 1.280000e+02 : f32
    %86 = vector.broadcast %cst_117 : f32 to vector<1x8xf32>
    %87 = arith.divf %85, %86 : vector<1x8xf32>
    %cst_118 = arith.constant 9.99999974E-6 : f32
    %88 = vector.broadcast %cst_118 : f32 to vector<1x8xf32>
    %89 = arith.addf %87, %88 : vector<1x8xf32>
    %90 = math.rsqrt %89 : vector<1x8xf32>
    %91 = vector.broadcast %90 : vector<1x8xf32> to vector<128x8xf32>
    %92 = arith.mulf %82, %91 : vector<128x8xf32>
    %c0_119 = arith.constant 0 : index
    %c0_120 = arith.constant 0 : index
    %93 = vector.load %arg6[%c0_119, %c0_120] : memref<1x8xf32, #tpu.memory_space<vmem>>, vector<1x8xf32>
    %94 = vector.broadcast %93 : vector<1x8xf32> to vector<128x8xf32>
    %95 = arith.mulf %92, %94 : vector<128x8xf32>
    %c0_121 = arith.constant 0 : index
    %c0_122 = arith.constant 0 : index
    %96 = vector.load %arg7[%c0_121, %c0_122] : memref<1x8xf32, #tpu.memory_space<vmem>>, vector<1x8xf32>
    %97 = vector.broadcast %96 : vector<1x8xf32> to vector<128x8xf32>
    %98 = arith.addf %95, %97 : vector<128x8xf32>
    %99 = vector.shape_cast %14 : vector<2x8x8x4xbf16> to vector<128x4xbf16>
    %c0_123 = arith.constant 0 : index
    %c0_124 = arith.constant 0 : index
    %100 = vector.load %arg8[%c0_123, %c0_124] : memref<4x8xbf16, #tpu.memory_space<vmem>>, vector<4x8xbf16>
    %cst_125 = arith.constant dense<0.000000e+00> : vector<128x8xf32>
    %101 = tpu.matmul %99, %100, %cst_125 {dimension_numbers = #tpu.dot_dimension_numbers<[1], [0], [0], [1], [0, 0, 1, 1], [], []>} : vector<128x4xbf16>, vector<4x8xbf16>, vector<128x8xf32> -> vector<128x8xf32>
    %cst_126 = arith.constant dense<0.000000e+00> : vector<8xf32>
    %102 = vector.multi_reduction <add>, %101, %cst_126 [0] : vector<128x8xf32> to vector<8xf32>
    %103 = vector.shape_cast %102 : vector<8xf32> to vector<1x8xf32>
    %cst_127 = arith.constant 1.280000e+02 : f32
    %104 = vector.broadcast %cst_127 : f32 to vector<1x8xf32>
    %105 = arith.divf %103, %104 : vector<1x8xf32>
    %106 = vector.broadcast %105 : vector<1x8xf32> to vector<128x8xf32>
    %107 = arith.subf %101, %106 : vector<128x8xf32>
    %108 = arith.mulf %107, %107 : vector<128x8xf32>
    %cst_128 = arith.constant dense<0.000000e+00> : vector<8xf32>
    %109 = vector.multi_reduction <add>, %108, %cst_128 [0] : vector<128x8xf32> to vector<8xf32>
    %110 = vector.shape_cast %109 : vector<8xf32> to vector<1x8xf32>
    %cst_129 = arith.constant 1.280000e+02 : f32
    %111 = vector.broadcast %cst_129 : f32 to vector<1x8xf32>
    %112 = arith.divf %110, %111 : vector<1x8xf32>
    %cst_130 = arith.constant 9.99999974E-6 : f32
    %113 = vector.broadcast %cst_130 : f32 to vector<1x8xf32>
    %114 = arith.addf %112, %113 : vector<1x8xf32>
    %115 = math.rsqrt %114 : vector<1x8xf32>
    %116 = vector.broadcast %115 : vector<1x8xf32> to vector<128x8xf32>
    %117 = arith.mulf %107, %116 : vector<128x8xf32>
    %c0_131 = arith.constant 0 : index
    %c0_132 = arith.constant 0 : index
    %118 = vector.load %arg9[%c0_131, %c0_132] : memref<1x8xf32, #tpu.memory_space<vmem>>, vector<1x8xf32>
    %119 = vector.broadcast %118 : vector<1x8xf32> to vector<128x8xf32>
    %120 = arith.mulf %117, %119 : vector<128x8xf32>
    %c0_133 = arith.constant 0 : index
    %c0_134 = arith.constant 0 : index
    %121 = vector.load %arg10[%c0_133, %c0_134] : memref<1x8xf32, #tpu.memory_space<vmem>>, vector<1x8xf32>
    %122 = vector.broadcast %121 : vector<1x8xf32> to vector<128x8xf32>
    %123 = arith.addf %120, %122 : vector<128x8xf32>
    %124 = arith.addf %98, %123 : vector<128x8xf32>
    %cst_135 = arith.constant 0.000000e+00 : f32
    %125 = vector.broadcast %cst_135 : f32 to vector<128x8xf32>
    %126 = arith.maximumf %124, %125 : vector<128x8xf32>
    %127 = vector.shape_cast %126 : vector<128x8xf32> to vector<2x8x8x8xf32>
    %c0_136 = arith.constant 0 : index
    %c0_137 = arith.constant 0 : index
    %c0_138 = arith.constant 0 : index
    %c0_139 = arith.constant 0 : index
    %128 = vector.load %arg11[%c0_136, %c0_137, %c0_138, %c0_139] : memref<2x8x8x8xf32, #tpu.memory_space<vmem>>, vector<2x8x8x8xf32>
    tpu.vector_store %arg11[%c0_136, %c0_137, %c0_138, %c0_139], %127 {strides = array<i32>} : memref<2x8x8x8xf32, #tpu.memory_space<vmem>>, vector<2x8x8x8xf32>,
    return
  }
  func.func @transform_0(%arg0: i32) -> (i32, i32, i32, i32, i32) {
    %c0_i32 = arith.constant 0 : i32
    %c0_i32_0 = arith.constant 0 : i32
    %c0_i32_1 = arith.constant 0 : i32
    %c0_i32_2 = arith.constant 0 : i32
    %c0_i32_3 = arith.constant 0 : i32
    %c0_i32_4 = arith.constant 0 : i32
    return %c0_i32, %c0_i32_0, %c0_i32_1, %c0_i32_2, %c0_i32_3 : i32, i32, i32, i32, i32
  }
  func.func @transform_1(%arg0: i32) -> (i32, i32) {
    %c0_i32 = arith.constant 0 : i32
    %c0_i32_0 = arith.constant 0 : i32
    %c0_i32_1 = arith.constant 0 : i32
    return %c0_i32, %c0_i32_0 : i32, i32
  }
  func.func @transform_2(%arg0: i32) -> (i32, i32) {
    %c0_i32 = arith.constant 0 : i32
    %c0_i32_0 = arith.constant 0 : i32
    %c0_i32_1 = arith.constant 0 : i32
    return %c0_i32, %c0_i32_0 : i32, i32
  }
  func.func @transform_3(%arg0: i32) -> (i32, i32) {
    %c0_i32 = arith.constant 0 : i32
    %c0_i32_0 = arith.constant 0 : i32
    %c0_i32_1 = arith.constant 0 : i32
    return %c0_i32, %c0_i32_0 : i32, i32
  }
  func.func @transform_4(%arg0: i32) -> (i32, i32) {
    %c0_i32 = arith.constant 0 : i32
    %c0_i32_0 = arith.constant 0 : i32
    %c0_i32_1 = arith.constant 0 : i32
    return %c0_i32, %c0_i32_0 : i32, i32
  }
  func.func @transform_5(%arg0: i32) -> (i32, i32) {
    %c0_i32 = arith.constant 0 : i32
    %c0_i32_0 = arith.constant 0 : i32
    %c0_i32_1 = arith.constant 0 : i32
    return %c0_i32, %c0_i32_0 : i32, i32
  }
  func.func @transform_6(%arg0: i32) -> (i32, i32) {
    %c0_i32 = arith.constant 0 : i32
    %c0_i32_0 = arith.constant 0 : i32
    %c0_i32_1 = arith.constant 0 : i32
    return %c0_i32, %c0_i32_0 : i32, i32
  }
  func.func @transform_7(%arg0: i32) -> (i32, i32) {
    %c0_i32 = arith.constant 0 : i32
    %c0_i32_0 = arith.constant 0 : i32
    %c0_i32_1 = arith.constant 0 : i32
    return %c0_i32, %c0_i32_0 : i32, i32
  }
  func.func @transform_8(%arg0: i32) -> (i32, i32) {
    %c0_i32 = arith.constant 0 : i32
    %c0_i32_0 = arith.constant 0 : i32
    %c0_i32_1 = arith.constant 0 : i32
    return %c0_i32, %c0_i32_0 : i32, i32
  }
  func.func @transform_9(%arg0: i32) -> (i32, i32) {
    %c0_i32 = arith.constant 0 : i32
    %c0_i32_0 = arith.constant 0 : i32
    %c0_i32_1 = arith.constant 0 : i32
    return %c0_i32, %c0_i32_0 : i32, i32
  }
  func.func @transform_10(%arg0: i32) -> (i32, i32, i32, i32) {
    %c0_i32 = arith.constant 0 : i32
    %c0_i32_0 = arith.constant 0 : i32
    %c0_i32_1 = arith.constant 0 : i32
    %c0_i32_2 = arith.constant 0 : i32
    %c0_i32_3 = arith.constant 0 : i32
    return %c0_i32, %c0_i32_0, %c0_i32_1, %c0_i32_2 : i32, i32, i32, i32
  }
}

</mosaic_0001>

<llo_original>
// kernel: resblock_pallas.1
$region0: #{resblock_pallas.1}
  #allocation0 [shape = 'u32[]', space=smem, size = 0x4, offset = 0x4, fixed_abs, tag = 'smem constant byte address 0x4 - core index']
  #allocation1 [shape = 'u32[144,128]{1,0:T(1,128)}', space=vmem, size = 0x12000, scoped, tag = 'internal scratch']
  #allocation2 [shape = 'f32[2,10,10,8]{3,2,1,0:T(8,128)}', space=vmem, size = 0x28000, scoped, tag = 'scratch operand']
  %s0 = inlined_call_operand.hbm [shape: bf16[2,9,2,9,8], index: 0, kind: input, shape index: {}]
  %s1 = inlined_call_operand.hbm [shape: bf16[36,8], index: 1, kind: input, shape index: {}]
  %s2 = inlined_call_operand.hbm [shape: bf16[72,8], index: 2, kind: input, shape index: {}]
  %s3 = inlined_call_operand.hbm [shape: f32[1,8], index: 3, kind: input, shape index: {}]
  %s4 = inlined_call_operand.hbm [shape: f32[1,8], index: 4, kind: input, shape index: {}]
  %s5 = inlined_call_operand.hbm [shape: f32[1,8], index: 5, kind: input, shape index: {}]
  %s6 = inlined_call_operand.hbm [shape: f32[1,8], index: 6, kind: input, shape index: {}]
  %s7 = inlined_call_operand.hbm [shape: bf16[4,8], index: 7, kind: input, shape index: {}]
  %s8 = inlined_call_operand.hbm [shape: f32[1,8], index: 8, kind: input, shape index: {}]
  %s9 = inlined_call_operand.hbm [shape: f32[1,8], index: 9, kind: input, shape index: {}]
  %s10 = inlined_call_operand.hbm [shape: f32[2,8,8,8], index: 10, kind: output, shape index: {}]
  %s11 = sld [smem:[#allocation0]]
  $region90: #{resblock_pallas.1} parent=0
    _
  %s13 = ssub.s32 1, %s11
  %s14 = scalar_select 0, %s13, %s11
  $region1: #{resblock_pallas.1} parent=0
    #allocation3 [shape = 'u8[147456]{0}', space=vmem, size = 0x24000, scoped, tag = 'input window, operand 0, single buffered']
    #allocation4 [shape = 's32[1]{0}', space=sflag, size = 0x4, scoped, tag = 'scoped memory for resblock_pallas.1']
    #allocation5 [shape = 's32[1]{0}', space=sflag, size = 0x4, scoped, tag = 'scoped memory for resblock_pallas.1']
    #allocation6 [shape = 'u8[10240]{0}', space=vmem, size = 0x2800, scoped, tag = 'input window, operand 1, single buffered']
    #allocation7 [shape = 's32[1]{0}', space=sflag, size = 0x4, scoped, tag = 'scoped memory for resblock_pallas.1']
    #allocation8 [shape = 'u8[18432]{0}', space=vmem, size = 0x4800, scoped, tag = 'input window, operand 2, single buffered']
    #allocation9 [shape = 'u8[512]{0}', space=vmem, size = 0x400, scoped, tag = 'input window, operand 3, single buffered']
    #allocation10 [shape = 's32[1]{0}', space=sflag, size = 0x4, scoped, tag = 'scoped memory for resblock_pallas.1']
    #allocation11 [shape = 'u8[512]{0}', space=vmem, size = 0x400, scoped, tag = 'input window, operand 4, single buffered']
    #allocation12 [shape = 'u8[512]{0}', space=vmem, size = 0x400, scoped, tag = 'input window, operand 5, single buffered']
    #allocation13 [shape = 's32[1]{0}', space=sflag, size = 0x4, scoped, tag = 'scoped memory for resblock_pallas.1']
    #allocation14 [shape = 'u8[512]{0}', space=vmem, size = 0x400, scoped, tag = 'input window, operand 6, single buffered']
    #allocation15 [shape = 'u8[1024]{0}', space=vmem, size = 0x400, scoped, tag = 'input window, operand 7, single buffered']
    #allocation16 [shape = 's32[1]{0}', space=sflag, size = 0x4, scoped, tag = 'scoped memory for resblock_pallas.1']
    #allocation17 [shape = 'u8[512]{0}', space=vmem, size = 0x400, scoped, tag = 'input window, operand 8, single buffered']
    #allocation18 [shape = 'u8[512]{0}', space=vmem, size = 0x400, scoped, tag = 'input window, operand 9, single buffered']
    #allocation19 [shape = 's32[1]{0}', space=sflag, size = 0x4, scoped, tag = 'scoped memory for resblock_pallas.1']
    #allocation20 [shape = 'u8[65536]{0}', space=vmem, size = 0x10000, scoped, tag = 'output window, operand 0, single buffered']
    %15 = vsyncpa [#allocation4], 0
    %16 = vsyncpa [#allocation7], 0
    %17 = vsyncpa [#allocation10], 0
    %18 = vsyncpa [#allocation13], 0
    %19 = vsyncpa [#allocation16], 0
    %20 = vsyncpa [#allocation19], 0
    %21 = vsyncpa [#allocation5], 0
    // Predicated region
    $region2: #{resblock_pallas.1} parent=1 // pred_check
      _
    $region3: #{resblock_pallas.1} parent=1 // pred_check_branch
      %23 = sbr.rel (0) target = $region5
    $region4: #{resblock_pallas.1} parent=1 // pred_region
      %s25 = ssub.s32 4608, 4608
      %26 = vsyncadd [#allocation4], %s25
      %s27 = sshll.u32 [#allocation3], 4
      %s28 = int_to_ptr.vmem [resolvable:$true] %s27
      %33 = dma.hbm_to_vmem [thread:$0]  %s0, 4608, %s28, [#allocation4], 64, 64, 4
    $region5: #{resblock_pallas.1} parent=1 // pred_fallthru
      _
    // Predicated region
    $region6: #{resblock_pallas.1} parent=1 // pred_check
      _
    $region7: #{resblock_pallas.1} parent=1 // pred_check_branch
      %35 = sbr.rel (0) target = $region9
    $region8: #{resblock_pallas.1} parent=1 // pred_region
      %s37 = ssub.s32 320, 320
      %38 = vsyncadd [#allocation7], %s37
      %s39 = sshll.u32 [#allocation6], 4
      %s40 = int_to_ptr.vmem [resolvable:$true] %s39
      %45 = dma.hbm_to_vmem [thread:$0]  %s1, 320, %s40, [#allocation7], 64, 64, 4
    $region9: #{resblock_pallas.1} parent=1 // pred_fallthru
      _
    // Predicated region
    $region10: #{resblock_pallas.1} parent=1 // pred_check
      _
    $region11: #{resblock_pallas.1} parent=1 // pred_check_branch
      %47 = sbr.rel (0) target = $region13
    $region12: #{resblock_pallas.1} parent=1 // pred_region
      %s49 = ssub.s32 576, 576
      %50 = vsyncadd [#allocation7], %s49
      %s51 = sshll.u32 [#allocation8], 4
      %s52 = int_to_ptr.vmem [resolvable:$true] %s51
      %57 = dma.hbm_to_vmem [thread:$0]  %s2, 576, %s52, [#allocation7], 64, 64, 4
    $region13: #{resblock_pallas.1} parent=1 // pred_fallthru
      _
    // Predicated region
    $region14: #{resblock_pallas.1} parent=1 // pred_check
      _
    $region15: #{resblock_pallas.1} parent=1 // pred_check_branch
      %59 = sbr.rel (0) target = $region17
    $region16: #{resblock_pallas.1} parent=1 // pred_region
      %s61 = ssub.s32 16, 16
      %62 = vsyncadd [#allocation10], %s61
      %s64 = sshll.u32 [#allocation9], 4
      %s65 = int_to_ptr.vmem [resolvable:$true] %s64
      %67 = dma.hbm_to_vmem [thread:$0]  %s3, 16, %s65, [#allocation10]
    $region17: #{resblock_pallas.1} parent=1 // pred_fallthru
      _
    // Predicated region
    $region18: #{resblock_pallas.1} parent=1 // pred_check
      _
    $region19: #{resblock_pallas.1} parent=1 // pred_check_branch
      %69 = sbr.rel (0) target = $region21
    $region20: #{resblock_pallas.1} parent=1 // pred_region
      %s71 = ssub.s32 16, 16
      %72 = vsyncadd [#allocation10], %s71
      %s74 = sshll.u32 [#allocation11], 4
      %s75 = int_to_ptr.vmem [resolvable:$true] %s74
      %77 = dma.hbm_to_vmem [thread:$0]  %s4, 16, %s75, [#allocation10]
    $region21: #{resblock_pallas.1} parent=1 // pred_fallthru
      _
    // Predicated region
    $region22: #{resblock_pallas.1} parent=1 // pred_check
      _
    $region23: #{resblock_pallas.1} parent=1 // pred_check_branch
      %79 = sbr.rel (0) target = $region25
    $region24: #{resblock_pallas.1} parent=1 // pred_region
      %s81 = ssub.s32 16, 16
      %82 = vsyncadd [#allocation13], %s81
      %s84 = sshll.u32 [#allocation12], 4
      %s85 = int_to_ptr.vmem [resolvable:$true] %s84
      %87 = dma.hbm_to_vmem [thread:$0]  %s5, 16, %s85, [#allocation13]
    $region25: #{resblock_pallas.1} parent=1 // pred_fallthru
      _
    // Predicated region
    $region26: #{resblock_pallas.1} parent=1 // pred_check
      _
    $region27: #{resblock_pallas.1} parent=1 // pred_check_branch
      %89 = sbr.rel (0) target = $region29
    $region28: #{resblock_pallas.1} parent=1 // pred_region
      %s91 = ssub.s32 16, 16
      %92 = vsyncadd [#allocation13], %s91
      %s94 = sshll.u32 [#allocation14], 4
      %s95 = int_to_ptr.vmem [resolvable:$true] %s94
      %97 = dma.hbm_to_vmem [thread:$0]  %s6, 16, %s95, [#allocation13]
    $region29: #{resblock_pallas.1} parent=1 // pred_fallthru
      _
    // Predicated region
    $region30: #{resblock_pallas.1} parent=1 // pred_check
      _
    $region31: #{resblock_pallas.1} parent=1 // pred_check_branch
      %99 = sbr.rel (0) target = $region33
    $region32: #{resblock_pallas.1} parent=1 // pred_region
      %s101 = ssub.s32 32, 32
      %102 = vsyncadd [#allocation16], %s101
      %s104 = sshll.u32 [#allocation15], 4
      %s105 = int_to_ptr.vmem [resolvable:$true] %s104
      %107 = dma.hbm_to_vmem [thread:$0]  %s7, 32, %s105, [#allocation16]
    $region33: #{resblock_pallas.1} parent=1 // pred_fallthru
      _
    // Predicated region
    $region34: #{resblock_pallas.1} parent=1 // pred_check
      _
    $region35: #{resblock_pallas.1} parent=1 // pred_check_branch
      %109 = sbr.rel (0) target = $region37
    $region36: #{resblock_pallas.1} parent=1 // pred_region
      %s111 = ssub.s32 16, 16
      %112 = vsyncadd [#allocation16], %s111
      %s114 = sshll.u32 [#allocation17], 4
      %s115 = int_to_ptr.vmem [resolvable:$true] %s114
      %117 = dma.hbm_to_vmem [thread:$0]  %s8, 16, %s115, [#allocation16]
    $region37: #{resblock_pallas.1} parent=1 // pred_fallthru
      _
    // Predicated region
    $region38: #{resblock_pallas.1} parent=1 // pred_check
      _
    $region39: #{resblock_pallas.1} parent=1 // pred_check_branch
      %119 = sbr.rel (0) target = $region41
    $region40: #{resblock_pallas.1} parent=1 // pred_region
      %s121 = ssub.s32 16, 16
      %122 = vsyncadd [#allocation19], %s121
      %s124 = sshll.u32 [#allocation18], 4
      %s125 = int_to_ptr.vmem [resolvable:$true] %s124
      %127 = dma.hbm_to_vmem [thread:$0]  %s9, 16, %s125, [#allocation19]
    $region41: #{resblock_pallas.1} parent=1 // pred_fallthru
      _
    // Predicated region
    $region42: #{resblock_pallas.1} parent=1 // pred_check
      _
    $region43: #{resblock_pallas.1} parent=1 // pred_check_branch
      %129 = sbr.rel (0) target = $region45
    $region44: #{resblock_pallas.1} parent=1 // pred_region
      %130 = dma.done [#allocation4], 4608
    $region45: #{resblock_pallas.1} parent=1 // pred_fallthru
      _
    // Predicated region
    $region46: #{resblock_pallas.1} parent=1 // pred_check
      _
    $region47: #{resblock_pallas.1} parent=1 // pred_check_branch
      %132 = sbr.rel (0) target = $region49
    $region48: #{resblock_pallas.1} parent=1 // pred_region
      %133 = dma.done [#allocation7], 320
    $region49: #{resblock_pallas.1} parent=1 // pred_fallthru
      _
    // Predicated region
    $region50: #{resblock_pallas.1} parent=1 // pred_check
      _
    $region51: #{resblock_pallas.1} parent=1 // pred_check_branch
      %135 = sbr.rel (0) target = $region53
    $region52: #{resblock_pallas.1} parent=1 // pred_region
      %136 = dma.done [#allocation7], 576
    $region53: #{resblock_pallas.1} parent=1 // pred_fallthru
      _
    // Predicated region
    $region54: #{resblock_pallas.1} parent=1 // pred_check
      _
    $region55: #{resblock_pallas.1} parent=1 // pred_check_branch
      %138 = sbr.rel (0) target = $region57
    $region56: #{resblock_pallas.1} parent=1 // pred_region
      %139 = dma.done [#allocation10], 16
    $region57: #{resblock_pallas.1} parent=1 // pred_fallthru
      _
    // Predicated region
    $region58: #{resblock_pallas.1} parent=1 // pred_check
      _
    $region59: #{resblock_pallas.1} parent=1 // pred_check_branch
      %141 = sbr.rel (0) target = $region61
    $region60: #{resblock_pallas.1} parent=1 // pred_region
      %142 = dma.done [#allocation10], 16
    $region61: #{resblock_pallas.1} parent=1 // pred_fallthru
      _
    // Predicated region
    $region62: #{resblock_pallas.1} parent=1 // pred_check
      _
    $region63: #{resblock_pallas.1} parent=1 // pred_check_branch
      %144 = sbr.rel (0) target = $region65
    $region64: #{resblock_pallas.1} parent=1 // pred_region
      %145 = dma.done [#allocation13], 16
    $region65: #{resblock_pallas.1} parent=1 // pred_fallthru
      _
    // Predicated region
    $region66: #{resblock_pallas.1} parent=1 // pred_check
      _
    $region67: #{resblock_pallas.1} parent=1 // pred_check_branch
      %147 = sbr.rel (0) target = $region69
    $region68: #{resblock_pallas.1} parent=1 // pred_region
      %148 = dma.done [#allocation13], 16
    $region69: #{resblock_pallas.1} parent=1 // pred_fallthru
      _
    // Predicated region
    $region70: #{resblock_pallas.1} parent=1 // pred_check
      _
    $region71: #{resblock_pallas.1} parent=1 // pred_check_branch
      %150 = sbr.rel (0) target = $region73
    $region72: #{resblock_pallas.1} parent=1 // pred_region
      %151 = dma.done [#allocation16], 32
    $region73: #{resblock_pallas.1} parent=1 // pred_fallthru
      _
    // Predicated region
    $region74: #{resblock_pallas.1} parent=1 // pred_check
      _
    $region75: #{resblock_pallas.1} parent=1 // pred_check_branch
      %153 = sbr.rel (0) target = $region77
    $region76: #{resblock_pallas.1} parent=1 // pred_region
      %154 = dma.done [#allocation16], 16
    $region77: #{resblock_pallas.1} parent=1 // pred_fallthru
      _
    // Predicated region
    $region78: #{resblock_pallas.1} parent=1 // pred_check
      _
    $region79: #{resblock_pallas.1} parent=1 // pred_check_branch
      %156 = sbr.rel (0) target = $region81
    $region80: #{resblock_pallas.1} parent=1 // pred_region
      %157 = dma.done [#allocation19], 16
    $region81: #{resblock_pallas.1} parent=1 // pred_fallthru
      _
    %v159 = vld [vmem:[#allocation3] sm:$0xf]
    %v160 = vld [vmem:[#allocation3 + $0x10] sm:$0xf]
    %v161 = vld [vmem:[#allocation3 + $0x20] sm:$0xf]
    %v162 = vld [vmem:[#allocation3 + $0x30] sm:$0xf]
    %v163 = vld [vmem:[#allocation3 + $0x40] sm:$0xf]
    %v164 = vld [vmem:[#allocation3 + $0x50] sm:$0xf]
    %v165 = vld [vmem:[#allocation3 + $0x60] sm:$0xf]
    %v166 = vld [vmem:[#allocation3 + $0x70] sm:$0xf]
    %v167 = vld [vmem:[#allocation3 + $0x90] sm:$0xf]
    %v168 = vld [vmem:[#allocation3 + $0xa0] sm:$0xf]
    %v169 = vld [vmem:[#allocation3 + $0xb0] sm:$0xf]
    %v170 = vld [vmem:[#allocation3 + $0xc0] sm:$0xf]
    %v171 = vld [vmem:[#allocation3 + $0xd0] sm:$0xf]
    %v172 = vld [vmem:[#allocation3 + $0xe0] sm:$0xf]
    %v173 = vld [vmem:[#allocation3 + $0xf0] sm:$0xf]
    %v174 = vld [vmem:[#allocation3 + $0x100] sm:$0xf]
    %v175 = vld [vmem:[#allocation3 + $0x4] sm:$0x1]
    %v176 = vld [vmem:[#allocation3 + $0x14] sm:$0x1]
    %v177 = vld [vmem:[#allocation3 + $0x24] sm:$0x1]
    %v178 = vld [vmem:[#allocation3 + $0x34] sm:$0x1]
    %v179 = vld [vmem:[#allocation3 + $0x44] sm:$0x1]
    %v180 = vld [vmem:[#allocation3 + $0x54] sm:$0x1]
    %v181 = vld [vmem:[#allocation3 + $0x64] sm:$0x1]
    %v182 = vld [vmem:[#allocation3 + $0x74] sm:$0x1]
    %v183 = vld [vmem:[#allocation3 + $0x94] sm:$0x1]
    %v184 = vld [vmem:[#allocation3 + $0xa4] sm:$0x1]
    %v185 = vld [vmem:[#allocation3 + $0xb4] sm:$0x1]
    %v186 = vld [vmem:[#allocation3 + $0xc4] sm:$0x1]
    %v187 = vld [vmem:[#allocation3 + $0xd4] sm:$0x1]
    %v188 = vld [vmem:[#allocation3 + $0xe4] sm:$0x1]
    %v189 = vld [vmem:[#allocation3 + $0xf4] sm:$0x1]
    %v190 = vld [vmem:[#allocation3 + $0x104] sm:$0x1]
    %s191 = scalar_lea.vmem [#allocation3], 8
    %v192 = vld [vmem:[%s191] sm:$0xf]
    %v193 = vld [vmem:[%s191 + $0x10] sm:$0xf]
    %v194 = vld [vmem:[%s191 + $0x20] sm:$0xf]
    %v195 = vld [vmem:[%s191 + $0x30] sm:$0xf]
    %v196 = vld [vmem:[%s191 + $0x40] sm:$0xf]
    %v197 = vld [vmem:[%s191 + $0x50] sm:$0xf]
    %v198 = vld [vmem:[%s191 + $0x60] sm:$0xf]
    %v199 = vld [vmem:[%s191 + $0x70] sm:$0xf]
    %v200 = vld [vmem:[%s191 + $0x90] sm:$0xf]
    %v201 = vld [vmem:[%s191 + $0xa0] sm:$0xf]
    %v202 = vld [vmem:[%s191 + $0xb0] sm:$0xf]
    %v203 = vld [vmem:[%s191 + $0xc0] sm:$0xf]
    %v204 = vld [vmem:[%s191 + $0xd0] sm:$0xf]
    %v205 = vld [vmem:[%s191 + $0xe0] sm:$0xf]
    %v206 = vld [vmem:[%s191 + $0xf0] sm:$0xf]
    %v207 = vld [vmem:[%s191 + $0x100] sm:$0xf]
    %v208 = vld [vmem:[%s191 + $0x4] sm:$0x1]
    %v209 = vld [vmem:[%s191 + $0x14] sm:$0x1]
    %v210 = vld [vmem:[%s191 + $0x24] sm:$0x1]
    %v211 = vld [vmem:[%s191 + $0x34] sm:$0x1]
    %v212 = vld [vmem:[%s191 + $0x44] sm:$0x1]
    %v213 = vld [vmem:[%s191 + $0x54] sm:$0x1]
    %v214 = vld [vmem:[%s191 + $0x64] sm:$0x1]
    %v215 = vld [vmem:[%s191 + $0x74] sm:$0x1]
    %v216 = vld [vmem:[%s191 + $0x94] sm:$0x1]
    %v217 = vld [vmem:[%s191 + $0xa4] sm:$0x1]
    %v218 = vld [vmem:[%s191 + $0xb4] sm:$0x1]
    %v219 = vld [vmem:[%s191 + $0xc4] sm:$0x1]
    %v220 = vld [vmem:[%s191 + $0xd4] sm:$0x1]
    %v221 = vld [vmem:[%s191 + $0xe4] sm:$0x1]
    %v222 = vld [vmem:[%s191 + $0xf4] sm:$0x1]
    %v223 = vld [vmem:[%s191 + $0x104] sm:$0x1]
    %s224 = scalar_lea.vmem [#allocation3], 16
    %v225 = vld [vmem:[%s224] sm:$0xf]
    %v226 = vld [vmem:[%s224 + $0x10] sm:$0xf]
    %v227 = vld [vmem:[%s224 + $0x20] sm:$0xf]
    %v228 = vld [vmem:[%s224 + $0x30] sm:$0xf]
    %v229 = vld [vmem:[%s224 + $0x40] sm:$0xf]
    %v230 = vld [vmem:[%s224 + $0x50] sm:$0xf]
    %v231 = vld [vmem:[%s224 + $0x60] sm:$0xf]
    %v232 = vld [vmem:[%s224 + $0x70] sm:$0xf]
    %v233 = vld [vmem:[%s224 + $0x90] sm:$0xf]
    %v234 = vld [vmem:[%s224 + $0xa0] sm:$0xf]
    %v235 = vld [vmem:[%s224 + $0xb0] sm:$0xf]
    %v236 = vld [vmem:[%s224 + $0xc0] sm:$0xf]
    %v237 = vld [vmem:[%s224 + $0xd0] sm:$0xf]
    %v238 = vld [vmem:[%s224 + $0xe0] sm:$0xf]
    %v239 = vld [vmem:[%s224 + $0xf0] sm:$0xf]
    %v240 = vld [vmem:[%s224 + $0x100] sm:$0xf]
    %v241 = vld [vmem:[%s224 + $0x4] sm:$0x1]
    %v242 = vld [vmem:[%s224 + $0x14] sm:$0x1]
    %v243 = vld [vmem:[%s224 + $0x24] sm:$0x1]
    %v244 = vld [vmem:[%s224 + $0x34] sm:$0x1]
    %v245 = vld [vmem:[%s224 + $0x44] sm:$0x1]
    %v246 = vld [vmem:[%s224 + $0x54] sm:$0x1]
    %v247 = vld [vmem:[%s224 + $0x64] sm:$0x1]
    %v248 = vld [vmem:[%s224 + $0x74] sm:$0x1]
    %v249 = vld [vmem:[%s224 + $0x94] sm:$0x1]
    %v250 = vld [vmem:[%s224 + $0xa4] sm:$0x1]
    %v251 = vld [vmem:[%s224 + $0xb4] sm:$0x1]
    %v252 = vld [vmem:[%s224 + $0xc4] sm:$0x1]
    %v253 = vld [vmem:[%s224 + $0xd4] sm:$0x1]
    %v254 = vld [vmem:[%s224 + $0xe4] sm:$0x1]
    %v255 = vld [vmem:[%s224 + $0xf4] sm:$0x1]
    %v256 = vld [vmem:[%s224 + $0x104] sm:$0x1]
    %v289 = vunpack.c.l.b16 %v159
    %v290 = vunpack.c.l.b16 %v175
    %v291 = vunpack.c.l.b16 %v160
    %v292 = vunpack.c.l.b16 %v176
    %v293 = vunpack.c.l.b16 %v161
    %v294 = vunpack.c.l.b16 %v177
    %v295 = vunpack.c.l.b16 %v162
    %v296 = vunpack.c.l.b16 %v178
    %v297 = vunpack.c.l.b16 %v163
    %v298 = vunpack.c.l.b16 %v179
    %v299 = vunpack.c.l.b16 %v164
    %v300 = vunpack.c.l.b16 %v180
    %v301 = vunpack.c.l.b16 %v165
    %v302 = vunpack.c.l.b16 %v181
    %v303 = vunpack.c.l.b16 %v166
    %v304 = vunpack.c.l.b16 %v182
    %v305 = vunpack.c.l.b16 %v167
    %v306 = vunpack.c.l.b16 %v183
    %v307 = vunpack.c.l.b16 %v168
    %v308 = vunpack.c.l.b16 %v184
    %v309 = vunpack.c.l.b16 %v169
    %v310 = vunpack.c.l.b16 %v185
    %v311 = vunpack.c.l.b16 %v170
    %v312 = vunpack.c.l.b16 %v186
    %v313 = vunpack.c.l.b16 %v171
    %v314 = vunpack.c.l.b16 %v187
    %v315 = vunpack.c.l.b16 %v172
    %v316 = vunpack.c.l.b16 %v188
    %v317 = vunpack.c.l.b16 %v173
    %v318 = vunpack.c.l.b16 %v189
    %v319 = vunpack.c.l.b16 %v174
    %v320 = vunpack.c.l.b16 %v190
    %v321 = vpack.c.b16 %v290, %v289
    %v322 = vpack.c.b16 %v292, %v291
    %v323 = vpack.c.b16 %v294, %v293
    %v324 = vpack.c.b16 %v296, %v295
    %v325 = vpack.c.b16 %v298, %v297
    %v326 = vpack.c.b16 %v300, %v299
    %v327 = vpack.c.b16 %v302, %v301
    %v328 = vpack.c.b16 %v304, %v303
    %v329 = vpack.c.b16 %v306, %v305
    %v330 = vpack.c.b16 %v308, %v307
    %v331 = vpack.c.b16 %v310, %v309
    %v332 = vpack.c.b16 %v312, %v311
    %v333 = vpack.c.b16 %v314, %v313
    %v334 = vpack.c.b16 %v316, %v315
    %v335 = vpack.c.b16 %v318, %v317
    %v336 = vpack.c.b16 %v320, %v319
    %v338 = vshrl.u32 %v321, 16
    %v340 = vshll.u32 %v321, 16
    %v342 = vrot.slane %v340, 1
    %v343 = vor.u32 %v338, %v342
    %v345 = vshrl.u32 %v322, 16
    %v347 = vshll.u32 %v322, 16
    %v349 = vrot.slane %v347, 1
    %v350 = vor.u32 %v345, %v349
    %v352 = vshrl.u32 %v323, 16
    %v354 = vshll.u32 %v323, 16
    %v356 = vrot.slane %v354, 1
    %v357 = vor.u32 %v352, %v356
    %v359 = vshrl.u32 %v324, 16
    %v361 = vshll.u32 %v324, 16
    %v363 = vrot.slane %v361, 1
    %v364 = vor.u32 %v359, %v363
    %v366 = vshrl.u32 %v325, 16
    %v368 = vshll.u32 %v325, 16
    %v370 = vrot.slane %v368, 1
    %v371 = vor.u32 %v366, %v370
    %v373 = vshrl.u32 %v326, 16
    %v375 = vshll.u32 %v326, 16
    %v377 = vrot.slane %v375, 1
    %v378 = vor.u32 %v373, %v377
    %v380 = vshrl.u32 %v327, 16
    %v382 = vshll.u32 %v327, 16
    %v384 = vrot.slane %v382, 1
    %v385 = vor.u32 %v380, %v384
    %v387 = vshrl.u32 %v328, 16
    %v389 = vshll.u32 %v328, 16
    %v391 = vrot.slane %v389, 1
    %v392 = vor.u32 %v387, %v391
    %v394 = vshrl.u32 %v329, 16
    %v396 = vshll.u32 %v329, 16
    %v398 = vrot.slane %v396, 1
    %v399 = vor.u32 %v394, %v398
    %v401 = vshrl.u32 %v330, 16
    %v403 = vshll.u32 %v330, 16
    %v405 = vrot.slane %v403, 1
    %v406 = vor.u32 %v401, %v405
    %v408 = vshrl.u32 %v331, 16
    %v410 = vshll.u32 %v331, 16
    %v412 = vrot.slane %v410, 1
    %v413 = vor.u32 %v408, %v412
    %v415 = vshrl.u32 %v332, 16
    %v417 = vshll.u32 %v332, 16
    %v419 = vrot.slane %v417, 1
    %v420 = vor.u32 %v415, %v419
    %v422 = vshrl.u32 %v333, 16
    %v424 = vshll.u32 %v333, 16
    %v426 = vrot.slane %v424, 1
    %v427 = vor.u32 %v422, %v426
    %v429 = vshrl.u32 %v334, 16
    %v431 = vshll.u32 %v334, 16
    %v433 = vrot.slane %v431, 1
    %v434 = vor.u32 %v429, %v433
    %v436 = vshrl.u32 %v335, 16
    %v438 = vshll.u32 %v335, 16
    %v440 = vrot.slane %v438, 1
    %v441 = vor.u32 %v436, %v440
    %v443 = vshrl.u32 %v336, 16
    %v445 = vshll.u32 %v336, 16
    %v447 = vrot.slane %v445, 1
    %v448 = vor.u32 %v443, %v447
    %449 = vrot.lane.b32.xlu0 %v343, 8
    %v450 = vpop.permute.xlu0 %449
    %451 = vrot.lane.b32.xlu0 %v350, 8
    %v452 = vpop.permute.xlu0 %451
    %453 = vrot.lane.b32.xlu0 %v357, 8
    %v454 = vpop.permute.xlu0 %453
    %455 = vrot.lane.b32.xlu0 %v364, 8
    %v456 = vpop.permute.xlu0 %455
    %457 = vrot.lane.b32.xlu0 %v371, 8
    %v458 = vpop.permute.xlu0 %457
    %459 = vrot.lane.b32.xlu0 %v378, 8
    %v460 = vpop.permute.xlu0 %459
    %461 = vrot.lane.b32.xlu0 %v385, 8
    %v462 = vpop.permute.xlu0 %461
    %463 = vrot.lane.b32.xlu0 %v392, 8
    %v464 = vpop.permute.xlu0 %463
    %465 = vrot.lane.b32.xlu0 %v399, 8
    %v466 = vpop.permute.xlu0 %465
    %467 = vrot.lane.b32.xlu0 %v406, 8
    %v468 = vpop.permute.xlu0 %467
    %469 = vrot.lane.b32.xlu0 %v413, 8
    %v470 = vpop.permute.xlu0 %469
    %471 = vrot.lane.b32.xlu0 %v420, 8
    %v472 = vpop.permute.xlu0 %471
    %473 = vrot.lane.b32.xlu0 %v427, 8
    %v474 = vpop.permute.xlu0 %473
    %475 = vrot.lane.b32.xlu0 %v434, 8
    %v476 = vpop.permute.xlu0 %475
    %477 = vrot.lane.b32.xlu0 %v441, 8
    %v478 = vpop.permute.xlu0 %477
    %479 = vrot.lane.b32.xlu0 %v448, 8
    %v480 = vpop.permute.xlu0 %479
    %v497 = vunpack.c.l.b16 %v192
    %v498 = vunpack.c.l.b16 %v193
    %v499 = vunpack.c.l.b16 %v194
    %v500 = vunpack.c.l.b16 %v195
    %v501 = vunpack.c.l.b16 %v196
    %v502 = vunpack.c.l.b16 %v197
    %v503 = vunpack.c.l.b16 %v198
    %v504 = vunpack.c.l.b16 %v199
    %v505 = vunpack.c.l.b16 %v200
    %v506 = vunpack.c.l.b16 %v201
    %v507 = vunpack.c.l.b16 %v202
    %v508 = vunpack.c.l.b16 %v203
    %v509 = vunpack.c.l.b16 %v204
    %v510 = vunpack.c.l.b16 %v205
    %v511 = vunpack.c.l.b16 %v206
    %v512 = vunpack.c.l.b16 %v207
    %v513 = vpack.c.b16 %v497, %v497
    %v514 = vpack.c.b16 %v498, %v498
    %v515 = vpack.c.b16 %v499, %v499
    %v516 = vpack.c.b16 %v500, %v500
    %v517 = vpack.c.b16 %v501, %v501
    %v518 = vpack.c.b16 %v502, %v502
    %v519 = vpack.c.b16 %v503, %v503
    %v520 = vpack.c.b16 %v504, %v504
    %v521 = vpack.c.b16 %v505, %v505
    %v522 = vpack.c.b16 %v506, %v506
    %v523 = vpack.c.b16 %v507, %v507
    %v524 = vpack.c.b16 %v508, %v508
    %v525 = vpack.c.b16 %v509, %v509
    %v526 = vpack.c.b16 %v510, %v510
    %v527 = vpack.c.b16 %v511, %v511
    %v528 = vpack.c.b16 %v512, %v512
    %529 = vrot.lane.b32.xlu0 %v513, 12
    %v530 = vpop.permute.xlu0 %529
    %531 = vrot.lane.b32.xlu0 %v514, 12
    %v532 = vpop.permute.xlu0 %531
    %533 = vrot.lane.b32.xlu0 %v515, 12
    %v534 = vpop.permute.xlu0 %533
    %535 = vrot.lane.b32.xlu0 %v516, 12
    %v536 = vpop.permute.xlu0 %535
    %537 = vrot.lane.b32.xlu0 %v517, 12
    %v538 = vpop.permute.xlu0 %537
    %539 = vrot.lane.b32.xlu0 %v518, 12
    %v540 = vpop.permute.xlu0 %539
    %541 = vrot.lane.b32.xlu0 %v519, 12
    %v542 = vpop.permute.xlu0 %541
    %543 = vrot.lane.b32.xlu0 %v520, 12
    %v544 = vpop.permute.xlu0 %543
    %545 = vrot.lane.b32.xlu0 %v521, 12
    %v546 = vpop.permute.xlu0 %545
    %547 = vrot.lane.b32.xlu0 %v522, 12
    %v548 = vpop.permute.xlu0 %547
    %549 = vrot.lane.b32.xlu0 %v523, 12
    %v550 = vpop.permute.xlu0 %549
    %551 = vrot.lane.b32.xlu0 %v524, 12
    %v552 = vpop.permute.xlu0 %551
    %553 = vrot.lane.b32.xlu0 %v525, 12
    %v554 = vpop.permute.xlu0 %553
    %555 = vrot.lane.b32.xlu0 %v526, 12
    %v556 = vpop.permute.xlu0 %555
    %557 = vrot.lane.b32.xlu0 %v527, 12
    %v558 = vpop.permute.xlu0 %557
    %559 = vrot.lane.b32.xlu0 %v528, 12
    %v560 = vpop.permute.xlu0 %559
    %v577 = vunpack.c.l.b16 %v208
    %v578 = vunpack.c.l.b16 %v209
    %v579 = vunpack.c.l.b16 %v210
    %v580 = vunpack.c.l.b16 %v211
    %v581 = vunpack.c.l.b16 %v212
    %v582 = vunpack.c.l.b16 %v213
    %v583 = vunpack.c.l.b16 %v214
    %v584 = vunpack.c.l.b16 %v215
    %v585 = vunpack.c.l.b16 %v216
    %v586 = vunpack.c.l.b16 %v217
    %v587 = vunpack.c.l.b16 %v218
    %v588 = vunpack.c.l.b16 %v219
    %v589 = vunpack.c.l.b16 %v220
    %v590 = vunpack.c.l.b16 %v221
    %v591 = vunpack.c.l.b16 %v222
    %v592 = vunpack.c.l.b16 %v223
    %v593 = vpack.c.b16 %v577, %v497
    %v594 = vpack.c.b16 %v578, %v498
    %v595 = vpack.c.b16 %v579, %v499
    %v596 = vpack.c.b16 %v580, %v500
    %v597 = vpack.c.b16 %v581, %v501
    %v598 = vpack.c.b16 %v582, %v502
    %v599 = vpack.c.b16 %v583, %v503
    %v600 = vpack.c.b16 %v584, %v504
    %v601 = vpack.c.b16 %v585, %v505
    %v602 = vpack.c.b16 %v586, %v506
    %v603 = vpack.c.b16 %v587, %v507
    %v604 = vpack.c.b16 %v588, %v508
    %v605 = vpack.c.b16 %v589, %v509
    %v606 = vpack.c.b16 %v590, %v510
    %v607 = vpack.c.b16 %v591, %v511
    %v608 = vpack.c.b16 %v592, %v512
    %v610 = vshrl.u32 %v593, 16
    %v612 = vshll.u32 %v593, 16
    %v614 = vrot.slane %v612, 1
    %v615 = vor.u32 %v610, %v614
    %v617 = vshrl.u32 %v594, 16
    %v619 = vshll.u32 %v594, 16
    %v621 = vrot.slane %v619, 1
    %v622 = vor.u32 %v617, %v621
    %v624 = vshrl.u32 %v595, 16
    %v626 = vshll.u32 %v595, 16
    %v628 = vrot.slane %v626, 1
    %v629 = vor.u32 %v624, %v628
    %v631 = vshrl.u32 %v596, 16
    %v633 = vshll.u32 %v596, 16
    %v635 = vrot.slane %v633, 1
    %v636 = vor.u32 %v631, %v635
    %v638 = vshrl.u32 %v597, 16
    %v640 = vshll.u32 %v597, 16
    %v642 = vrot.slane %v640, 1
    %v643 = vor.u32 %v638, %v642
    %v645 = vshrl.u32 %v598, 16
    %v647 = vshll.u32 %v598, 16
    %v649 = vrot.slane %v647, 1
    %v650 = vor.u32 %v645, %v649
    %v652 = vshrl.u32 %v599, 16
    %v654 = vshll.u32 %v599, 16
    %v656 = vrot.slane %v654, 1
    %v657 = vor.u32 %v652, %v656
    %v659 = vshrl.u32 %v600, 16
    %v661 = vshll.u32 %v600, 16
    %v663 = vrot.slane %v661, 1
    %v664 = vor.u32 %v659, %v663
    %v666 = vshrl.u32 %v601, 16
    %v668 = vshll.u32 %v601, 16
    %v670 = vrot.slane %v668, 1
    %v671 = vor.u32 %v666, %v670
    %v673 = vshrl.u32 %v602, 16
    %v675 = vshll.u32 %v602, 16
    %v677 = vrot.slane %v675, 1
    %v678 = vor.u32 %v673, %v677
    %v680 = vshrl.u32 %v603, 16
    %v682 = vshll.u32 %v603, 16
    %v684 = vrot.slane %v682, 1
    %v685 = vor.u32 %v680, %v684
    %v687 = vshrl.u32 %v604, 16
    %v689 = vshll.u32 %v604, 16
    %v691 = vrot.slane %v689, 1
    %v692 = vor.u32 %v687, %v691
    %v694 = vshrl.u32 %v605, 16
    %v696 = vshll.u32 %v605, 16
    %v698 = vrot.slane %v696, 1
    %v699 = vor.u32 %v694, %v698
    %v701 = vshrl.u32 %v606, 16
    %v703 = vshll.u32 %v606, 16
    %v705 = vrot.slane %v703, 1
    %v706 = vor.u32 %v701, %v705
    %v708 = vshrl.u32 %v607, 16
    %v710 = vshll.u32 %v607, 16
    %v712 = vrot.slane %v710, 1
    %v713 = vor.u32 %v708, %v712
    %v715 = vshrl.u32 %v608, 16
    %v717 = vshll.u32 %v608, 16
    %v719 = vrot.slane %v717, 1
    %v720 = vor.u32 %v715, %v719
    %721 = vrot.lane.b32.xlu0 %v615, 20
    %v722 = vpop.permute.xlu0 %721
    %723 = vrot.lane.b32.xlu0 %v622, 20
    %v724 = vpop.permute.xlu0 %723
    %725 = vrot.lane.b32.xlu0 %v629, 20
    %v726 = vpop.permute.xlu0 %725
    %727 = vrot.lane.b32.xlu0 %v636, 20
    %v728 = vpop.permute.xlu0 %727
    %729 = vrot.lane.b32.xlu0 %v643, 20
    %v730 = vpop.permute.xlu0 %729
    %731 = vrot.lane.b32.xlu0 %v650, 20
    %v732 = vpop.permute.xlu0 %731
    %733 = vrot.lane.b32.xlu0 %v657, 20
    %v734 = vpop.permute.xlu0 %733
    %735 = vrot.lane.b32.xlu0 %v664, 20
    %v736 = vpop.permute.xlu0 %735
    %737 = vrot.lane.b32.xlu0 %v671, 20
    %v738 = vpop.permute.xlu0 %737
    %739 = vrot.lane.b32.xlu0 %v678, 20
    %v740 = vpop.permute.xlu0 %739
    %741 = vrot.lane.b32.xlu0 %v685, 20
    %v742 = vpop.permute.xlu0 %741
    %743 = vrot.lane.b32.xlu0 %v692, 20
    %v744 = vpop.permute.xlu0 %743
    %745 = vrot.lane.b32.xlu0 %v699, 20
    %v746 = vpop.permute.xlu0 %745
    %747 = vrot.lane.b32.xlu0 %v706, 20
    %v748 = vpop.permute.xlu0 %747
    %749 = vrot.lane.b32.xlu0 %v713, 20
    %v750 = vpop.permute.xlu0 %749
    %751 = vrot.lane.b32.xlu0 %v720, 20
    %v752 = vpop.permute.xlu0 %751
    %v769 = vunpack.c.l.b16 %v225
    %v770 = vunpack.c.l.b16 %v226
    %v771 = vunpack.c.l.b16 %v227
    %v772 = vunpack.c.l.b16 %v228
    %v773 = vunpack.c.l.b16 %v229
    %v774 = vunpack.c.l.b16 %v230
    %v775 = vunpack.c.l.b16 %v231
    %v776 = vunpack.c.l.b16 %v232
    %v777 = vunpack.c.l.b16 %v233
    %v778 = vunpack.c.l.b16 %v234
    %v779 = vunpack.c.l.b16 %v235
    %v780 = vunpack.c.l.b16 %v236
    %v781 = vunpack.c.l.b16 %v237
    %v782 = vunpack.c.l.b16 %v238
    %v783 = vunpack.c.l.b16 %v239
    %v784 = vunpack.c.l.b16 %v240
    %v785 = vpack.c.b16 %v769, %v769
    %v786 = vpack.c.b16 %v770, %v770
    %v787 = vpack.c.b16 %v771, %v771
    %v788 = vpack.c.b16 %v772, %v772
    %v789 = vpack.c.b16 %v773, %v773
    %v790 = vpack.c.b16 %v774, %v774
    %v791 = vpack.c.b16 %v775, %v775
    %v792 = vpack.c.b16 %v776, %v776
    %v793 = vpack.c.b16 %v777, %v777
    %v794 = vpack.c.b16 %v778, %v778
    %v795 = vpack.c.b16 %v779, %v779
    %v796 = vpack.c.b16 %v780, %v780
    %v797 = vpack.c.b16 %v781, %v781
    %v798 = vpack.c.b16 %v782, %v782
    %v799 = vpack.c.b16 %v783, %v783
    %v800 = vpack.c.b16 %v784, %v784
    %801 = vrot.lane.b32.xlu0 %v785, 24
    %v802 = vpop.permute.xlu0 %801
    %803 = vrot.lane.b32.xlu0 %v786, 24
    %v804 = vpop.permute.xlu0 %803
    %805 = vrot.lane.b32.xlu0 %v787, 24
    %v806 = vpop.permute.xlu0 %805
    %807 = vrot.lane.b32.xlu0 %v788, 24
    %v808 = vpop.permute.xlu0 %807
    %809 = vrot.lane.b32.xlu0 %v789, 24
    %v810 = vpop.permute.xlu0 %809
    %811 = vrot.lane.b32.xlu0 %v790, 24
    %v812 = vpop.permute.xlu0 %811
    %813 = vrot.lane.b32.xlu0 %v791, 24
    %v814 = vpop.permute.xlu0 %813
    %815 = vrot.lane.b32.xlu0 %v792, 24
    %v816 = vpop.permute.xlu0 %815
    %817 = vrot.lane.b32.xlu0 %v793, 24
    %v818 = vpop.permute.xlu0 %817
    %819 = vrot.lane.b32.xlu0 %v794, 24
    %v820 = vpop.permute.xlu0 %819
    %821 = vrot.lane.b32.xlu0 %v795, 24
    %v822 = vpop.permute.xlu0 %821
    %823 = vrot.lane.b32.xlu0 %v796, 24
    %v824 = vpop.permute.xlu0 %823
    %825 = vrot.lane.b32.xlu0 %v797, 24
    %v826 = vpop.permute.xlu0 %825
    %827 = vrot.lane.b32.xlu0 %v798, 24
    %v828 = vpop.permute.xlu0 %827
    %829 = vrot.lane.b32.xlu0 %v799, 24
    %v830 = vpop.permute.xlu0 %829
    %831 = vrot.lane.b32.xlu0 %v800, 24
    %v832 = vpop.permute.xlu0 %831
    %v849 = vunpack.c.l.b16 %v241
    %v850 = vunpack.c.l.b16 %v242
    %v851 = vunpack.c.l.b16 %v243
    %v852 = vunpack.c.l.b16 %v244
    %v853 = vunpack.c.l.b16 %v245
    %v854 = vunpack.c.l.b16 %v246
    %v855 = vunpack.c.l.b16 %v247
    %v856 = vunpack.c.l.b16 %v248
    %v857 = vunpack.c.l.b16 %v249
    %v858 = vunpack.c.l.b16 %v250
    %v859 = vunpack.c.l.b16 %v251
    %v860 = vunpack.c.l.b16 %v252
    %v861 = vunpack.c.l.b16 %v253
    %v862 = vunpack.c.l.b16 %v254
    %v863 = vunpack.c.l.b16 %v255
    %v864 = vunpack.c.l.b16 %v256
    %v865 = vpack.c.b16 %v849, %v769
    %v866 = vpack.c.b16 %v850, %v770
    %v867 = vpack.c.b16 %v851, %v771
    %v868 = vpack.c.b16 %v852, %v772
    %v869 = vpack.c.b16 %v853, %v773
    %v870 = vpack.c.b16 %v854, %v774
    %v871 = vpack.c.b16 %v855, %v775
    %v872 = vpack.c.b16 %v856, %v776
    %v873 = vpack.c.b16 %v857, %v777
    %v874 = vpack.c.b16 %v858, %v778
    %v875 = vpack.c.b16 %v859, %v779
    %v876 = vpack.c.b16 %v860, %v780
    %v877 = vpack.c.b16 %v861, %v781
    %v878 = vpack.c.b16 %v862, %v782
    %v879 = vpack.c.b16 %v863, %v783
    %v880 = vpack.c.b16 %v864, %v784
    %v882 = vshrl.u32 %v865, 16
    %v884 = vshll.u32 %v865, 16
    %v886 = vrot.slane %v884, 1
    %v887 = vor.u32 %v882, %v886
    %v889 = vshrl.u32 %v866, 16
    %v891 = vshll.u32 %v866, 16
    %v893 = vrot.slane %v891, 1
    %v894 = vor.u32 %v889, %v893
    %v896 = vshrl.u32 %v867, 16
    %v898 = vshll.u32 %v867, 16
    %v900 = vrot.slane %v898, 1
    %v901 = vor.u32 %v896, %v900
    %v903 = vshrl.u32 %v868, 16
    %v905 = vshll.u32 %v868, 16
    %v907 = vrot.slane %v905, 1
    %v908 = vor.u32 %v903, %v907
    %v910 = vshrl.u32 %v869, 16
    %v912 = vshll.u32 %v869, 16
    %v914 = vrot.slane %v912, 1
    %v915 = vor.u32 %v910, %v914
    %v917 = vshrl.u32 %v870, 16
    %v919 = vshll.u32 %v870, 16
    %v921 = vrot.slane %v919, 1
    %v922 = vor.u32 %v917, %v921
    %v924 = vshrl.u32 %v871, 16
    %v926 = vshll.u32 %v871, 16
    %v928 = vrot.slane %v926, 1
    %v929 = vor.u32 %v924, %v928
    %v931 = vshrl.u32 %v872, 16
    %v933 = vshll.u32 %v872, 16
    %v935 = vrot.slane %v933, 1
    %v936 = vor.u32 %v931, %v935
    %v938 = vshrl.u32 %v873, 16
    %v940 = vshll.u32 %v873, 16
    %v942 = vrot.slane %v940, 1
    %v943 = vor.u32 %v938, %v942
    %v945 = vshrl.u32 %v874, 16
    %v947 = vshll.u32 %v874, 16
    %v949 = vrot.slane %v947, 1
    %v950 = vor.u32 %v945, %v949
    %v952 = vshrl.u32 %v875, 16
    %v954 = vshll.u32 %v875, 16
    %v956 = vrot.slane %v954, 1
    %v957 = vor.u32 %v952, %v956
    %v959 = vshrl.u32 %v876, 16
    %v961 = vshll.u32 %v876, 16
    %v963 = vrot.slane %v961, 1
    %v964 = vor.u32 %v959, %v963
    %v966 = vshrl.u32 %v877, 16
    %v968 = vshll.u32 %v877, 16
    %v970 = vrot.slane %v968, 1
    %v971 = vor.u32 %v966, %v970
    %v973 = vshrl.u32 %v878, 16
    %v975 = vshll.u32 %v878, 16
    %v977 = vrot.slane %v975, 1
    %v978 = vor.u32 %v973, %v977
    %v980 = vshrl.u32 %v879, 16
    %v982 = vshll.u32 %v879, 16
    %v984 = vrot.slane %v982, 1
    %v985 = vor.u32 %v980, %v984
    %v987 = vshrl.u32 %v880, 16
    %v989 = vshll.u32 %v880, 16
    %v991 = vrot.slane %v989, 1
    %v992 = vor.u32 %v987, %v991
    %993 = vrot.lane.b32.xlu0 %v887, 32
    %v994 = vpop.permute.xlu0 %993
    %995 = vrot.lane.b32.xlu0 %v894, 32
    %v996 = vpop.permute.xlu0 %995
    %997 = vrot.lane.b32.xlu0 %v901, 32
    %v998 = vpop.permute.xlu0 %997
    %999 = vrot.lane.b32.xlu0 %v908, 32
    %v1000 = vpop.permute.xlu0 %999
    %1001 = vrot.lane.b32.xlu0 %v915, 32
    %v1002 = vpop.permute.xlu0 %1001
    %1003 = vrot.lane.b32.xlu0 %v922, 32
    %v1004 = vpop.permute.xlu0 %1003
    %1005 = vrot.lane.b32.xlu0 %v929, 32
    %v1006 = vpop.permute.xlu0 %1005
    %1007 = vrot.lane.b32.xlu0 %v936, 32
    %v1008 = vpop.permute.xlu0 %1007
    %1009 = vrot.lane.b32.xlu0 %v943, 32
    %v1010 = vpop.permute.xlu0 %1009
    %1011 = vrot.lane.b32.xlu0 %v950, 32
    %v1012 = vpop.permute.xlu0 %1011
    %1013 = vrot.lane.b32.xlu0 %v957, 32
    %v1014 = vpop.permute.xlu0 %1013
    %1015 = vrot.lane.b32.xlu0 %v964, 32
    %v1016 = vpop.permute.xlu0 %1015
    %1017 = vrot.lane.b32.xlu0 %v971, 32
    %v1018 = vpop.permute.xlu0 %1017
    %1019 = vrot.lane.b32.xlu0 %v978, 32
    %v1020 = vpop.permute.xlu0 %1019
    %1021 = vrot.lane.b32.xlu0 %v985, 32
    %v1022 = vpop.permute.xlu0 %1021
    %1023 = vrot.lane.b32.xlu0 %v992, 32
    %v1024 = vpop.permute.xlu0 %1023
    %vm1025 = vcmask 31744
    %vm1042 = vcmask 64512
    %v1044 = vsel %vm1042, %v159, %v450
    %v1046 = vsel %vm1042, %v160, %v452
    %v1048 = vsel %vm1042, %v161, %v454
    %v1050 = vsel %vm1042, %v162, %v456
    %v1052 = vsel %vm1042, %v163, %v458
    %v1054 = vsel %vm1042, %v164, %v460
    %v1056 = vsel %vm1042, %v165, %v462
    %v1058 = vsel %vm1042, %v166, %v464
    %v1060 = vsel %vm1042, %v167, %v466
    %v1062 = vsel %vm1042, %v168, %v468
    %v1064 = vsel %vm1042, %v169, %v470
    %v1066 = vsel %vm1042, %v170, %v472
    %v1068 = vsel %vm1042, %v171, %v474
    %v1070 = vsel %vm1042, %v172, %v476
    %v1072 = vsel %vm1042, %v173, %v478
    %v1074 = vsel %vm1042, %v174, %v480
    %vm1075 = vcmask 97280
    %v1077 = vsel %vm1075, %v1044, %v530
    %v1079 = vsel %vm1075, %v1046, %v532
    %v1081 = vsel %vm1075, %v1048, %v534
    %v1083 = vsel %vm1075, %v1050, %v536
    %v1085 = vsel %vm1075, %v1052, %v538
    %v1087 = vsel %vm1075, %v1054, %v540
    %v1089 = vsel %vm1075, %v1056, %v542
    %v1091 = vsel %vm1075, %v1058, %v544
    %v1093 = vsel %vm1075, %v1060, %v546
    %v1095 = vsel %vm1075, %v1062, %v548
    %v1097 = vsel %vm1075, %v1064, %v550
    %v1099 = vsel %vm1075, %v1066, %v552
    %v1101 = vsel %vm1075, %v1068, %v554
    %v1103 = vsel %vm1075, %v1070, %v556
    %v1105 = vsel %vm1075, %v1072, %v558
    %v1107 = vsel %vm1075, %v1074, %v560
    %vm1108 = vcmask 130048
    %v1109 = vsel %vm1108, %v1077, %v530
    %v1110 = vsel %vm1108, %v1079, %v532
    %v1111 = vsel %vm1108, %v1081, %v534
    %v1112 = vsel %vm1108, %v1083, %v536
    %v1113 = vsel %vm1108, %v1085, %v538
    %v1114 = vsel %vm1108, %v1087, %v540
    %v1115 = vsel %vm1108, %v1089, %v542
    %v1116 = vsel %vm1108, %v1091, %v544
    %v1117 = vsel %vm1108, %v1093, %v546
    %v1118 = vsel %vm1108, %v1095, %v548
    %v1119 = vsel %vm1108, %v1097, %v550
    %v1120 = vsel %vm1108, %v1099, %v552
    %v1121 = vsel %vm1108, %v1101, %v554
    %v1122 = vsel %vm1108, %v1103, %v556
    %v1123 = vsel %vm1108, %v1105, %v558
    %v1124 = vsel %vm1108, %v1107, %v560
    %vm1125 = vcmask 162816
    %v1127 = vsel %vm1125, %v1109, %v722
    %v1129 = vsel %vm1125, %v1110, %v724
    %v1131 = vsel %vm1125, %v1111, %v726
    %v1133 = vsel %vm1125, %v1112, %v728
    %v1135 = vsel %vm1125, %v1113, %v730
    %v1137 = vsel %vm1125, %v1114, %v732
    %v1139 = vsel %vm1125, %v1115, %v734
    %v1141 = vsel %vm1125, %v1116, %v736
    %v1143 = vsel %vm1125, %v1117, %v738
    %v1145 = vsel %vm1125, %v1118, %v740
    %v1147 = vsel %vm1125, %v1119, %v742
    %v1149 = vsel %vm1125, %v1120, %v744
    %v1151 = vsel %vm1125, %v1121, %v746
    %v1153 = vsel %vm1125, %v1122, %v748
    %v1155 = vsel %vm1125, %v1123, %v750
    %v1157 = vsel %vm1125, %v1124, %v752
    %vm1158 = vcmask 195584
    %v1160 = vsel %vm1158, %v1127, %v802
    %v1162 = vsel %vm1158, %v1129, %v804
    %v1164 = vsel %vm1158, %v1131, %v806
    %v1166 = vsel %vm1158, %v1133, %v808
    %v1168 = vsel %vm1158, %v1135, %v810
    %v1170 = vsel %vm1158, %v1137, %v812
    %v1172 = vsel %vm1158, %v1139, %v814
    %v1174 = vsel %vm1158, %v1141, %v816
    %v1176 = vsel %vm1158, %v1143, %v818
    %v1178 = vsel %vm1158, %v1145, %v820
    %v1180 = vsel %vm1158, %v1147, %v822
    %v1182 = vsel %vm1158, %v1149, %v824
    %v1184 = vsel %vm1158, %v1151, %v826
    %v1186 = vsel %vm1158, %v1153, %v828
    %v1188 = vsel %vm1158, %v1155, %v830
    %v1190 = vsel %vm1158, %v1157, %v832
    %vm1191 = vcmask 228352
    %v1192 = vsel %vm1191, %v1160, %v802
    %v1193 = vsel %vm1191, %v1162, %v804
    %v1194 = vsel %vm1191, %v1164, %v806
    %v1195 = vsel %vm1191, %v1166, %v808
    %v1196 = vsel %vm1191, %v1168, %v810
    %v1197 = vsel %vm1191, %v1170, %v812
    %v1198 = vsel %vm1191, %v1172, %v814
    %v1199 = vsel %vm1191, %v1174, %v816
    %v1200 = vsel %vm1191, %v1176, %v818
    %v1201 = vsel %vm1191, %v1178, %v820
    %v1202 = vsel %vm1191, %v1180, %v822
    %v1203 = vsel %vm1191, %v1182, %v824
    %v1204 = vsel %vm1191, %v1184, %v826
    %v1205 = vsel %vm1191, %v1186, %v828
    %v1206 = vsel %vm1191, %v1188, %v830
    %v1207 = vsel %vm1191, %v1190, %v832
    %vm1208 = vcmask 261120
    %v1210 = vsel %vm1208, %v1192, %v994
    %v1212 = vsel %vm1208, %v1193, %v996
    %v1214 = vsel %vm1208, %v1194, %v998
    %v1216 = vsel %vm1208, %v1195, %v1000
    %v1218 = vsel %vm1208, %v1196, %v1002
    %v1220 = vsel %vm1208, %v1197, %v1004
    %v1222 = vsel %vm1208, %v1198, %v1006
    %v1224 = vsel %vm1208, %v1199, %v1008
    %v1226 = vsel %vm1208, %v1200, %v1010
    %v1228 = vsel %vm1208, %v1201, %v1012
    %v1230 = vsel %vm1208, %v1202, %v1014
    %v1232 = vsel %vm1208, %v1203, %v1016
    %v1234 = vsel %vm1208, %v1204, %v1018
    %v1236 = vsel %vm1208, %v1205, %v1020
    %v1238 = vsel %vm1208, %v1206, %v1022
    %v1240 = vsel %vm1208, %v1207, %v1024
    %v1241 = vld [vmem:[#allocation6] sm:$0xf]
    %v1242 = vld [vmem:[#allocation6 + $0x4] sm:$0xf]
    %v1243 = vld [vmem:[#allocation6 + $0x8] sm:$0xf]
    %v1244 = vld [vmem:[#allocation6 + $0xc] sm:$0xf]
    %v1245 = vld [vmem:[#allocation6 + $0x10] sm:$0x3]
    %v1262 = vunpack.c.l.b16 %v1210
    %v1263 = vunpack.c.l.b16 %v1212
    %v1264 = vunpack.c.l.b16 %v1214
    %v1265 = vunpack.c.l.b16 %v1216
    %v1266 = vunpack.c.l.b16 %v1218
    %v1267 = vunpack.c.l.b16 %v1220
    %v1268 = vunpack.c.l.b16 %v1222
    %v1269 = vunpack.c.l.b16 %v1224
    %v1270 = vunpack.c.l.b16 %v1226
    %v1271 = vunpack.c.l.b16 %v1228
    %v1272 = vunpack.c.l.b16 %v1230
    %v1273 = vunpack.c.l.b16 %v1232
    %v1274 = vunpack.c.l.b16 %v1234
    %v1275 = vunpack.c.l.b16 %v1236
    %v1276 = vunpack.c.l.b16 %v1238
    %v1277 = vunpack.c.l.b16 %v1240
    %v1278 = vpack.c.b16 %v1263, %v1262
    %v1279 = vpack.c.b16 %v1265, %v1264
    %v1280 = vpack.c.b16 %v1267, %v1266
    %v1281 = vpack.c.b16 %v1269, %v1268
    %v1282 = vpack.c.b16 %v1271, %v1270
    %v1283 = vpack.c.b16 %v1273, %v1272
    %v1284 = vpack.c.b16 %v1275, %v1274
    %v1285 = vpack.c.b16 %v1277, %v1276
    %v1291 = vunpack.c.l.b16 %v1241
    %v1292 = vunpack.c.l.b16 %v1242
    %v1293 = vunpack.c.l.b16 %v1243
    %v1294 = vunpack.c.l.b16 %v1244
    %v1295 = vunpack.c.l.b16 %v1245
    %v1296 = vpack.c.b16 %v1292, %v1291
    %v1297 = vpack.c.b16 %v1294, %v1293
    %v1298 = vpack.c.b16 %v1295, %v1295
    %vm1301 = vcmask 293888
    %v1303 = vsel %vm1301, %v1278, 0
    %v1306 = vsel %vm1301, %v1279, 0
    %v1309 = vsel %vm1301, %v1280, 0
    %v1312 = vsel %vm1301, %v1281, 0
    %v1315 = vsel %vm1301, %v1282, 0
    %v1318 = vsel %vm1301, %v1283, 0
    %v1321 = vsel %vm1301, %v1284, 0
    %v1324 = vsel %vm1301, %v1285, 0
    %vm1326 = vcmask 1041408
    %v1328 = vsel %vm1326, %v1298, 0
    %1330 = vmatprep.subr.bf16.mxu0 0
    %1331 = vmatpush1.bf16.msra.mxu0 %v1296
    %1332 = vmatprep.subr.bf16.mxu0 0
    %1333 = vmatpush1.bf16.msra.mxu0 %v1297
    %1334 = vmatprep.subr.bf16.mxu0 0
    %1335 = vmatpush1.bf16.msra.mxu0 %v1328
    %1336 = vmatprep.subr.bf16.mxu0 0
    %1337 = vmatpush1.bf16.msra.mxu0 0
    %1338 = vmatprep.subr.bf16.mxu0 0
    %1339 = vmatpush1.bf16.msra.mxu0 0
    %1340 = vmatprep.subr.bf16.mxu0 0
    %1341 = vmatpush1.bf16.msra.mxu0 0
    %1342 = vmatprep.subr.bf16.mxu0 0
    %1343 = vmatpush1.bf16.msra.mxu0 0
    %1344 = vmatprep.subr.bf16.mxu0 0
    %1345 = vmatpush1.bf16.msra.mxu0 0
    %1346 = vmatprep.subr.bf16.mxu0 0
    %1347 = vmatpush1.bf16.msra.mxu0 0
    %1348 = vmatprep.subr.bf16.mxu0 0
    %1349 = vmatpush1.bf16.msra.mxu0 0
    %1350 = vmatprep.subr.bf16.mxu0 0
    %1351 = vmatpush1.bf16.msra.mxu0 0
    %1352 = vmatprep.subr.bf16.mxu0 0
    %1353 = vmatpush1.bf16.msra.mxu0 0
    %1354 = vmatprep.subr.bf16.mxu0 0
    %1355 = vmatpush1.bf16.msra.mxu0 0
    %1356 = vmatprep.subr.bf16.mxu0 0
    %1357 = vmatpush1.bf16.msra.mxu0 0
    %1358 = vmatprep.subr.bf16.mxu0 0
    %1359 = vmatpush1.bf16.msra.mxu0 0
    %1360 = vmatprep.subr.bf16.mxu0 0
    %1361 = vmatpush1.bf16.msra.mxu0 0
    %1362 = vmatprep.mubr.bf16.mxu0 0
    %1363 = vmatmul.mubr.bf16.gmra.mrb[0].mxu0 %v1303
    %v1364 = vpop.f32.mrb[0].mxu0
    %v1365 = vadd.f32 0.0, %v1364
    %v1366 = vpop.f32.mrb[0].mxu0
    %v1367 = vpop.f32.mrb[0].mxu0
    %v1368 = vadd.f32 0.0, %v1367
    %v1369 = vpop.f32.mrb[0].mxu0
    %1370 = vmatprep.mubr.bf16.mxu0 0
    %1371 = vmatmul.mubr.bf16.gmra.mrb[0].mxu0 %v1306
    %v1372 = vpop.f32.mrb[0].mxu0
    %v1373 = vadd.f32 0.0, %v1372
    %v1374 = vpop.f32.mrb[0].mxu0
    %v1375 = vpop.f32.mrb[0].mxu0
    %v1376 = vadd.f32 0.0, %v1375
    %v1377 = vpop.f32.mrb[0].mxu0
    %1378 = vmatprep.mubr.bf16.mxu0 0
    %1379 = vmatmul.mubr.bf16.gmra.mrb[0].mxu0 %v1309
    %v1380 = vpop.f32.mrb[0].mxu0
    %v1381 = vadd.f32 0.0, %v1380
    %v1382 = vpop.f32.mrb[0].mxu0
    %v1383 = vpop.f32.mrb[0].mxu0
    %v1384 = vadd.f32 0.0, %v1383
    %v1385 = vpop.f32.mrb[0].mxu0
    %1386 = vmatprep.mubr.bf16.mxu0 0
    %1387 = vmatmul.mubr.bf16.gmra.mrb[0].mxu0 %v1312
    %v1388 = vpop.f32.mrb[0].mxu0
    %v1389 = vadd.f32 0.0, %v1388
    %v1390 = vpop.f32.mrb[0].mxu0
    %v1391 = vpop.f32.mrb[0].mxu0
    %v1392 = vadd.f32 0.0, %v1391
    %v1393 = vpop.f32.mrb[0].mxu0
    %1394 = vmatprep.mubr.bf16.mxu0 0
    %1395 = vmatmul.mubr.bf16.gmra.mrb[0].mxu0 %v1315
    %v1396 = vpop.f32.mrb[0].mxu0
    %v1397 = vadd.f32 0.0, %v1396
    %v1398 = vpop.f32.mrb[0].mxu0
    %v1399 = vpop.f32.mrb[0].mxu0
    %v1400 = vadd.f32 0.0, %v1399
    %v1401 = vpop.f32.mrb[0].mxu0
    %1402 = vmatprep.mubr.bf16.mxu0 0
    %1403 = vmatmul.mubr.bf16.gmra.mrb[0].mxu0 %v1318
    %v1404 = vpop.f32.mrb[0].mxu0
    %v1405 = vadd.f32 0.0, %v1404
    %v1406 = vpop.f32.mrb[0].mxu0
    %v1407 = vpop.f32.mrb[0].mxu0
    %v1408 = vadd.f32 0.0, %v1407
    %v1409 = vpop.f32.mrb[0].mxu0
    %1410 = vmatprep.mubr.bf16.mxu0 0
    %1411 = vmatmul.mubr.bf16.gmra.mrb[0].mxu0 %v1321
    %v1412 = vpop.f32.mrb[0].mxu0
    %v1413 = vadd.f32 0.0, %v1412
    %v1414 = vpop.f32.mrb[0].mxu0
    %v1415 = vpop.f32.mrb[0].mxu0
    %v1416 = vadd.f32 0.0, %v1415
    %v1417 = vpop.f32.mrb[0].mxu0
    %1418 = vmatprep.mubr.bf16.mxu0 0
    %1419 = vmatmul.mubr.bf16.gmra.mrb[0].mxu0 %v1324
    %v1420 = vpop.f32.mrb[0].mxu0
    %v1421 = vadd.f32 0.0, %v1420
    %v1422 = vpop.f32.mrb[0].mxu0
    %v1423 = vpop.f32.mrb[0].mxu0
    %v1424 = vadd.f32 0.0, %v1423
    %v1425 = vpop.f32.mrb[0].mxu0
    %1426 = vdwg.mxu0
    %v1427 = vsel %vm1042, %v1365, 0.0
    %v1428 = vsel %vm1042, %v1368, 0.0
    %v1429 = vadd.f32 %v1427, %v1428
    %v1430 = vsel %vm1042, %v1373, 0.0
    %v1431 = vadd.f32 %v1429, %v1430
    %v1432 = vsel %vm1042, %v1376, 0.0
    %v1433 = vadd.f32 %v1431, %v1432
    %v1434 = vsel %vm1042, %v1381, 0.0
    %v1435 = vadd.f32 %v1433, %v1434
    %v1436 = vsel %vm1042, %v1384, 0.0
    %v1437 = vadd.f32 %v1435, %v1436
    %v1438 = vsel %vm1042, %v1389, 0.0
    %v1439 = vadd.f32 %v1437, %v1438
    %v1440 = vsel %vm1042, %v1392, 0.0
    %v1441 = vadd.f32 %v1439, %v1440
    %v1442 = vsel %vm1042, %v1397, 0.0
    %v1443 = vadd.f32 %v1441, %v1442
    %v1444 = vsel %vm1042, %v1400, 0.0
    %v1445 = vadd.f32 %v1443, %v1444
    %v1446 = vsel %vm1042, %v1405, 0.0
    %v1447 = vadd.f32 %v1445, %v1446
    %v1448 = vsel %vm1042, %v1408, 0.0
    %v1449 = vadd.f32 %v1447, %v1448
    %v1450 = vsel %vm1042, %v1413, 0.0
    %v1451 = vadd.f32 %v1449, %v1450
    %v1452 = vsel %vm1042, %v1416, 0.0
    %v1453 = vadd.f32 %v1451, %v1452
    %v1454 = vsel %vm1042, %v1421, 0.0
    %v1455 = vadd.f32 %v1453, %v1454
    %v1456 = vsel %vm1042, %v1424, 0.0
    %v1457 = vadd.f32 %v1455, %v1456
    %v1458 = vrot.slane %v1457, 4
    %v1459 = vadd.f32 %v1457, %v1458
    %v1460 = vrot.slane %v1459, 2
    %v1461 = vadd.f32 %v1459, %v1460
    %v1462 = vrot.slane %v1461, 1
    %v1463 = vadd.f32 %v1461, %v1462
    %v1464 = vrcp.pop 128.0
    %v1465 = vmul.f32 %v1463, %v1464
    %v1466 = vsub.f32 %v1365, %v1465
    %v1467 = vsub.f32 %v1368, %v1465
    %v1468 = vsub.f32 %v1373, %v1465
    %v1469 = vsub.f32 %v1376, %v1465
    %v1470 = vsub.f32 %v1381, %v1465
    %v1471 = vsub.f32 %v1384, %v1465
    %v1472 = vsub.f32 %v1389, %v1465
    %v1473 = vsub.f32 %v1392, %v1465
    %v1474 = vsub.f32 %v1397, %v1465
    %v1475 = vsub.f32 %v1400, %v1465
    %v1476 = vsub.f32 %v1405, %v1465
    %v1477 = vsub.f32 %v1408, %v1465
    %v1478 = vsub.f32 %v1413, %v1465
    %v1479 = vsub.f32 %v1416, %v1465
    %v1480 = vsub.f32 %v1421, %v1465
    %v1481 = vsub.f32 %v1424, %v1465
    %v1482 = vmul.f32 %v1466, %v1466
    %v1483 = vmul.f32 %v1467, %v1467
    %v1484 = vmul.f32 %v1468, %v1468
    %v1485 = vmul.f32 %v1469, %v1469
    %v1486 = vmul.f32 %v1470, %v1470
    %v1487 = vmul.f32 %v1471, %v1471
    %v1488 = vmul.f32 %v1472, %v1472
    %v1489 = vmul.f32 %v1473, %v1473
    %v1490 = vmul.f32 %v1474, %v1474
    %v1491 = vmul.f32 %v1475, %v1475
    %v1492 = vmul.f32 %v1476, %v1476
    %v1493 = vmul.f32 %v1477, %v1477
    %v1494 = vmul.f32 %v1478, %v1478
    %v1495 = vmul.f32 %v1479, %v1479
    %v1496 = vmul.f32 %v1480, %v1480
    %v1497 = vmul.f32 %v1481, %v1481
    %v1498 = vsel %vm1042, %v1482, 0.0
    %v1499 = vsel %vm1042, %v1483, 0.0
    %v1500 = vadd.f32 %v1498, %v1499
    %v1501 = vsel %vm1042, %v1484, 0.0
    %v1502 = vadd.f32 %v1500, %v1501
    %v1503 = vsel %vm1042, %v1485, 0.0
    %v1504 = vadd.f32 %v1502, %v1503
    %v1505 = vsel %vm1042, %v1486, 0.0
    %v1506 = vadd.f32 %v1504, %v1505
    %v1507 = vsel %vm1042, %v1487, 0.0
    %v1508 = vadd.f32 %v1506, %v1507
    %v1509 = vsel %vm1042, %v1488, 0.0
    %v1510 = vadd.f32 %v1508, %v1509
    %v1511 = vsel %vm1042, %v1489, 0.0
    %v1512 = vadd.f32 %v1510, %v1511
    %v1513 = vsel %vm1042, %v1490, 0.0
    %v1514 = vadd.f32 %v1512, %v1513
    %v1515 = vsel %vm1042, %v1491, 0.0
    %v1516 = vadd.f32 %v1514, %v1515
    %v1517 = vsel %vm1042, %v1492, 0.0
    %v1518 = vadd.f32 %v1516, %v1517
    %v1519 = vsel %vm1042, %v1493, 0.0
    %v1520 = vadd.f32 %v1518, %v1519
    %v1521 = vsel %vm1042, %v1494, 0.0
    %v1522 = vadd.f32 %v1520, %v1521
    %v1523 = vsel %vm1042, %v1495, 0.0
    %v1524 = vadd.f32 %v1522, %v1523
    %v1525 = vsel %vm1042, %v1496, 0.0
    %v1526 = vadd.f32 %v1524, %v1525
    %v1527 = vsel %vm1042, %v1497, 0.0
    %v1528 = vadd.f32 %v1526, %v1527
    %v1529 = vrot.slane %v1528, 4
    %v1530 = vadd.f32 %v1528, %v1529
    %v1531 = vrot.slane %v1530, 2
    %v1532 = vadd.f32 %v1530, %v1531
    %v1533 = vrot.slane %v1532, 1
    %v1534 = vadd.f32 %v1532, %v1533
    %v1535 = vmul.f32 %v1534, %v1464
    %v1536 = vadd.f32 %v1535, 1e-05
    %v1537 = vrsqrt.pop %v1536
    %v1538 = vmul.f32 %v1466, %v1537
    %v1539 = vmul.f32 %v1467, %v1537
    %v1540 = vmul.f32 %v1468, %v1537
    %v1541 = vmul.f32 %v1469, %v1537
    %v1542 = vmul.f32 %v1470, %v1537
    %v1543 = vmul.f32 %v1471, %v1537
    %v1544 = vmul.f32 %v1472, %v1537
    %v1545 = vmul.f32 %v1473, %v1537
    %v1546 = vmul.f32 %v1474, %v1537
    %v1547 = vmul.f32 %v1475, %v1537
    %v1548 = vmul.f32 %v1476, %v1537
    %v1549 = vmul.f32 %v1477, %v1537
    %v1550 = vmul.f32 %v1478, %v1537
    %v1551 = vmul.f32 %v1479, %v1537
    %v1552 = vmul.f32 %v1480, %v1537
    %v1553 = vmul.f32 %v1481, %v1537
    %v1554 = vld [vmem:[#allocation9] sm:$0x1]
    %v1556 = vlaneseq
    %v1557 = vshrl.u32 %v1556, 7
    %v1558 = vsub.s32 0, %v1557
    %v1559 = vrot.slane %v1554, %v1558
    %v1561 = vmul.f32 %v1538, %v1559
    %v1562 = vmul.f32 %v1539, %v1559
    %v1563 = vmul.f32 %v1540, %v1559
    %v1564 = vmul.f32 %v1541, %v1559
    %v1565 = vmul.f32 %v1542, %v1559
    %v1566 = vmul.f32 %v1543, %v1559
    %v1567 = vmul.f32 %v1544, %v1559
    %v1568 = vmul.f32 %v1545, %v1559
    %v1569 = vmul.f32 %v1546, %v1559
    %v1570 = vmul.f32 %v1547, %v1559
    %v1571 = vmul.f32 %v1548, %v1559
    %v1572 = vmul.f32 %v1549, %v1559
    %v1573 = vmul.f32 %v1550, %v1559
    %v1574 = vmul.f32 %v1551, %v1559
    %v1575 = vmul.f32 %v1552, %v1559
    %v1576 = vmul.f32 %v1553, %v1559
    %v1577 = vld [vmem:[#allocation11] sm:$0x1]
    %v1579 = vlaneseq
    %v1580 = vshrl.u32 %v1579, 7
    %v1581 = vsub.s32 0, %v1580
    %v1582 = vrot.slane %v1577, %v1581
    %v1584 = vadd.f32 %v1561, %v1582
    %v1585 = vadd.f32 %v1562, %v1582
    %v1586 = vadd.f32 %v1563, %v1582
    %v1587 = vadd.f32 %v1564, %v1582
    %v1588 = vadd.f32 %v1565, %v1582
    %v1589 = vadd.f32 %v1566, %v1582
    %v1590 = vadd.f32 %v1567, %v1582
    %v1591 = vadd.f32 %v1568, %v1582
    %v1592 = vadd.f32 %v1569, %v1582
    %v1593 = vadd.f32 %v1570, %v1582
    %v1594 = vadd.f32 %v1571, %v1582
    %v1595 = vadd.f32 %v1572, %v1582
    %v1596 = vadd.f32 %v1573, %v1582
    %v1597 = vadd.f32 %v1574, %v1582
    %v1598 = vadd.f32 %v1575, %v1582
    %v1599 = vadd.f32 %v1576, %v1582
    %v1600 = vmax.f32 %v1584, 0.0
    %v1601 = vmax.f32 %v1585, 0.0
    %v1602 = vmax.f32 %v1586, 0.0
    %v1603 = vmax.f32 %v1587, 0.0
    %v1604 = vmax.f32 %v1588, 0.0
    %v1605 = vmax.f32 %v1589, 0.0
    %v1606 = vmax.f32 %v1590, 0.0
    %v1607 = vmax.f32 %v1591, 0.0
    %v1608 = vmax.f32 %v1592, 0.0
    %v1609 = vmax.f32 %v1593, 0.0
    %v1610 = vmax.f32 %v1594, 0.0
    %v1611 = vmax.f32 %v1595, 0.0
    %v1612 = vmax.f32 %v1596, 0.0
    %v1613 = vmax.f32 %v1597, 0.0
    %v1614 = vmax.f32 %v1598, 0.0
    %v1615 = vmax.f32 %v1599, 0.0
    %1616 = vst.msk [vmem:[#allocation2] sm:$0xff] %vm1042, 0.0
    %vm1617 = vcmask 58368
    %1618 = vst.msk [vmem:[#allocation2 + $0x8] sm:$0x3] %vm1617, 0.0
    %1619 = vst.msk [vmem:[#allocation2 + $0xa0] sm:$0xff] %vm1042, 0.0
    %1620 = vst.msk [vmem:[#allocation2 + $0xa8] sm:$0x3] %vm1617, 0.0
    %s1621 = scalar_lea.vmem [#allocation2], 144
    %1622 = vst.msk [vmem:[%s1621] sm:$0xff] %vm1042, 0.0
    %1623 = vst.msk [vmem:[%s1621 + $0x8] sm:$0x3] %vm1617, 0.0
    %1624 = vst.msk [vmem:[%s1621 + $0xa0] sm:$0xff] %vm1042, 0.0
    %1625 = vst.msk [vmem:[%s1621 + $0xa8] sm:$0x3] %vm1617, 0.0
    %s1626 = scalar_lea.vmem [#allocation2], 16
    %vm1627 = vcmask 57344
    %1628 = vst.msk [vmem:[%s1626] sm:$0x1] %vm1627, 0.0
    %1629 = vst.msk [vmem:[%s1626 + $0x10] sm:$0x1] %vm1627, 0.0
    %1630 = vst.msk [vmem:[%s1626 + $0x20] sm:$0x1] %vm1627, 0.0
    %1631 = vst.msk [vmem:[%s1626 + $0x30] sm:$0x1] %vm1627, 0.0
    %1632 = vst.msk [vmem:[%s1626 + $0x40] sm:$0x1] %vm1627, 0.0
    %1633 = vst.msk [vmem:[%s1626 + $0x50] sm:$0x1] %vm1627, 0.0
    %1634 = vst.msk [vmem:[%s1626 + $0x60] sm:$0x1] %vm1627, 0.0
    %1635 = vst.msk [vmem:[%s1626 + $0x70] sm:$0x1] %vm1627, 0.0
    %1636 = vst.msk [vmem:[%s1626 + $0xa0] sm:$0x1] %vm1627, 0.0
    %1637 = vst.msk [vmem:[%s1626 + $0xb0] sm:$0x1] %vm1627, 0.0
    %1638 = vst.msk [vmem:[%s1626 + $0xc0] sm:$0x1] %vm1627, 0.0
    %1639 = vst.msk [vmem:[%s1626 + $0xd0] sm:$0x1] %vm1627, 0.0
    %1640 = vst.msk [vmem:[%s1626 + $0xe0] sm:$0x1] %vm1627, 0.0
    %1641 = vst.msk [vmem:[%s1626 + $0xf0] sm:$0x1] %vm1627, 0.0
    %1642 = vst.msk [vmem:[%s1626 + $0x100] sm:$0x1] %vm1627, 0.0
    %1643 = vst.msk [vmem:[%s1626 + $0x110] sm:$0x1] %vm1627, 0.0
    %1644 = vst.msk [vmem:[%s1626 + $0x9] sm:$0x1] %vm1627, 0.0
    %1645 = vst.msk [vmem:[%s1626 + $0x19] sm:$0x1] %vm1627, 0.0
    %1646 = vst.msk [vmem:[%s1626 + $0x29] sm:$0x1] %vm1627, 0.0
    %1647 = vst.msk [vmem:[%s1626 + $0x39] sm:$0x1] %vm1627, 0.0
    %1648 = vst.msk [vmem:[%s1626 + $0x49] sm:$0x1] %vm1627, 0.0
    %1649 = vst.msk [vmem:[%s1626 + $0x59] sm:$0x1] %vm1627, 0.0
    %1650 = vst.msk [vmem:[%s1626 + $0x69] sm:$0x1] %vm1627, 0.0
    %1651 = vst.msk [vmem:[%s1626 + $0x79] sm:$0x1] %vm1627, 0.0
    %1652 = vst.msk [vmem:[%s1626 + $0xa9] sm:$0x1] %vm1627, 0.0
    %1653 = vst.msk [vmem:[%s1626 + $0xb9] sm:$0x1] %vm1627, 0.0
    %1654 = vst.msk [vmem:[%s1626 + $0xc9] sm:$0x1] %vm1627, 0.0
    %1655 = vst.msk [vmem:[%s1626 + $0xd9] sm:$0x1] %vm1627, 0.0
    %1656 = vst.msk [vmem:[%s1626 + $0xe9] sm:$0x1] %vm1627, 0.0
    %1657 = vst.msk [vmem:[%s1626 + $0xf9] sm:$0x1] %vm1627, 0.0
    %1658 = vst.msk [vmem:[%s1626 + $0x109] sm:$0x1] %vm1627, 0.0
    %1659 = vst.msk [vmem:[%s1626 + $0x119] sm:$0x1] %vm1627, 0.0
    %1660 = vst.msk [vmem:[%s1626 + $0x1] sm:$0xff] %vm1042, %v1600
    %1661 = vst.msk [vmem:[%s1626 + $0x11] sm:$0xff] %vm1042, %v1601
    %1662 = vst.msk [vmem:[%s1626 + $0x21] sm:$0xff] %vm1042, %v1602
    %1663 = vst.msk [vmem:[%s1626 + $0x31] sm:$0xff] %vm1042, %v1603
    %1664 = vst.msk [vmem:[%s1626 + $0x41] sm:$0xff] %vm1042, %v1604
    %1665 = vst.msk [vmem:[%s1626 + $0x51] sm:$0xff] %vm1042, %v1605
    %1666 = vst.msk [vmem:[%s1626 + $0x61] sm:$0xff] %vm1042, %v1606
    %1667 = vst.msk [vmem:[%s1626 + $0x71] sm:$0xff] %vm1042, %v1607
    %1668 = vst.msk [vmem:[%s1626 + $0xa1] sm:$0xff] %vm1042, %v1608
    %1669 = vst.msk [vmem:[%s1626 + $0xb1] sm:$0xff] %vm1042, %v1609
    %1670 = vst.msk [vmem:[%s1626 + $0xc1] sm:$0xff] %vm1042, %v1610
    %1671 = vst.msk [vmem:[%s1626 + $0xd1] sm:$0xff] %vm1042, %v1611
    %1672 = vst.msk [vmem:[%s1626 + $0xe1] sm:$0xff] %vm1042, %v1612
    %1673 = vst.msk [vmem:[%s1626 + $0xf1] sm:$0xff] %vm1042, %v1613
    %1674 = vst.msk [vmem:[%s1626 + $0x101] sm:$0xff] %vm1042, %v1614
    %1675 = vst.msk [vmem:[%s1626 + $0x111] sm:$0xff] %vm1042, %v1615
    %v1676 = vld [vmem:[#allocation2] sm:$0xff]
    %v1677 = vld [vmem:[#allocation2 + $0x10] sm:$0xff]
    %v1678 = vld [vmem:[#allocation2 + $0x20] sm:$0xff]
    %v1679 = vld [vmem:[#allocation2 + $0x30] sm:$0xff]
    %v1680 = vld [vmem:[#allocation2 + $0x40] sm:$0xff]
    %v1681 = vld [vmem:[#allocation2 + $0x50] sm:$0xff]
    %v1682 = vld [vmem:[#allocation2 + $0x60] sm:$0xff]
    %v1683 = vld [vmem:[#allocation2 + $0x70] sm:$0xff]
    %v1684 = vld [vmem:[#allocation2 + $0xa0] sm:$0xff]
    %v1685 = vld [vmem:[#allocation2 + $0xb0] sm:$0xff]
    %v1686 = vld [vmem:[#allocation2 + $0xc0] sm:$0xff]
    %v1687 = vld [vmem:[#allocation2 + $0xd0] sm:$0xff]
    %v1688 = vld [vmem:[#allocation2 + $0xe0] sm:$0xff]
    %v1689 = vld [vmem:[#allocation2 + $0xf0] sm:$0xff]
    %v1690 = vld [vmem:[#allocation2 + $0x100] sm:$0xff]
    %v1691 = vld [vmem:[#allocation2 + $0x110] sm:$0xff]
    %v1692 = vld [vmem:[#allocation2 + $0x1] sm:$0xff]
    %v1693 = vld [vmem:[#allocation2 + $0x11] sm:$0xff]
    %v1694 = vld [vmem:[#allocation2 + $0x21] sm:$0xff]
    %v1695 = vld [vmem:[#allocation2 + $0x31] sm:$0xff]
    %v1696 = vld [vmem:[#allocation2 + $0x41] sm:$0xff]
    %v1697 = vld [vmem:[#allocation2 + $0x51] sm:$0xff]
    %v1698 = vld [vmem:[#allocation2 + $0x61] sm:$0xff]
    %v1699 = vld [vmem:[#allocation2 + $0x71] sm:$0xff]
    %v1700 = vld [vmem:[#allocation2 + $0xa1] sm:$0xff]
    %v1701 = vld [vmem:[#allocation2 + $0xb1] sm:$0xff]
    %v1702 = vld [vmem:[#allocation2 + $0xc1] sm:$0xff]
    %v1703 = vld [vmem:[#allocation2 + $0xd1] sm:$0xff]
    %v1704 = vld [vmem:[#allocation2 + $0xe1] sm:$0xff]
    %v1705 = vld [vmem:[#allocation2 + $0xf1] sm:$0xff]
    %v1706 = vld [vmem:[#allocation2 + $0x101] sm:$0xff]
    %v1707 = vld [vmem:[#allocation2 + $0x111] sm:$0xff]
    %v1708 = vld [vmem:[#allocation2 + $0x2] sm:$0xff]
    %v1709 = vld [vmem:[#allocation2 + $0x12] sm:$0xff]
    %v1710 = vld [vmem:[#allocation2 + $0x22] sm:$0xff]
    %v1711 = vld [vmem:[#allocation2 + $0x32] sm:$0xff]
    %v1712 = vld [vmem:[#allocation2 + $0x42] sm:$0xff]
    %v1713 = vld [vmem:[#allocation2 + $0x52] sm:$0xff]
    %v1714 = vld [vmem:[#allocation2 + $0x62] sm:$0xff]
    %v1715 = vld [vmem:[#allocation2 + $0x72] sm:$0xff]
    %v1716 = vld [vmem:[#allocation2 + $0xa2] sm:$0xff]
    %v1717 = vld [vmem:[#allocation2 + $0xb2] sm:$0xff]
    %v1718 = vld [vmem:[#allocation2 + $0xc2] sm:$0xff]
    %v1719 = vld [vmem:[#allocation2 + $0xd2] sm:$0xff]
    %v1720 = vld [vmem:[#allocation2 + $0xe2] sm:$0xff]
    %v1721 = vld [vmem:[#allocation2 + $0xf2] sm:$0xff]
    %v1722 = vld [vmem:[#allocation2 + $0x102] sm:$0xff]
    %v1723 = vld [vmem:[#allocation2 + $0x112] sm:$0xff]
    %v1724 = vld [vmem:[%s1626] sm:$0xff]
    %v1725 = vld [vmem:[%s1626 + $0x10] sm:$0xff]
    %v1726 = vld [vmem:[%s1626 + $0x20] sm:$0xff]
    %v1727 = vld [vmem:[%s1626 + $0x30] sm:$0xff]
    %v1728 = vld [vmem:[%s1626 + $0x40] sm:$0xff]
    %v1729 = vld [vmem:[%s1626 + $0x50] sm:$0xff]
    %v1730 = vld [vmem:[%s1626 + $0x60] sm:$0xff]
    %v1731 = vld [vmem:[%s1626 + $0x70] sm:$0xff]
    %v1732 = vld [vmem:[%s1626 + $0xa0] sm:$0xff]
    %v1733 = vld [vmem:[%s1626 + $0xb0] sm:$0xff]
    %v1734 = vld [vmem:[%s1626 + $0xc0] sm:$0xff]
    %v1735 = vld [vmem:[%s1626 + $0xd0] sm:$0xff]
    %v1736 = vld [vmem:[%s1626 + $0xe0] sm:$0xff]
    %v1737 = vld [vmem:[%s1626 + $0xf0] sm:$0xff]
    %v1738 = vld [vmem:[%s1626 + $0x100] sm:$0xff]
    %v1739 = vld [vmem:[%s1626 + $0x110] sm:$0xff]
    %v1740 = vld [vmem:[%s1626 + $0x1] sm:$0xff]
    %v1741 = vld [vmem:[%s1626 + $0x11] sm:$0xff]
    %v1742 = vld [vmem:[%s1626 + $0x21] sm:$0xff]
    %v1743 = vld [vmem:[%s1626 + $0x31] sm:$0xff]
    %v1744 = vld [vmem:[%s1626 + $0x41] sm:$0xff]
    %v1745 = vld [vmem:[%s1626 + $0x51] sm:$0xff]
    %v1746 = vld [vmem:[%s1626 + $0x61] sm:$0xff]
    %v1747 = vld [vmem:[%s1626 + $0x71] sm:$0xff]
    %v1748 = vld [vmem:[%s1626 + $0xa1] sm:$0xff]
    %v1749 = vld [vmem:[%s1626 + $0xb1] sm:$0xff]
    %v1750 = vld [vmem:[%s1626 + $0xc1] sm:$0xff]
    %v1751 = vld [vmem:[%s1626 + $0xd1] sm:$0xff]
    %v1752 = vld [vmem:[%s1626 + $0xe1] sm:$0xff]
    %v1753 = vld [vmem:[%s1626 + $0xf1] sm:$0xff]
    %v1754 = vld [vmem:[%s1626 + $0x101] sm:$0xff]
    %v1755 = vld [vmem:[%s1626 + $0x111] sm:$0xff]
    %v1756 = vld [vmem:[%s1626 + $0x2] sm:$0xff]
    %v1757 = vld [vmem:[%s1626 + $0x12] sm:$0xff]
    %v1758 = vld [vmem:[%s1626 + $0x22] sm:$0xff]
    %v1759 = vld [vmem:[%s1626 + $0x32] sm:$0xff]
    %v1760 = vld [vmem:[%s1626 + $0x42] sm:$0xff]
    %v1761 = vld [vmem:[%s1626 + $0x52] sm:$0xff]
    %v1762 = vld [vmem:[%s1626 + $0x62] sm:$0xff]
    %v1763 = vld [vmem:[%s1626 + $0x72] sm:$0xff]
    %v1764 = vld [vmem:[%s1626 + $0xa2] sm:$0xff]
    %v1765 = vld [vmem:[%s1626 + $0xb2] sm:$0xff]
    %v1766 = vld [vmem:[%s1626 + $0xc2] sm:$0xff]
    %v1767 = vld [vmem:[%s1626 + $0xd2] sm:$0xff]
    %v1768 = vld [vmem:[%s1626 + $0xe2] sm:$0xff]
    %v1769 = vld [vmem:[%s1626 + $0xf2] sm:$0xff]
    %v1770 = vld [vmem:[%s1626 + $0x102] sm:$0xff]
    %v1771 = vld [vmem:[%s1626 + $0x112] sm:$0xff]
    %s1772 = scalar_lea.vmem [#allocation2], 32
    %v1773 = vld [vmem:[%s1772] sm:$0xff]
    %v1774 = vld [vmem:[%s1772 + $0x10] sm:$0xff]
    %v1775 = vld [vmem:[%s1772 + $0x20] sm:$0xff]
    %v1776 = vld [vmem:[%s1772 + $0x30] sm:$0xff]
    %v1777 = vld [vmem:[%s1772 + $0x40] sm:$0xff]
    %v1778 = vld [vmem:[%s1772 + $0x50] sm:$0xff]
    %v1779 = vld [vmem:[%s1772 + $0x60] sm:$0xff]
    %v1780 = vld [vmem:[%s1772 + $0x70] sm:$0xff]
    %v1781 = vld [vmem:[%s1772 + $0xa0] sm:$0xff]
    %v1782 = vld [vmem:[%s1772 + $0xb0] sm:$0xff]
    %v1783 = vld [vmem:[%s1772 + $0xc0] sm:$0xff]
    %v1784 = vld [vmem:[%s1772 + $0xd0] sm:$0xff]
    %v1785 = vld [vmem:[%s1772 + $0xe0] sm:$0xff]
    %v1786 = vld [vmem:[%s1772 + $0xf0] sm:$0xff]
    %v1787 = vld [vmem:[%s1772 + $0x100] sm:$0xff]
    %v1788 = vld [vmem:[%s1772 + $0x110] sm:$0xff]
    %v1789 = vld [vmem:[%s1772 + $0x1] sm:$0xff]
    %v1790 = vld [vmem:[%s1772 + $0x11] sm:$0xff]
    %v1791 = vld [vmem:[%s1772 + $0x21] sm:$0xff]
    %v1792 = vld [vmem:[%s1772 + $0x31] sm:$0xff]
    %v1793 = vld [vmem:[%s1772 + $0x41] sm:$0xff]
    %v1794 = vld [vmem:[%s1772 + $0x51] sm:$0xff]
    %v1795 = vld [vmem:[%s1772 + $0x61] sm:$0xff]
    %v1796 = vld [vmem:[%s1772 + $0x71] sm:$0xff]
    %v1797 = vld [vmem:[%s1772 + $0xa1] sm:$0xff]
    %v1798 = vld [vmem:[%s1772 + $0xb1] sm:$0xff]
    %v1799 = vld [vmem:[%s1772 + $0xc1] sm:$0xff]
    %v1800 = vld [vmem:[%s1772 + $0xd1] sm:$0xff]
    %v1801 = vld [vmem:[%s1772 + $0xe1] sm:$0xff]
    %v1802 = vld [vmem:[%s1772 + $0xf1] sm:$0xff]
    %v1803 = vld [vmem:[%s1772 + $0x101] sm:$0xff]
    %v1804 = vld [vmem:[%s1772 + $0x111] sm:$0xff]
    %v1805 = vld [vmem:[%s1772 + $0x2] sm:$0xff]
    %v1806 = vld [vmem:[%s1772 + $0x12] sm:$0xff]
    %v1807 = vld [vmem:[%s1772 + $0x22] sm:$0xff]
    %v1808 = vld [vmem:[%s1772 + $0x32] sm:$0xff]
    %v1809 = vld [vmem:[%s1772 + $0x42] sm:$0xff]
    %v1810 = vld [vmem:[%s1772 + $0x52] sm:$0xff]
    %v1811 = vld [vmem:[%s1772 + $0x62] sm:$0xff]
    %v1812 = vld [vmem:[%s1772 + $0x72] sm:$0xff]
    %v1813 = vld [vmem:[%s1772 + $0xa2] sm:$0xff]
    %v1814 = vld [vmem:[%s1772 + $0xb2] sm:$0xff]
    %v1815 = vld [vmem:[%s1772 + $0xc2] sm:$0xff]
    %v1816 = vld [vmem:[%s1772 + $0xd2] sm:$0xff]
    %v1817 = vld [vmem:[%s1772 + $0xe2] sm:$0xff]
    %v1818 = vld [vmem:[%s1772 + $0xf2] sm:$0xff]
    %v1819 = vld [vmem:[%s1772 + $0x102] sm:$0xff]
    %v1820 = vld [vmem:[%s1772 + $0x112] sm:$0xff]
    %1837 = vrot.lane.b32.xlu0 %v1692, 8
    %v1838 = vpop.permute.xlu0 %1837
    %1839 = vrot.lane.b32.xlu0 %v1693, 8
    %v1840 = vpop.permute.xlu0 %1839
    %1841 = vrot.lane.b32.xlu0 %v1694, 8
    %v1842 = vpop.permute.xlu0 %1841
    %1843 = vrot.lane.b32.xlu0 %v1695, 8
    %v1844 = vpop.permute.xlu0 %1843
    %1845 = vrot.lane.b32.xlu0 %v1696, 8
    %v1846 = vpop.permute.xlu0 %1845
    %1847 = vrot.lane.b32.xlu0 %v1697, 8
    %v1848 = vpop.permute.xlu0 %1847
    %1849 = vrot.lane.b32.xlu0 %v1698, 8
    %v1850 = vpop.permute.xlu0 %1849
    %1851 = vrot.lane.b32.xlu0 %v1699, 8
    %v1852 = vpop.permute.xlu0 %1851
    %1853 = vrot.lane.b32.xlu0 %v1700, 8
    %v1854 = vpop.permute.xlu0 %1853
    %1855 = vrot.lane.b32.xlu0 %v1701, 8
    %v1856 = vpop.permute.xlu0 %1855
    %1857 = vrot.lane.b32.xlu0 %v1702, 8
    %v1858 = vpop.permute.xlu0 %1857
    %1859 = vrot.lane.b32.xlu0 %v1703, 8
    %v1860 = vpop.permute.xlu0 %1859
    %1861 = vrot.lane.b32.xlu0 %v1704, 8
    %v1862 = vpop.permute.xlu0 %1861
    %1863 = vrot.lane.b32.xlu0 %v1705, 8
    %v1864 = vpop.permute.xlu0 %1863
    %1865 = vrot.lane.b32.xlu0 %v1706, 8
    %v1866 = vpop.permute.xlu0 %1865
    %1867 = vrot.lane.b32.xlu0 %v1707, 8
    %v1868 = vpop.permute.xlu0 %1867
    %1901 = vrot.lane.b32.xlu0 %v1708, 16
    %v1902 = vpop.permute.xlu0 %1901
    %1903 = vrot.lane.b32.xlu0 %v1709, 16
    %v1904 = vpop.permute.xlu0 %1903
    %1905 = vrot.lane.b32.xlu0 %v1710, 16
    %v1906 = vpop.permute.xlu0 %1905
    %1907 = vrot.lane.b32.xlu0 %v1711, 16
    %v1908 = vpop.permute.xlu0 %1907
    %1909 = vrot.lane.b32.xlu0 %v1712, 16
    %v1910 = vpop.permute.xlu0 %1909
    %1911 = vrot.lane.b32.xlu0 %v1713, 16
    %v1912 = vpop.permute.xlu0 %1911
    %1913 = vrot.lane.b32.xlu0 %v1714, 16
    %v1914 = vpop.permute.xlu0 %1913
    %1915 = vrot.lane.b32.xlu0 %v1715, 16
    %v1916 = vpop.permute.xlu0 %1915
    %1917 = vrot.lane.b32.xlu0 %v1716, 16
    %v1918 = vpop.permute.xlu0 %1917
    %1919 = vrot.lane.b32.xlu0 %v1717, 16
    %v1920 = vpop.permute.xlu0 %1919
    %1921 = vrot.lane.b32.xlu0 %v1718, 16
    %v1922 = vpop.permute.xlu0 %1921
    %1923 = vrot.lane.b32.xlu0 %v1719, 16
    %v1924 = vpop.permute.xlu0 %1923
    %1925 = vrot.lane.b32.xlu0 %v1720, 16
    %v1926 = vpop.permute.xlu0 %1925
    %1927 = vrot.lane.b32.xlu0 %v1721, 16
    %v1928 = vpop.permute.xlu0 %1927
    %1929 = vrot.lane.b32.xlu0 %v1722, 16
    %v1930 = vpop.permute.xlu0 %1929
    %1931 = vrot.lane.b32.xlu0 %v1723, 16
    %v1932 = vpop.permute.xlu0 %1931
    %1965 = vrot.lane.b32.xlu0 %v1724, 24
    %v1966 = vpop.permute.xlu0 %1965
    %1967 = vrot.lane.b32.xlu0 %v1725, 24
    %v1968 = vpop.permute.xlu0 %1967
    %1969 = vrot.lane.b32.xlu0 %v1726, 24
    %v1970 = vpop.permute.xlu0 %1969
    %1971 = vrot.lane.b32.xlu0 %v1727, 24
    %v1972 = vpop.permute.xlu0 %1971
    %1973 = vrot.lane.b32.xlu0 %v1728, 24
    %v1974 = vpop.permute.xlu0 %1973
    %1975 = vrot.lane.b32.xlu0 %v1729, 24
    %v1976 = vpop.permute.xlu0 %1975
    %1977 = vrot.lane.b32.xlu0 %v1730, 24
    %v1978 = vpop.permute.xlu0 %1977
    %1979 = vrot.lane.b32.xlu0 %v1731, 24
    %v1980 = vpop.permute.xlu0 %1979
    %1981 = vrot.lane.b32.xlu0 %v1732, 24
    %v1982 = vpop.permute.xlu0 %1981
    %1983 = vrot.lane.b32.xlu0 %v1733, 24
    %v1984 = vpop.permute.xlu0 %1983
    %1985 = vrot.lane.b32.xlu0 %v1734, 24
    %v1986 = vpop.permute.xlu0 %1985
    %1987 = vrot.lane.b32.xlu0 %v1735, 24
    %v1988 = vpop.permute.xlu0 %1987
    %1989 = vrot.lane.b32.xlu0 %v1736, 24
    %v1990 = vpop.permute.xlu0 %1989
    %1991 = vrot.lane.b32.xlu0 %v1737, 24
    %v1992 = vpop.permute.xlu0 %1991
    %1993 = vrot.lane.b32.xlu0 %v1738, 24
    %v1994 = vpop.permute.xlu0 %1993
    %1995 = vrot.lane.b32.xlu0 %v1739, 24
    %v1996 = vpop.permute.xlu0 %1995
    %2029 = vrot.lane.b32.xlu0 %v1740, 32
    %v2030 = vpop.permute.xlu0 %2029
    %2031 = vrot.lane.b32.xlu0 %v1741, 32
    %v2032 = vpop.permute.xlu0 %2031
    %2033 = vrot.lane.b32.xlu0 %v1742, 32
    %v2034 = vpop.permute.xlu0 %2033
    %2035 = vrot.lane.b32.xlu0 %v1743, 32
    %v2036 = vpop.permute.xlu0 %2035
    %2037 = vrot.lane.b32.xlu0 %v1744, 32
    %v2038 = vpop.permute.xlu0 %2037
    %2039 = vrot.lane.b32.xlu0 %v1745, 32
    %v2040 = vpop.permute.xlu0 %2039
    %2041 = vrot.lane.b32.xlu0 %v1746, 32
    %v2042 = vpop.permute.xlu0 %2041
    %2043 = vrot.lane.b32.xlu0 %v1747, 32
    %v2044 = vpop.permute.xlu0 %2043
    %2045 = vrot.lane.b32.xlu0 %v1748, 32
    %v2046 = vpop.permute.xlu0 %2045
    %2047 = vrot.lane.b32.xlu0 %v1749, 32
    %v2048 = vpop.permute.xlu0 %2047
    %2049 = vrot.lane.b32.xlu0 %v1750, 32
    %v2050 = vpop.permute.xlu0 %2049
    %2051 = vrot.lane.b32.xlu0 %v1751, 32
    %v2052 = vpop.permute.xlu0 %2051
    %2053 = vrot.lane.b32.xlu0 %v1752, 32
    %v2054 = vpop.permute.xlu0 %2053
    %2055 = vrot.lane.b32.xlu0 %v1753, 32
    %v2056 = vpop.permute.xlu0 %2055
    %2057 = vrot.lane.b32.xlu0 %v1754, 32
    %v2058 = vpop.permute.xlu0 %2057
    %2059 = vrot.lane.b32.xlu0 %v1755, 32
    %v2060 = vpop.permute.xlu0 %2059
    %2093 = vrot.lane.b32.xlu0 %v1756, 40
    %v2094 = vpop.permute.xlu0 %2093
    %2095 = vrot.lane.b32.xlu0 %v1757, 40
    %v2096 = vpop.permute.xlu0 %2095
    %2097 = vrot.lane.b32.xlu0 %v1758, 40
    %v2098 = vpop.permute.xlu0 %2097
    %2099 = vrot.lane.b32.xlu0 %v1759, 40
    %v2100 = vpop.permute.xlu0 %2099
    %2101 = vrot.lane.b32.xlu0 %v1760, 40
    %v2102 = vpop.permute.xlu0 %2101
    %2103 = vrot.lane.b32.xlu0 %v1761, 40
    %v2104 = vpop.permute.xlu0 %2103
    %2105 = vrot.lane.b32.xlu0 %v1762, 40
    %v2106 = vpop.permute.xlu0 %2105
    %2107 = vrot.lane.b32.xlu0 %v1763, 40
    %v2108 = vpop.permute.xlu0 %2107
    %2109 = vrot.lane.b32.xlu0 %v1764, 40
    %v2110 = vpop.permute.xlu0 %2109
    %2111 = vrot.lane.b32.xlu0 %v1765, 40
    %v2112 = vpop.permute.xlu0 %2111
    %2113 = vrot.lane.b32.xlu0 %v1766, 40
    %v2114 = vpop.permute.xlu0 %2113
    %2115 = vrot.lane.b32.xlu0 %v1767, 40
    %v2116 = vpop.permute.xlu0 %2115
    %2117 = vrot.lane.b32.xlu0 %v1768, 40
    %v2118 = vpop.permute.xlu0 %2117
    %2119 = vrot.lane.b32.xlu0 %v1769, 40
    %v2120 = vpop.permute.xlu0 %2119
    %2121 = vrot.lane.b32.xlu0 %v1770, 40
    %v2122 = vpop.permute.xlu0 %2121
    %2123 = vrot.lane.b32.xlu0 %v1771, 40
    %v2124 = vpop.permute.xlu0 %2123
    %2157 = vrot.lane.b32.xlu0 %v1773, 48
    %v2158 = vpop.permute.xlu0 %2157
    %2159 = vrot.lane.b32.xlu0 %v1774, 48
    %v2160 = vpop.permute.xlu0 %2159
    %2161 = vrot.lane.b32.xlu0 %v1775, 48
    %v2162 = vpop.permute.xlu0 %2161
    %2163 = vrot.lane.b32.xlu0 %v1776, 48
    %v2164 = vpop.permute.xlu0 %2163
    %2165 = vrot.lane.b32.xlu0 %v1777, 48
    %v2166 = vpop.permute.xlu0 %2165
    %2167 = vrot.lane.b32.xlu0 %v1778, 48
    %v2168 = vpop.permute.xlu0 %2167
    %2169 = vrot.lane.b32.xlu0 %v1779, 48
    %v2170 = vpop.permute.xlu0 %2169
    %2171 = vrot.lane.b32.xlu0 %v1780, 48
    %v2172 = vpop.permute.xlu0 %2171
    %2173 = vrot.lane.b32.xlu0 %v1781, 48
    %v2174 = vpop.permute.xlu0 %2173
    %2175 = vrot.lane.b32.xlu0 %v1782, 48
    %v2176 = vpop.permute.xlu0 %2175
    %2177 = vrot.lane.b32.xlu0 %v1783, 48
    %v2178 = vpop.permute.xlu0 %2177
    %2179 = vrot.lane.b32.xlu0 %v1784, 48
    %v2180 = vpop.permute.xlu0 %2179
    %2181 = vrot.lane.b32.xlu0 %v1785, 48
    %v2182 = vpop.permute.xlu0 %2181
    %2183 = vrot.lane.b32.xlu0 %v1786, 48
    %v2184 = vpop.permute.xlu0 %2183
    %2185 = vrot.lane.b32.xlu0 %v1787, 48
    %v2186 = vpop.permute.xlu0 %2185
    %2187 = vrot.lane.b32.xlu0 %v1788, 48
    %v2188 = vpop.permute.xlu0 %2187
    %2221 = vrot.lane.b32.xlu0 %v1789, 56
    %v2222 = vpop.permute.xlu0 %2221
    %2223 = vrot.lane.b32.xlu0 %v1790, 56
    %v2224 = vpop.permute.xlu0 %2223
    %2225 = vrot.lane.b32.xlu0 %v1791, 56
    %v2226 = vpop.permute.xlu0 %2225
    %2227 = vrot.lane.b32.xlu0 %v1792, 56
    %v2228 = vpop.permute.xlu0 %2227
    %2229 = vrot.lane.b32.xlu0 %v1793, 56
    %v2230 = vpop.permute.xlu0 %2229
    %2231 = vrot.lane.b32.xlu0 %v1794, 56
    %v2232 = vpop.permute.xlu0 %2231
    %2233 = vrot.lane.b32.xlu0 %v1795, 56
    %v2234 = vpop.permute.xlu0 %2233
    %2235 = vrot.lane.b32.xlu0 %v1796, 56
    %v2236 = vpop.permute.xlu0 %2235
    %2237 = vrot.lane.b32.xlu0 %v1797, 56
    %v2238 = vpop.permute.xlu0 %2237
    %2239 = vrot.lane.b32.xlu0 %v1798, 56
    %v2240 = vpop.permute.xlu0 %2239
    %2241 = vrot.lane.b32.xlu0 %v1799, 56
    %v2242 = vpop.permute.xlu0 %2241
    %2243 = vrot.lane.b32.xlu0 %v1800, 56
    %v2244 = vpop.permute.xlu0 %2243
    %2245 = vrot.lane.b32.xlu0 %v1801, 56
    %v2246 = vpop.permute.xlu0 %2245
    %2247 = vrot.lane.b32.xlu0 %v1802, 56
    %v2248 = vpop.permute.xlu0 %2247
    %2249 = vrot.lane.b32.xlu0 %v1803, 56
    %v2250 = vpop.permute.xlu0 %2249
    %2251 = vrot.lane.b32.xlu0 %v1804, 56
    %v2252 = vpop.permute.xlu0 %2251
    %2285 = vrot.lane.b32.xlu0 %v1805, 64
    %v2286 = vpop.permute.xlu0 %2285
    %2287 = vrot.lane.b32.xlu0 %v1806, 64
    %v2288 = vpop.permute.xlu0 %2287
    %2289 = vrot.lane.b32.xlu0 %v1807, 64
    %v2290 = vpop.permute.xlu0 %2289
    %2291 = vrot.lane.b32.xlu0 %v1808, 64
    %v2292 = vpop.permute.xlu0 %2291
    %2293 = vrot.lane.b32.xlu0 %v1809, 64
    %v2294 = vpop.permute.xlu0 %2293
    %2295 = vrot.lane.b32.xlu0 %v1810, 64
    %v2296 = vpop.permute.xlu0 %2295
    %2297 = vrot.lane.b32.xlu0 %v1811, 64
    %v2298 = vpop.permute.xlu0 %2297
    %2299 = vrot.lane.b32.xlu0 %v1812, 64
    %v2300 = vpop.permute.xlu0 %2299
    %2301 = vrot.lane.b32.xlu0 %v1813, 64
    %v2302 = vpop.permute.xlu0 %2301
    %2303 = vrot.lane.b32.xlu0 %v1814, 64
    %v2304 = vpop.permute.xlu0 %2303
    %2305 = vrot.lane.b32.xlu0 %v1815, 64
    %v2306 = vpop.permute.xlu0 %2305
    %2307 = vrot.lane.b32.xlu0 %v1816, 64
    %v2308 = vpop.permute.xlu0 %2307
    %2309 = vrot.lane.b32.xlu0 %v1817, 64
    %v2310 = vpop.permute.xlu0 %2309
    %2311 = vrot.lane.b32.xlu0 %v1818, 64
    %v2312 = vpop.permute.xlu0 %2311
    %2313 = vrot.lane.b32.xlu0 %v1819, 64
    %v2314 = vpop.permute.xlu0 %2313
    %2315 = vrot.lane.b32.xlu0 %v1820, 64
    %v2316 = vpop.permute.xlu0 %2315
    %v2333 = vsel %vm1042, %v1676, %v1838
    %v2334 = vsel %vm1042, %v1677, %v1840
    %v2335 = vsel %vm1042, %v1678, %v1842
    %v2336 = vsel %vm1042, %v1679, %v1844
    %v2337 = vsel %vm1042, %v1680, %v1846
    %v2338 = vsel %vm1042, %v1681, %v1848
    %v2339 = vsel %vm1042, %v1682, %v1850
    %v2340 = vsel %vm1042, %v1683, %v1852
    %v2341 = vsel %vm1042, %v1684, %v1854
    %v2342 = vsel %vm1042, %v1685, %v1856
    %v2343 = vsel %vm1042, %v1686, %v1858
    %v2344 = vsel %vm1042, %v1687, %v1860
    %v2345 = vsel %vm1042, %v1688, %v1862
    %v2346 = vsel %vm1042, %v1689, %v1864
    %v2347 = vsel %vm1042, %v1690, %v1866
    %v2348 = vsel %vm1042, %v1691, %v1868
    %v2349 = vsel %vm1108, %v2333, %v1902
    %v2350 = vsel %vm1108, %v2334, %v1904
    %v2351 = vsel %vm1108, %v2335, %v1906
    %v2352 = vsel %vm1108, %v2336, %v1908
    %v2353 = vsel %vm1108, %v2337, %v1910
    %v2354 = vsel %vm1108, %v2338, %v1912
    %v2355 = vsel %vm1108, %v2339, %v1914
    %v2356 = vsel %vm1108, %v2340, %v1916
    %v2357 = vsel %vm1108, %v2341, %v1918
    %v2358 = vsel %vm1108, %v2342, %v1920
    %v2359 = vsel %vm1108, %v2343, %v1922
    %v2360 = vsel %vm1108, %v2344, %v1924
    %v2361 = vsel %vm1108, %v2345, %v1926
    %v2362 = vsel %vm1108, %v2346, %v1928
    %v2363 = vsel %vm1108, %v2347, %v1930
    %v2364 = vsel %vm1108, %v2348, %v1932
    %v2365 = vsel %vm1158, %v2349, %v1966
    %v2366 = vsel %vm1158, %v2350, %v1968
    %v2367 = vsel %vm1158, %v2351, %v1970
    %v2368 = vsel %vm1158, %v2352, %v1972
    %v2369 = vsel %vm1158, %v2353, %v1974
    %v2370 = vsel %vm1158, %v2354, %v1976
    %v2371 = vsel %vm1158, %v2355, %v1978
    %v2372 = vsel %vm1158, %v2356, %v1980
    %v2373 = vsel %vm1158, %v2357, %v1982
    %v2374 = vsel %vm1158, %v2358, %v1984
    %v2375 = vsel %vm1158, %v2359, %v1986
    %v2376 = vsel %vm1158, %v2360, %v1988
    %v2377 = vsel %vm1158, %v2361, %v1990
    %v2378 = vsel %vm1158, %v2362, %v1992
    %v2379 = vsel %vm1158, %v2363, %v1994
    %v2380 = vsel %vm1158, %v2364, %v1996
    %v2381 = vsel %vm1208, %v2365, %v2030
    %v2382 = vsel %vm1208, %v2366, %v2032
    %v2383 = vsel %vm1208, %v2367, %v2034
    %v2384 = vsel %vm1208, %v2368, %v2036
    %v2385 = vsel %vm1208, %v2369, %v2038
    %v2386 = vsel %vm1208, %v2370, %v2040
    %v2387 = vsel %vm1208, %v2371, %v2042
    %v2388 = vsel %vm1208, %v2372, %v2044
    %v2389 = vsel %vm1208, %v2373, %v2046
    %v2390 = vsel %vm1208, %v2374, %v2048
    %v2391 = vsel %vm1208, %v2375, %v2050
    %v2392 = vsel %vm1208, %v2376, %v2052
    %v2393 = vsel %vm1208, %v2377, %v2054
    %v2394 = vsel %vm1208, %v2378, %v2056
    %v2395 = vsel %vm1208, %v2379, %v2058
    %v2396 = vsel %vm1208, %v2380, %v2060
    %vm2397 = vcmask 326656
    %v2398 = vsel %vm2397, %v2381, %v2094
    %v2399 = vsel %vm2397, %v2382, %v2096
    %v2400 = vsel %vm2397, %v2383, %v2098
    %v2401 = vsel %vm2397, %v2384, %v2100
    %v2402 = vsel %vm2397, %v2385, %v2102
    %v2403 = vsel %vm2397, %v2386, %v2104
    %v2404 = vsel %vm2397, %v2387, %v2106
    %v2405 = vsel %vm2397, %v2388, %v2108
    %v2406 = vsel %vm2397, %v2389, %v2110
    %v2407 = vsel %vm2397, %v2390, %v2112
    %v2408 = vsel %vm2397, %v2391, %v2114
    %v2409 = vsel %vm2397, %v2392, %v2116
    %v2410 = vsel %vm2397, %v2393, %v2118
    %v2411 = vsel %vm2397, %v2394, %v2120
    %v2412 = vsel %vm2397, %v2395, %v2122
    %v2413 = vsel %vm2397, %v2396, %v2124
    %vm2414 = vcmask 392192
    %v2415 = vsel %vm2414, %v2398, %v2158
    %v2416 = vsel %vm2414, %v2399, %v2160
    %v2417 = vsel %vm2414, %v2400, %v2162
    %v2418 = vsel %vm2414, %v2401, %v2164
    %v2419 = vsel %vm2414, %v2402, %v2166
    %v2420 = vsel %vm2414, %v2403, %v2168
    %v2421 = vsel %vm2414, %v2404, %v2170
    %v2422 = vsel %vm2414, %v2405, %v2172
    %v2423 = vsel %vm2414, %v2406, %v2174
    %v2424 = vsel %vm2414, %v2407, %v2176
    %v2425 = vsel %vm2414, %v2408, %v2178
    %v2426 = vsel %vm2414, %v2409, %v2180
    %v2427 = vsel %vm2414, %v2410, %v2182
    %v2428 = vsel %vm2414, %v2411, %v2184
    %v2429 = vsel %vm2414, %v2412, %v2186
    %v2430 = vsel %vm2414, %v2413, %v2188
    %vm2431 = vcmask 457728
    %v2432 = vsel %vm2431, %v2415, %v2222
    %v2433 = vsel %vm2431, %v2416, %v2224
    %v2434 = vsel %vm2431, %v2417, %v2226
    %v2435 = vsel %vm2431, %v2418, %v2228
    %v2436 = vsel %vm2431, %v2419, %v2230
    %v2437 = vsel %vm2431, %v2420, %v2232
    %v2438 = vsel %vm2431, %v2421, %v2234
    %v2439 = vsel %vm2431, %v2422, %v2236
    %v2440 = vsel %vm2431, %v2423, %v2238
    %v2441 = vsel %vm2431, %v2424, %v2240
    %v2442 = vsel %vm2431, %v2425, %v2242
    %v2443 = vsel %vm2431, %v2426, %v2244
    %v2444 = vsel %vm2431, %v2427, %v2246
    %v2445 = vsel %vm2431, %v2428, %v2248
    %v2446 = vsel %vm2431, %v2429, %v2250
    %v2447 = vsel %vm2431, %v2430, %v2252
    %vm2448 = vcmask 523264
    %v2449 = vsel %vm2448, %v2432, %v2286
    %v2450 = vsel %vm2448, %v2433, %v2288
    %v2451 = vsel %vm2448, %v2434, %v2290
    %v2452 = vsel %vm2448, %v2435, %v2292
    %v2453 = vsel %vm2448, %v2436, %v2294
    %v2454 = vsel %vm2448, %v2437, %v2296
    %v2455 = vsel %vm2448, %v2438, %v2298
    %v2456 = vsel %vm2448, %v2439, %v2300
    %v2457 = vsel %vm2448, %v2440, %v2302
    %v2458 = vsel %vm2448, %v2441, %v2304
    %v2459 = vsel %vm2448, %v2442, %v2306
    %v2460 = vsel %vm2448, %v2443, %v2308
    %v2461 = vsel %vm2448, %v2444, %v2310
    %v2462 = vsel %vm2448, %v2445, %v2312
    %v2463 = vsel %vm2448, %v2446, %v2314
    %v2464 = vsel %vm2448, %v2447, %v2316
    %v2465 = vpack.c.bf16 %v2450, %v2449
    %v2466 = vpack.c.bf16 %v2452, %v2451
    %v2467 = vpack.c.bf16 %v2454, %v2453
    %v2468 = vpack.c.bf16 %v2456, %v2455
    %v2469 = vpack.c.bf16 %v2458, %v2457
    %v2470 = vpack.c.bf16 %v2460, %v2459
    %v2471 = vpack.c.bf16 %v2462, %v2461
    %v2472 = vpack.c.bf16 %v2464, %v2463
    %v2473 = vld [vmem:[#allocation8] sm:$0xf]
    %v2474 = vld [vmem:[#allocation8 + $0x4] sm:$0xf]
    %v2475 = vld [vmem:[#allocation8 + $0x8] sm:$0xf]
    %v2476 = vld [vmem:[#allocation8 + $0xc] sm:$0xf]
    %v2477 = vld [vmem:[#allocation8 + $0x10] sm:$0xf]
    %v2478 = vld [vmem:[#allocation8 + $0x14] sm:$0xf]
    %v2479 = vld [vmem:[#allocation8 + $0x18] sm:$0xf]
    %v2480 = vld [vmem:[#allocation8 + $0x1c] sm:$0xf]
    %v2481 = vld [vmem:[#allocation8 + $0x20] sm:$0xf]
    %v2491 = vunpack.c.l.b16 %v2473
    %v2492 = vunpack.c.l.b16 %v2474
    %v2493 = vunpack.c.l.b16 %v2475
    %v2494 = vunpack.c.l.b16 %v2476
    %v2495 = vunpack.c.l.b16 %v2477
    %v2496 = vunpack.c.l.b16 %v2478
    %v2497 = vunpack.c.l.b16 %v2479
    %v2498 = vunpack.c.l.b16 %v2480
    %v2499 = vunpack.c.l.b16 %v2481
    %v2500 = vpack.c.b16 %v2492, %v2491
    %v2501 = vpack.c.b16 %v2494, %v2493
    %v2502 = vpack.c.b16 %v2496, %v2495
    %v2503 = vpack.c.b16 %v2498, %v2497
    %v2504 = vpack.c.b16 %v2499, %v2499
    %vm2509 = vcmask 588800
    %v2511 = vsel %vm2509, %v2465, 0
    %v2514 = vsel %vm2509, %v2466, 0
    %v2517 = vsel %vm2509, %v2467, 0
    %v2520 = vsel %vm2509, %v2468, 0
    %v2523 = vsel %vm2509, %v2469, 0
    %v2526 = vsel %vm2509, %v2470, 0
    %v2529 = vsel %vm2509, %v2471, 0
    %v2532 = vsel %vm2509, %v2472, 0
    %vm2534 = vcmask 1043456
    %v2536 = vsel %vm2534, %v2504, 0
    %2538 = vmatprep.subr.bf16.mxu0 0
    %2539 = vmatpush1.bf16.msra.mxu0 %v2500
    %2540 = vmatprep.subr.bf16.mxu0 0
    %2541 = vmatpush1.bf16.msra.mxu0 %v2501
    %2542 = vmatprep.subr.bf16.mxu0 0
    %2543 = vmatpush1.bf16.msra.mxu0 %v2502
    %2544 = vmatprep.subr.bf16.mxu0 0
    %2545 = vmatpush1.bf16.msra.mxu0 %v2503
    %2546 = vmatprep.subr.bf16.mxu0 0
    %2547 = vmatpush1.bf16.msra.mxu0 %v2536
    %2548 = vmatprep.subr.bf16.mxu0 0
    %2549 = vmatpush1.bf16.msra.mxu0 0
    %2550 = vmatprep.subr.bf16.mxu0 0
    %2551 = vmatpush1.bf16.msra.mxu0 0
    %2552 = vmatprep.subr.bf16.mxu0 0
    %2553 = vmatpush1.bf16.msra.mxu0 0
    %2554 = vmatprep.subr.bf16.mxu0 0
    %2555 = vmatpush1.bf16.msra.mxu0 0
    %2556 = vmatprep.subr.bf16.mxu0 0
    %2557 = vmatpush1.bf16.msra.mxu0 0
    %2558 = vmatprep.subr.bf16.mxu0 0
    %2559 = vmatpush1.bf16.msra.mxu0 0
    %2560 = vmatprep.subr.bf16.mxu0 0
    %2561 = vmatpush1.bf16.msra.mxu0 0
    %2562 = vmatprep.subr.bf16.mxu0 0
    %2563 = vmatpush1.bf16.msra.mxu0 0
    %2564 = vmatprep.subr.bf16.mxu0 0
    %2565 = vmatpush1.bf16.msra.mxu0 0
    %2566 = vmatprep.subr.bf16.mxu0 0
    %2567 = vmatpush1.bf16.msra.mxu0 0
    %2568 = vmatprep.subr.bf16.mxu0 0
    %2569 = vmatpush1.bf16.msra.mxu0 0
    %2570 = vmatprep.mubr.bf16.mxu0 0
    %2571 = vmatmul.mubr.bf16.gmra.mrb[0].mxu0 %v2511
    %v2572 = vpop.f32.mrb[0].mxu0
    %v2573 = vadd.f32 0.0, %v2572
    %v2574 = vpop.f32.mrb[0].mxu0
    %v2575 = vpop.f32.mrb[0].mxu0
    %v2576 = vadd.f32 0.0, %v2575
    %v2577 = vpop.f32.mrb[0].mxu0
    %2578 = vmatprep.mubr.bf16.mxu0 0
    %2579 = vmatmul.mubr.bf16.gmra.mrb[0].mxu0 %v2514
    %v2580 = vpop.f32.mrb[0].mxu0
    %v2581 = vadd.f32 0.0, %v2580
    %v2582 = vpop.f32.mrb[0].mxu0
    %v2583 = vpop.f32.mrb[0].mxu0
    %v2584 = vadd.f32 0.0, %v2583
    %v2585 = vpop.f32.mrb[0].mxu0
    %2586 = vmatprep.mubr.bf16.mxu0 0
    %2587 = vmatmul.mubr.bf16.gmra.mrb[0].mxu0 %v2517
    %v2588 = vpop.f32.mrb[0].mxu0
    %v2589 = vadd.f32 0.0, %v2588
    %v2590 = vpop.f32.mrb[0].mxu0
    %v2591 = vpop.f32.mrb[0].mxu0
    %v2592 = vadd.f32 0.0, %v2591
    %v2593 = vpop.f32.mrb[0].mxu0
    %2594 = vmatprep.mubr.bf16.mxu0 0
    %2595 = vmatmul.mubr.bf16.gmra.mrb[0].mxu0 %v2520
    %v2596 = vpop.f32.mrb[0].mxu0
    %v2597 = vadd.f32 0.0, %v2596
    %v2598 = vpop.f32.mrb[0].mxu0
    %v2599 = vpop.f32.mrb[0].mxu0
    %v2600 = vadd.f32 0.0, %v2599
    %v2601 = vpop.f32.mrb[0].mxu0
    %2602 = vmatprep.mubr.bf16.mxu0 0
    %2603 = vmatmul.mubr.bf16.gmra.mrb[0].mxu0 %v2523
    %v2604 = vpop.f32.mrb[0].mxu0
    %v2605 = vadd.f32 0.0, %v2604
    %v2606 = vpop.f32.mrb[0].mxu0
    %v2607 = vpop.f32.mrb[0].mxu0
    %v2608 = vadd.f32 0.0, %v2607
    %v2609 = vpop.f32.mrb[0].mxu0
    %2610 = vmatprep.mubr.bf16.mxu0 0
    %2611 = vmatmul.mubr.bf16.gmra.mrb[0].mxu0 %v2526
    %v2612 = vpop.f32.mrb[0].mxu0
    %v2613 = vadd.f32 0.0, %v2612
    %v2614 = vpop.f32.mrb[0].mxu0
    %v2615 = vpop.f32.mrb[0].mxu0
    %v2616 = vadd.f32 0.0, %v2615
    %v2617 = vpop.f32.mrb[0].mxu0
    %2618 = vmatprep.mubr.bf16.mxu0 0
    %2619 = vmatmul.mubr.bf16.gmra.mrb[0].mxu0 %v2529
    %v2620 = vpop.f32.mrb[0].mxu0
    %v2621 = vadd.f32 0.0, %v2620
    %v2622 = vpop.f32.mrb[0].mxu0
    %v2623 = vpop.f32.mrb[0].mxu0
    %v2624 = vadd.f32 0.0, %v2623
    %v2625 = vpop.f32.mrb[0].mxu0
    %2626 = vmatprep.mubr.bf16.mxu0 0
    %2627 = vmatmul.mubr.bf16.gmra.mrb[0].mxu0 %v2532
    %v2628 = vpop.f32.mrb[0].mxu0
    %v2629 = vadd.f32 0.0, %v2628
    %v2630 = vpop.f32.mrb[0].mxu0
    %v2631 = vpop.f32.mrb[0].mxu0
    %v2632 = vadd.f32 0.0, %v2631
    %v2633 = vpop.f32.mrb[0].mxu0
    %2634 = vdwg.mxu0
    %v2635 = vsel %vm1042, %v2573, 0.0
    %v2636 = vsel %vm1042, %v2576, 0.0
    %v2637 = vadd.f32 %v2635, %v2636
    %v2638 = vsel %vm1042, %v2581, 0.0
    %v2639 = vadd.f32 %v2637, %v2638
    %v2640 = vsel %vm1042, %v2584, 0.0
    %v2641 = vadd.f32 %v2639, %v2640
    %v2642 = vsel %vm1042, %v2589, 0.0
    %v2643 = vadd.f32 %v2641, %v2642
    %v2644 = vsel %vm1042, %v2592, 0.0
    %v2645 = vadd.f32 %v2643, %v2644
    %v2646 = vsel %vm1042, %v2597, 0.0
    %v2647 = vadd.f32 %v2645, %v2646
    %v2648 = vsel %vm1042, %v2600, 0.0
    %v2649 = vadd.f32 %v2647, %v2648
    %v2650 = vsel %vm1042, %v2605, 0.0
    %v2651 = vadd.f32 %v2649, %v2650
    %v2652 = vsel %vm1042, %v2608, 0.0
    %v2653 = vadd.f32 %v2651, %v2652
    %v2654 = vsel %vm1042, %v2613, 0.0
    %v2655 = vadd.f32 %v2653, %v2654
    %v2656 = vsel %vm1042, %v2616, 0.0
    %v2657 = vadd.f32 %v2655, %v2656
    %v2658 = vsel %vm1042, %v2621, 0.0
    %v2659 = vadd.f32 %v2657, %v2658
    %v2660 = vsel %vm1042, %v2624, 0.0
    %v2661 = vadd.f32 %v2659, %v2660
    %v2662 = vsel %vm1042, %v2629, 0.0
    %v2663 = vadd.f32 %v2661, %v2662
    %v2664 = vsel %vm1042, %v2632, 0.0
    %v2665 = vadd.f32 %v2663, %v2664
    %v2666 = vrot.slane %v2665, 4
    %v2667 = vadd.f32 %v2665, %v2666
    %v2668 = vrot.slane %v2667, 2
    %v2669 = vadd.f32 %v2667, %v2668
    %v2670 = vrot.slane %v2669, 1
    %v2671 = vadd.f32 %v2669, %v2670
    %v2672 = vmul.f32 %v2671, %v1464
    %v2673 = vsub.f32 %v2573, %v2672
    %v2674 = vsub.f32 %v2576, %v2672
    %v2675 = vsub.f32 %v2581, %v2672
    %v2676 = vsub.f32 %v2584, %v2672
    %v2677 = vsub.f32 %v2589, %v2672
    %v2678 = vsub.f32 %v2592, %v2672
    %v2679 = vsub.f32 %v2597, %v2672
    %v2680 = vsub.f32 %v2600, %v2672
    %v2681 = vsub.f32 %v2605, %v2672
    %v2682 = vsub.f32 %v2608, %v2672
    %v2683 = vsub.f32 %v2613, %v2672
    %v2684 = vsub.f32 %v2616, %v2672
    %v2685 = vsub.f32 %v2621, %v2672
    %v2686 = vsub.f32 %v2624, %v2672
    %v2687 = vsub.f32 %v2629, %v2672
    %v2688 = vsub.f32 %v2632, %v2672
    %v2689 = vmul.f32 %v2673, %v2673
    %v2690 = vmul.f32 %v2674, %v2674
    %v2691 = vmul.f32 %v2675, %v2675
    %v2692 = vmul.f32 %v2676, %v2676
    %v2693 = vmul.f32 %v2677, %v2677
    %v2694 = vmul.f32 %v2678, %v2678
    %v2695 = vmul.f32 %v2679, %v2679
    %v2696 = vmul.f32 %v2680, %v2680
    %v2697 = vmul.f32 %v2681, %v2681
    %v2698 = vmul.f32 %v2682, %v2682
    %v2699 = vmul.f32 %v2683, %v2683
    %v2700 = vmul.f32 %v2684, %v2684
    %v2701 = vmul.f32 %v2685, %v2685
    %v2702 = vmul.f32 %v2686, %v2686
    %v2703 = vmul.f32 %v2687, %v2687
    %v2704 = vmul.f32 %v2688, %v2688
    %v2705 = vsel %vm1042, %v2689, 0.0
    %v2706 = vsel %vm1042, %v2690, 0.0
    %v2707 = vadd.f32 %v2705, %v2706
    %v2708 = vsel %vm1042, %v2691, 0.0
    %v2709 = vadd.f32 %v2707, %v2708
    %v2710 = vsel %vm1042, %v2692, 0.0
    %v2711 = vadd.f32 %v2709, %v2710
    %v2712 = vsel %vm1042, %v2693, 0.0
    %v2713 = vadd.f32 %v2711, %v2712
    %v2714 = vsel %vm1042, %v2694, 0.0
    %v2715 = vadd.f32 %v2713, %v2714
    %v2716 = vsel %vm1042, %v2695, 0.0
    %v2717 = vadd.f32 %v2715, %v2716
    %v2718 = vsel %vm1042, %v2696, 0.0
    %v2719 = vadd.f32 %v2717, %v2718
    %v2720 = vsel %vm1042, %v2697, 0.0
    %v2721 = vadd.f32 %v2719, %v2720
    %v2722 = vsel %vm1042, %v2698, 0.0
    %v2723 = vadd.f32 %v2721, %v2722
    %v2724 = vsel %vm1042, %v2699, 0.0
    %v2725 = vadd.f32 %v2723, %v2724
    %v2726 = vsel %vm1042, %v2700, 0.0
    %v2727 = vadd.f32 %v2725, %v2726
    %v2728 = vsel %vm1042, %v2701, 0.0
    %v2729 = vadd.f32 %v2727, %v2728
    %v2730 = vsel %vm1042, %v2702, 0.0
    %v2731 = vadd.f32 %v2729, %v2730
    %v2732 = vsel %vm1042, %v2703, 0.0
    %v2733 = vadd.f32 %v2731, %v2732
    %v2734 = vsel %vm1042, %v2704, 0.0
    %v2735 = vadd.f32 %v2733, %v2734
    %v2736 = vrot.slane %v2735, 4
    %v2737 = vadd.f32 %v2735, %v2736
    %v2738 = vrot.slane %v2737, 2
    %v2739 = vadd.f32 %v2737, %v2738
    %v2740 = vrot.slane %v2739, 1
    %v2741 = vadd.f32 %v2739, %v2740
    %v2742 = vmul.f32 %v2741, %v1464
    %v2743 = vadd.f32 %v2742, 1e-05
    %v2744 = vrsqrt.pop %v2743
    %v2745 = vmul.f32 %v2673, %v2744
    %v2746 = vmul.f32 %v2674, %v2744
    %v2747 = vmul.f32 %v2675, %v2744
    %v2748 = vmul.f32 %v2676, %v2744
    %v2749 = vmul.f32 %v2677, %v2744
    %v2750 = vmul.f32 %v2678, %v2744
    %v2751 = vmul.f32 %v2679, %v2744
    %v2752 = vmul.f32 %v2680, %v2744
    %v2753 = vmul.f32 %v2681, %v2744
    %v2754 = vmul.f32 %v2682, %v2744
    %v2755 = vmul.f32 %v2683, %v2744
    %v2756 = vmul.f32 %v2684, %v2744
    %v2757 = vmul.f32 %v2685, %v2744
    %v2758 = vmul.f32 %v2686, %v2744
    %v2759 = vmul.f32 %v2687, %v2744
    %v2760 = vmul.f32 %v2688, %v2744
    %v2761 = vld [vmem:[#allocation12] sm:$0x1]
    %v2763 = vlaneseq
    %v2764 = vshrl.u32 %v2763, 7
    %v2765 = vsub.s32 0, %v2764
    %v2766 = vrot.slane %v2761, %v2765
    %v2768 = vmul.f32 %v2745, %v2766
    %v2769 = vmul.f32 %v2746, %v2766
    %v2770 = vmul.f32 %v2747, %v2766
    %v2771 = vmul.f32 %v2748, %v2766
    %v2772 = vmul.f32 %v2749, %v2766
    %v2773 = vmul.f32 %v2750, %v2766
    %v2774 = vmul.f32 %v2751, %v2766
    %v2775 = vmul.f32 %v2752, %v2766
    %v2776 = vmul.f32 %v2753, %v2766
    %v2777 = vmul.f32 %v2754, %v2766
    %v2778 = vmul.f32 %v2755, %v2766
    %v2779 = vmul.f32 %v2756, %v2766
    %v2780 = vmul.f32 %v2757, %v2766
    %v2781 = vmul.f32 %v2758, %v2766
    %v2782 = vmul.f32 %v2759, %v2766
    %v2783 = vmul.f32 %v2760, %v2766
    %v2784 = vld [vmem:[#allocation14] sm:$0x1]
    %v2786 = vlaneseq
    %v2787 = vshrl.u32 %v2786, 7
    %v2788 = vsub.s32 0, %v2787
    %v2789 = vrot.slane %v2784, %v2788
    %v2791 = vadd.f32 %v2768, %v2789
    %v2792 = vadd.f32 %v2769, %v2789
    %v2793 = vadd.f32 %v2770, %v2789
    %v2794 = vadd.f32 %v2771, %v2789
    %v2795 = vadd.f32 %v2772, %v2789
    %v2796 = vadd.f32 %v2773, %v2789
    %v2797 = vadd.f32 %v2774, %v2789
    %v2798 = vadd.f32 %v2775, %v2789
    %v2799 = vadd.f32 %v2776, %v2789
    %v2800 = vadd.f32 %v2777, %v2789
    %v2801 = vadd.f32 %v2778, %v2789
    %v2802 = vadd.f32 %v2779, %v2789
    %v2803 = vadd.f32 %v2780, %v2789
    %v2804 = vadd.f32 %v2781, %v2789
    %v2805 = vadd.f32 %v2782, %v2789
    %v2806 = vadd.f32 %v2783, %v2789
    %v2807 = vld [vmem:[#allocation15] sm:$0x3]
    %v2808 = vpack.c.b16 %v498, %v497
    %v2809 = vpack.c.b16 %v500, %v499
    %v2810 = vpack.c.b16 %v502, %v501
    %v2811 = vpack.c.b16 %v504, %v503
    %v2812 = vpack.c.b16 %v506, %v505
    %v2813 = vpack.c.b16 %v508, %v507
    %v2814 = vpack.c.b16 %v510, %v509
    %v2815 = vpack.c.b16 %v512, %v511
    %2816 = vrot.lane.b32.xlu0 %v2808, 124
    %v2817 = vpop.permute.xlu0 %2816
    %2818 = vrot.lane.b32.xlu0 %v2809, 124
    %v2819 = vpop.permute.xlu0 %2818
    %2820 = vrot.lane.b32.xlu0 %v2810, 124
    %v2821 = vpop.permute.xlu0 %2820
    %2822 = vrot.lane.b32.xlu0 %v2811, 124
    %v2823 = vpop.permute.xlu0 %2822
    %2824 = vrot.lane.b32.xlu0 %v2812, 124
    %v2825 = vpop.permute.xlu0 %2824
    %2826 = vrot.lane.b32.xlu0 %v2813, 124
    %v2827 = vpop.permute.xlu0 %2826
    %2828 = vrot.lane.b32.xlu0 %v2814, 124
    %v2829 = vpop.permute.xlu0 %2828
    %2830 = vrot.lane.b32.xlu0 %v2815, 124
    %v2831 = vpop.permute.xlu0 %2830
    %v2833 = vsel %vm1025, %v2817, 0
    %v2836 = vsel %vm1025, %v2819, 0
    %v2839 = vsel %vm1025, %v2821, 0
    %v2842 = vsel %vm1025, %v2823, 0
    %v2845 = vsel %vm1025, %v2825, 0
    %v2848 = vsel %vm1025, %v2827, 0
    %v2851 = vsel %vm1025, %v2829, 0
    %v2854 = vsel %vm1025, %v2831, 0
    %v2857 = vsel %vm1326, %v2807, 0
    %2859 = vmatprep.subr.bf16.mxu0 0
    %2860 = vmatpush1.bf16.msra.mxu0 %v2857
    %2861 = vmatprep.subr.bf16.mxu0 0
    %2862 = vmatpush1.bf16.msra.mxu0 0
    %2863 = vmatprep.subr.bf16.mxu0 0
    %2864 = vmatpush1.bf16.msra.mxu0 0
    %2865 = vmatprep.subr.bf16.mxu0 0
    %2866 = vmatpush1.bf16.msra.mxu0 0
    %2867 = vmatprep.subr.bf16.mxu0 0
    %2868 = vmatpush1.bf16.msra.mxu0 0
    %2869 = vmatprep.subr.bf16.mxu0 0
    %2870 = vmatpush1.bf16.msra.mxu0 0
    %2871 = vmatprep.subr.bf16.mxu0 0
    %2872 = vmatpush1.bf16.msra.mxu0 0
    %2873 = vmatprep.subr.bf16.mxu0 0
    %2874 = vmatpush1.bf16.msra.mxu0 0
    %2875 = vmatprep.subr.bf16.mxu0 0
    %2876 = vmatpush1.bf16.msra.mxu0 0
    %2877 = vmatprep.subr.bf16.mxu0 0
    %2878 = vmatpush1.bf16.msra.mxu0 0
    %2879 = vmatprep.subr.bf16.mxu0 0
    %2880 = vmatpush1.bf16.msra.mxu0 0
    %2881 = vmatprep.subr.bf16.mxu0 0
    %2882 = vmatpush1.bf16.msra.mxu0 0
    %2883 = vmatprep.subr.bf16.mxu0 0
    %2884 = vmatpush1.bf16.msra.mxu0 0
    %2885 = vmatprep.subr.bf16.mxu0 0
    %2886 = vmatpush1.bf16.msra.mxu0 0
    %2887 = vmatprep.subr.bf16.mxu0 0
    %2888 = vmatpush1.bf16.msra.mxu0 0
    %2889 = vmatprep.subr.bf16.mxu0 0
    %2890 = vmatpush1.bf16.msra.mxu0 0
    %2891 = vmatprep.mubr.bf16.mxu0 0
    %2892 = vmatmul.mubr.bf16.gmra.mrb[0].mxu0 %v2833
    %v2893 = vpop.f32.mrb[0].mxu0
    %v2894 = vadd.f32 0.0, %v2893
    %v2895 = vpop.f32.mrb[0].mxu0
    %v2896 = vpop.f32.mrb[0].mxu0
    %v2897 = vadd.f32 0.0, %v2896
    %v2898 = vpop.f32.mrb[0].mxu0
    %2899 = vmatprep.mubr.bf16.mxu0 0
    %2900 = vmatmul.mubr.bf16.gmra.mrb[0].mxu0 %v2836
    %v2901 = vpop.f32.mrb[0].mxu0
    %v2902 = vadd.f32 0.0, %v2901
    %v2903 = vpop.f32.mrb[0].mxu0
    %v2904 = vpop.f32.mrb[0].mxu0
    %v2905 = vadd.f32 0.0, %v2904
    %v2906 = vpop.f32.mrb[0].mxu0
    %2907 = vmatprep.mubr.bf16.mxu0 0
    %2908 = vmatmul.mubr.bf16.gmra.mrb[0].mxu0 %v2839
    %v2909 = vpop.f32.mrb[0].mxu0
    %v2910 = vadd.f32 0.0, %v2909
    %v2911 = vpop.f32.mrb[0].mxu0
    %v2912 = vpop.f32.mrb[0].mxu0
    %v2913 = vadd.f32 0.0, %v2912
    %v2914 = vpop.f32.mrb[0].mxu0
    %2915 = vmatprep.mubr.bf16.mxu0 0
    %2916 = vmatmul.mubr.bf16.gmra.mrb[0].mxu0 %v2842
    %v2917 = vpop.f32.mrb[0].mxu0
    %v2918 = vadd.f32 0.0, %v2917
    %v2919 = vpop.f32.mrb[0].mxu0
    %v2920 = vpop.f32.mrb[0].mxu0
    %v2921 = vadd.f32 0.0, %v2920
    %v2922 = vpop.f32.mrb[0].mxu0
    %2923 = vmatprep.mubr.bf16.mxu0 0
    %2924 = vmatmul.mubr.bf16.gmra.mrb[0].mxu0 %v2845
    %v2925 = vpop.f32.mrb[0].mxu0
    %v2926 = vadd.f32 0.0, %v2925
    %v2927 = vpop.f32.mrb[0].mxu0
    %v2928 = vpop.f32.mrb[0].mxu0
    %v2929 = vadd.f32 0.0, %v2928
    %v2930 = vpop.f32.mrb[0].mxu0
    %2931 = vmatprep.mubr.bf16.mxu0 0
    %2932 = vmatmul.mubr.bf16.gmra.mrb[0].mxu0 %v2848
    %v2933 = vpop.f32.mrb[0].mxu0
    %v2934 = vadd.f32 0.0, %v2933
    %v2935 = vpop.f32.mrb[0].mxu0
    %v2936 = vpop.f32.mrb[0].mxu0
    %v2937 = vadd.f32 0.0, %v2936
    %v2938 = vpop.f32.mrb[0].mxu0
    %2939 = vmatprep.mubr.bf16.mxu0 0
    %2940 = vmatmul.mubr.bf16.gmra.mrb[0].mxu0 %v2851
    %v2941 = vpop.f32.mrb[0].mxu0
    %v2942 = vadd.f32 0.0, %v2941
    %v2943 = vpop.f32.mrb[0].mxu0
    %v2944 = vpop.f32.mrb[0].mxu0
    %v2945 = vadd.f32 0.0, %v2944
    %v2946 = vpop.f32.mrb[0].mxu0
    %2947 = vmatprep.mubr.bf16.mxu0 0
    %2948 = vmatmul.mubr.bf16.gmra.mrb[0].mxu0 %v2854
    %v2949 = vpop.f32.mrb[0].mxu0
    %v2950 = vadd.f32 0.0, %v2949
    %v2951 = vpop.f32.mrb[0].mxu0
    %v2952 = vpop.f32.mrb[0].mxu0
    %v2953 = vadd.f32 0.0, %v2952
    %v2954 = vpop.f32.mrb[0].mxu0
    %2955 = vdwg.mxu0
    %v2956 = vsel %vm1042, %v2894, 0.0
    %v2957 = vsel %vm1042, %v2897, 0.0
    %v2958 = vadd.f32 %v2956, %v2957
    %v2959 = vsel %vm1042, %v2902, 0.0
    %v2960 = vadd.f32 %v2958, %v2959
    %v2961 = vsel %vm1042, %v2905, 0.0
    %v2962 = vadd.f32 %v2960, %v2961
    %v2963 = vsel %vm1042, %v2910, 0.0
    %v2964 = vadd.f32 %v2962, %v2963
    %v2965 = vsel %vm1042, %v2913, 0.0
    %v2966 = vadd.f32 %v2964, %v2965
    %v2967 = vsel %vm1042, %v2918, 0.0
    %v2968 = vadd.f32 %v2966, %v2967
    %v2969 = vsel %vm1042, %v2921, 0.0
    %v2970 = vadd.f32 %v2968, %v2969
    %v2971 = vsel %vm1042, %v2926, 0.0
    %v2972 = vadd.f32 %v2970, %v2971
    %v2973 = vsel %vm1042, %v2929, 0.0
    %v2974 = vadd.f32 %v2972, %v2973
    %v2975 = vsel %vm1042, %v2934, 0.0
    %v2976 = vadd.f32 %v2974, %v2975
    %v2977 = vsel %vm1042, %v2937, 0.0
    %v2978 = vadd.f32 %v2976, %v2977
    %v2979 = vsel %vm1042, %v2942, 0.0
    %v2980 = vadd.f32 %v2978, %v2979
    %v2981 = vsel %vm1042, %v2945, 0.0
    %v2982 = vadd.f32 %v2980, %v2981
    %v2983 = vsel %vm1042, %v2950, 0.0
    %v2984 = vadd.f32 %v2982, %v2983
    %v2985 = vsel %vm1042, %v2953, 0.0
    %v2986 = vadd.f32 %v2984, %v2985
    %v2987 = vrot.slane %v2986, 4
    %v2988 = vadd.f32 %v2986, %v2987
    %v2989 = vrot.slane %v2988, 2
    %v2990 = vadd.f32 %v2988, %v2989
    %v2991 = vrot.slane %v2990, 1
    %v2992 = vadd.f32 %v2990, %v2991
    %v2993 = vmul.f32 %v2992, %v1464
    %v2994 = vsub.f32 %v2894, %v2993
    %v2995 = vsub.f32 %v2897, %v2993
    %v2996 = vsub.f32 %v2902, %v2993
    %v2997 = vsub.f32 %v2905, %v2993
    %v2998 = vsub.f32 %v2910, %v2993
    %v2999 = vsub.f32 %v2913, %v2993
    %v3000 = vsub.f32 %v2918, %v2993
    %v3001 = vsub.f32 %v2921, %v2993
    %v3002 = vsub.f32 %v2926, %v2993
    %v3003 = vsub.f32 %v2929, %v2993
    %v3004 = vsub.f32 %v2934, %v2993
    %v3005 = vsub.f32 %v2937, %v2993
    %v3006 = vsub.f32 %v2942, %v2993
    %v3007 = vsub.f32 %v2945, %v2993
    %v3008 = vsub.f32 %v2950, %v2993
    %v3009 = vsub.f32 %v2953, %v2993
    %v3010 = vmul.f32 %v2994, %v2994
    %v3011 = vmul.f32 %v2995, %v2995
    %v3012 = vmul.f32 %v2996, %v2996
    %v3013 = vmul.f32 %v2997, %v2997
    %v3014 = vmul.f32 %v2998, %v2998
    %v3015 = vmul.f32 %v2999, %v2999
    %v3016 = vmul.f32 %v3000, %v3000
    %v3017 = vmul.f32 %v3001, %v3001
    %v3018 = vmul.f32 %v3002, %v3002
    %v3019 = vmul.f32 %v3003, %v3003
    %v3020 = vmul.f32 %v3004, %v3004
    %v3021 = vmul.f32 %v3005, %v3005
    %v3022 = vmul.f32 %v3006, %v3006
    %v3023 = vmul.f32 %v3007, %v3007
    %v3024 = vmul.f32 %v3008, %v3008
    %v3025 = vmul.f32 %v3009, %v3009
    %v3026 = vsel %vm1042, %v3010, 0.0
    %v3027 = vsel %vm1042, %v3011, 0.0
    %v3028 = vadd.f32 %v3026, %v3027
    %v3029 = vsel %vm1042, %v3012, 0.0
    %v3030 = vadd.f32 %v3028, %v3029
    %v3031 = vsel %vm1042, %v3013, 0.0
    %v3032 = vadd.f32 %v3030, %v3031
    %v3033 = vsel %vm1042, %v3014, 0.0
    %v3034 = vadd.f32 %v3032, %v3033
    %v3035 = vsel %vm1042, %v3015, 0.0
    %v3036 = vadd.f32 %v3034, %v3035
    %v3037 = vsel %vm1042, %v3016, 0.0
    %v3038 = vadd.f32 %v3036, %v3037
    %v3039 = vsel %vm1042, %v3017, 0.0
    %v3040 = vadd.f32 %v3038, %v3039
    %v3041 = vsel %vm1042, %v3018, 0.0
    %v3042 = vadd.f32 %v3040, %v3041
    %v3043 = vsel %vm1042, %v3019, 0.0
    %v3044 = vadd.f32 %v3042, %v3043
    %v3045 = vsel %vm1042, %v3020, 0.0
    %v3046 = vadd.f32 %v3044, %v3045
    %v3047 = vsel %vm1042, %v3021, 0.0
    %v3048 = vadd.f32 %v3046, %v3047
    %v3049 = vsel %vm1042, %v3022, 0.0
    %v3050 = vadd.f32 %v3048, %v3049
    %v3051 = vsel %vm1042, %v3023, 0.0
    %v3052 = vadd.f32 %v3050, %v3051
    %v3053 = vsel %vm1042, %v3024, 0.0
    %v3054 = vadd.f32 %v3052, %v3053
    %v3055 = vsel %vm1042, %v3025, 0.0
    %v3056 = vadd.f32 %v3054, %v3055
    %v3057 = vrot.slane %v3056, 4
    %v3058 = vadd.f32 %v3056, %v3057
    %v3059 = vrot.slane %v3058, 2
    %v3060 = vadd.f32 %v3058, %v3059
    %v3061 = vrot.slane %v3060, 1
    %v3062 = vadd.f32 %v3060, %v3061
    %v3063 = vmul.f32 %v3062, %v1464
    %v3064 = vadd.f32 %v3063, 1e-05
    %v3065 = vrsqrt.pop %v3064
    %v3066 = vmul.f32 %v2994, %v3065
    %v3067 = vmul.f32 %v2995, %v3065
    %v3068 = vmul.f32 %v2996, %v3065
    %v3069 = vmul.f32 %v2997, %v3065
    %v3070 = vmul.f32 %v2998, %v3065
    %v3071 = vmul.f32 %v2999, %v3065
    %v3072 = vmul.f32 %v3000, %v3065
    %v3073 = vmul.f32 %v3001, %v3065
    %v3074 = vmul.f32 %v3002, %v3065
    %v3075 = vmul.f32 %v3003, %v3065
    %v3076 = vmul.f32 %v3004, %v3065
    %v3077 = vmul.f32 %v3005, %v3065
    %v3078 = vmul.f32 %v3006, %v3065
    %v3079 = vmul.f32 %v3007, %v3065
    %v3080 = vmul.f32 %v3008, %v3065
    %v3081 = vmul.f32 %v3009, %v3065
    %v3082 = vld [vmem:[#allocation17] sm:$0x1]
    %v3084 = vlaneseq
    %v3085 = vshrl.u32 %v3084, 7
    %v3086 = vsub.s32 0, %v3085
    %v3087 = vrot.slane %v3082, %v3086
    %v3089 = vmul.f32 %v3066, %v3087
    %v3090 = vmul.f32 %v3067, %v3087
    %v3091 = vmul.f32 %v3068, %v3087
    %v3092 = vmul.f32 %v3069, %v3087
    %v3093 = vmul.f32 %v3070, %v3087
    %v3094 = vmul.f32 %v3071, %v3087
    %v3095 = vmul.f32 %v3072, %v3087
    %v3096 = vmul.f32 %v3073, %v3087
    %v3097 = vmul.f32 %v3074, %v3087
    %v3098 = vmul.f32 %v3075, %v3087
    %v3099 = vmul.f32 %v3076, %v3087
    %v3100 = vmul.f32 %v3077, %v3087
    %v3101 = vmul.f32 %v3078, %v3087
    %v3102 = vmul.f32 %v3079, %v3087
    %v3103 = vmul.f32 %v3080, %v3087
    %v3104 = vmul.f32 %v3081, %v3087
    %v3105 = vld [vmem:[#allocation18] sm:$0x1]
    %v3107 = vlaneseq
    %v3108 = vshrl.u32 %v3107, 7
    %v3109 = vsub.s32 0, %v3108
    %v3110 = vrot.slane %v3105, %v3109
    %v3112 = vadd.f32 %v3089, %v3110
    %v3113 = vadd.f32 %v3090, %v3110
    %v3114 = vadd.f32 %v3091, %v3110
    %v3115 = vadd.f32 %v3092, %v3110
    %v3116 = vadd.f32 %v3093, %v3110
    %v3117 = vadd.f32 %v3094, %v3110
    %v3118 = vadd.f32 %v3095, %v3110
    %v3119 = vadd.f32 %v3096, %v3110
    %v3120 = vadd.f32 %v3097, %v3110
    %v3121 = vadd.f32 %v3098, %v3110
    %v3122 = vadd.f32 %v3099, %v3110
    %v3123 = vadd.f32 %v3100, %v3110
    %v3124 = vadd.f32 %v3101, %v3110
    %v3125 = vadd.f32 %v3102, %v3110
    %v3126 = vadd.f32 %v3103, %v3110
    %v3127 = vadd.f32 %v3104, %v3110
    %v3128 = vadd.f32 %v2791, %v3112
    %v3129 = vadd.f32 %v2792, %v3113
    %v3130 = vadd.f32 %v2793, %v3114
    %v3131 = vadd.f32 %v2794, %v3115
    %v3132 = vadd.f32 %v2795, %v3116
    %v3133 = vadd.f32 %v2796, %v3117
    %v3134 = vadd.f32 %v2797, %v3118
    %v3135 = vadd.f32 %v2798, %v3119
    %v3136 = vadd.f32 %v2799, %v3120
    %v3137 = vadd.f32 %v2800, %v3121
    %v3138 = vadd.f32 %v2801, %v3122
    %v3139 = vadd.f32 %v2802, %v3123
    %v3140 = vadd.f32 %v2803, %v3124
    %v3141 = vadd.f32 %v2804, %v3125
    %v3142 = vadd.f32 %v2805, %v3126
    %v3143 = vadd.f32 %v2806, %v3127
    %v3144 = vmax.f32 %v3128, 0.0
    %v3145 = vmax.f32 %v3129, 0.0
    %v3146 = vmax.f32 %v3130, 0.0
    %v3147 = vmax.f32 %v3131, 0.0
    %v3148 = vmax.f32 %v3132, 0.0
    %v3149 = vmax.f32 %v3133, 0.0
    %v3150 = vmax.f32 %v3134, 0.0
    %v3151 = vmax.f32 %v3135, 0.0
    %v3152 = vmax.f32 %v3136, 0.0
    %v3153 = vmax.f32 %v3137, 0.0
    %v3154 = vmax.f32 %v3138, 0.0
    %v3155 = vmax.f32 %v3139, 0.0
    %v3156 = vmax.f32 %v3140, 0.0
    %v3157 = vmax.f32 %v3141, 0.0
    %v3158 = vmax.f32 %v3142, 0.0
    %v3159 = vmax.f32 %v3143, 0.0
    %3160 = vst.msk [vmem:[#allocation20] sm:$0xff] %vm1042, %v3144
    %3161 = vst.msk [vmem:[#allocation20 + $0x8] sm:$0xff] %vm1042, %v3145
    %3162 = vst.msk [vmem:[#allocation20 + $0x10] sm:$0xff] %vm1042, %v3146
    %3163 = vst.msk [vmem:[#allocation20 + $0x18] sm:$0xff] %vm1042, %v3147
    %3164 = vst.msk [vmem:[#allocation20 + $0x20] sm:$0xff] %vm1042, %v3148
    %3165 = vst.msk [vmem:[#allocation20 + $0x28] sm:$0xff] %vm1042, %v3149
    %3166 = vst.msk [vmem:[#allocation20 + $0x30] sm:$0xff] %vm1042, %v3150
    %3167 = vst.msk [vmem:[#allocation20 + $0x38] sm:$0xff] %vm1042, %v3151
    %3168 = vst.msk [vmem:[#allocation20 + $0x40] sm:$0xff] %vm1042, %v3152
    %3169 = vst.msk [vmem:[#allocation20 + $0x48] sm:$0xff] %vm1042, %v3153
    %3170 = vst.msk [vmem:[#allocation20 + $0x50] sm:$0xff] %vm1042, %v3154
    %3171 = vst.msk [vmem:[#allocation20 + $0x58] sm:$0xff] %vm1042, %v3155
    %3172 = vst.msk [vmem:[#allocation20 + $0x60] sm:$0xff] %vm1042, %v3156
    %3173 = vst.msk [vmem:[#allocation20 + $0x68] sm:$0xff] %vm1042, %v3157
    %3174 = vst.msk [vmem:[#allocation20 + $0x70] sm:$0xff] %vm1042, %v3158
    %3175 = vst.msk [vmem:[#allocation20 + $0x78] sm:$0xff] %vm1042, %v3159
    // Predicated region
    $region82: #{resblock_pallas.1} parent=1 // pred_check
      _
    $region83: #{resblock_pallas.1} parent=1 // pred_check_branch
      %3177 = sbr.rel (0) target = $region85
    $region84: #{resblock_pallas.1} parent=1 // pred_region
      %s3179 = ssub.s32 2048, 2048
      %3180 = vsyncadd [#allocation5], %s3179
      %s3181 = sshll.u32 [#allocation20], 4
      %s3182 = int_to_ptr.vmem [resolvable:$true] %s3181
      %3187 = dma.vmem_to_hbm [thread:$0]  %s3182, 2048, %s10, [#allocation5], 128, 128, 8
    $region85: #{resblock_pallas.1} parent=1 // pred_fallthru
      _
    // Predicated region
    $region86: #{resblock_pallas.1} parent=1 // pred_check
      _
    $region87: #{resblock_pallas.1} parent=1 // pred_check_branch
      %3189 = sbr.rel (0) target = $region89
    $region88: #{resblock_pallas.1} parent=1 // pred_region
      %3190 = dma.done [#allocation5], 2048
    $region89: #{resblock_pallas.1} parent=1 // pred_fallthru
      _
    %3191 = vsyncpa [#allocation4], 1
    %3192 = vsyncpa [#allocation7], 1
    %3193 = vsyncpa [#allocation10], 1
    %3194 = vsyncpa [#allocation13], 1
    %3195 = vsyncpa [#allocation16], 1
    %3196 = vsyncpa [#allocation19], 1
    %3197 = vsyncpa [#allocation5], 1

</llo_original>
